<compile_context>
chip_gen: v7x
topology: tpu7x:2x2x1
jax: 0.10.0
libtpu: 0.0.40
codegen_flags: <defaults>
</compile_context>

<pallas_src>
import functools
import math

import jax
import jax.numpy as jnp
from jax import lax
from jax.experimental import pallas as pl
from jax.experimental.pallas import tpu as pltpu


# -------------------------- model config --------------------------

VOCAB = 100
HIDDEN = 32
N_HEADS = 4
HEAD_DIM = HIDDEN // N_HEADS
INTERMEDIATE = 64
N_LAYERS = 2
MAX_POS = 16
N_CLASSES = 6
HEAD_PAD = 128          # lane-aligned width for the classifier output
NEG_INF = -1e9


# -------------------------- in-kernel helpers --------------------------

def _layernorm(h, g, b):
    # LayerNorm over the last axis (BERT eps = 1e-12), f32 statistics.
    mean = jnp.mean(h, axis=-1, keepdims=True)
    var = jnp.mean(jnp.square(h - mean), axis=-1, keepdims=True)
    return (h - mean) * lax.rsqrt(var + 1e-12) * g + b


def _gelu(y):
    # TODO(synk): HF BERT uses exact erf GELU; tanh approximation used here.
    c = math.sqrt(2.0 / math.pi)
    return 0.5 * y * (1.0 + jnp.tanh(c * (y + 0.044715 * y * y * y)))


def _mm(a, b):
    # bf16 MXU operands, f32 accumulation.
    return jnp.dot(a.astype(jnp.bfloat16), b.astype(jnp.bfloat16),
                   preferred_element_type=jnp.float32)


def _mm_nt(a, b):
    # a[m, d] contracted with b[n, d] on the last dim -> [m, n]; no explicit
    # transpose materialized (operand layout absorbed by the MXU path).
    return lax.dot_general(a.astype(jnp.bfloat16), b.astype(jnp.bfloat16),
                           (((1,), (1,)), ((), ())),
                           preferred_element_type=jnp.float32)


# -------------------------- fused kernel --------------------------

def _fused_bert_kernel(x_ref, bias_ref,
                       emb_g_ref, emb_b_ref,
                       wq_ref, bq_ref, wk_ref, bk_ref, wv_ref, bv_ref,
                       wo_ref, bo_ref, ln1g_ref, ln1b_ref,
                       w1_ref, b1_ref, w2_ref, b2_ref,
                       ln2g_ref, ln2b_ref,
                       pw_ref, pb_ref, ow_ref, ob_ref,
                       logits_ref, *, batch, seq):
    n = batch * seq

    # Embedding LayerNorm (no residual).
    x = _layernorm(x_ref[...], emb_g_ref[...], emb_b_ref[...])
    bias = bias_ref[...]          # [B*S, B*S] block-diagonal + padding bias

    for l in range(N_LAYERS):
        # ---- multi-head self-attention: the batch dim is handled entirely by
        #      the block-diagonal bias, everything stays in vregs ----
        attn = jnp.zeros((n, HIDDEN), jnp.float32)
        for h in range(N_HEADS):
            q = _mm(x, wq_ref[l, h]) + bq_ref[l, h]     # 1/sqrt(Dh) pre-folded
            k = _mm(x, wk_ref[l, h]) + bk_ref[l, h]
            v = _mm(x, wv_ref[l, h]) + bv_ref[l, h]
            s = _mm_nt(q, k) + bias                     # [B*S, B*S]
            m = jnp.max(s, axis=-1, keepdims=True)
            p = jnp.exp(s - m)
            denom = jnp.sum(p, axis=-1, keepdims=True)
            p = p * pl.reciprocal(denom, approx=True)
            ctx = _mm(p, v)                             # [B*S, Dh]
            attn = attn + _mm(ctx, wo_ref[l, h])        # per-head output proj
        attn = attn + bo_ref[l]
        x = _layernorm(attn + x, ln1g_ref[l], ln1b_ref[l])

        # ---- feed-forward (GELU) + residual LayerNorm ----
        ff = _gelu(_mm(x, w1_ref[l]) + b1_ref[l])
        ff = _mm(ff, w2_ref[l]) + b2_ref[l]
        x = _layernorm(ff + x, ln2g_ref[l], ln2b_ref[l])

    # ---- epilogue: [CLS] gather via one-hot matmul, tanh pooler, classifier ----
    rows = lax.broadcasted_iota(jnp.int32, (batch, n), 0)
    cols = lax.broadcasted_iota(jnp.int32, (batch, n), 1)
    sel = (cols == rows * seq).astype(jnp.float32)              # [B, B*S]
    cls = jnp.dot(sel, x, preferred_element_type=jnp.float32)   # exact row gather
    pooled = jnp.tanh(_mm(cls, pw_ref[...]) + pb_ref[...])
    # TODO(synk): nn.Dropout(0.3) is identity in eval/inference mode; omitted.
    logits = _mm(pooled, ow_ref[...]) + ob_ref[...]             # [B, 128] lane-dense
    logits_ref[...] = logits.astype(logits_ref.dtype)


# -------------------------- params (pre-stacked at init time) --------------------------

def init_params(key):
    std = 0.02
    keys = iter(jax.random.split(key, 32))

    def nrm(shape):
        return std * jax.random.normal(next(keys), shape, jnp.float32)

    def split_heads(w):          # [NL, H, H] -> [NL, nH, H, Dh]
        return w.reshape(N_LAYERS, HIDDEN, N_HEADS, HEAD_DIM).transpose(0, 2, 1, 3)

    scale = 1.0 / math.sqrt(HEAD_DIM)
    wq = split_heads(nrm((N_LAYERS, HIDDEN, HIDDEN))) * scale    # fold 1/sqrt(Dh)
    wk = split_heads(nrm((N_LAYERS, HIDDEN, HIDDEN)))
    wv = split_heads(nrm((N_LAYERS, HIDDEN, HIDDEN)))
    wo = nrm((N_LAYERS, HIDDEN, HIDDEN)).reshape(N_LAYERS, N_HEADS, HEAD_DIM, HIDDEN)

    zeros_head = jnp.zeros((N_LAYERS, N_HEADS, 1, HEAD_DIM), jnp.float32)
    out_w = nrm((HIDDEN, N_CLASSES))
    ow_pad = jnp.zeros((HIDDEN, HEAD_PAD), jnp.float32).at[:, :N_CLASSES].set(out_w)

    return {
        # embedding tables (gather happens in the JAX wrapper)
        "word_emb": nrm((VOCAB, HIDDEN)),
        "pos_emb": nrm((MAX_POS, HIDDEN)),
        "type_emb": nrm((2, HIDDEN)),
        "emb_ln_g": jnp.ones((1, HIDDEN), jnp.float32),
        "emb_ln_b": jnp.zeros((1, HIDDEN), jnp.float32),
        # matmul weights in bf16 (native MXU operands); biases / LN params in f32
        "wq": wq.astype(jnp.bfloat16), "bq": zeros_head,
        "wk": wk.astype(jnp.bfloat16), "bk": zeros_head,
        "wv": wv.astype(jnp.bfloat16), "bv": zeros_head,
        "wo": wo.astype(jnp.bfloat16),
        "bo": jnp.zeros((N_LAYERS, 1, HIDDEN), jnp.float32),
        "ln1_g": jnp.ones((N_LAYERS, 1, HIDDEN), jnp.float32),
        "ln1_b": jnp.zeros((N_LAYERS, 1, HIDDEN), jnp.float32),
        "w1": nrm((N_LAYERS, HIDDEN, INTERMEDIATE)).astype(jnp.bfloat16),
        "b1": jnp.zeros((N_LAYERS, 1, INTERMEDIATE), jnp.float32),
        "w2": nrm((N_LAYERS, INTERMEDIATE, HIDDEN)).astype(jnp.bfloat16),
        "b2": jnp.zeros((N_LAYERS, 1, HIDDEN), jnp.float32),
        "ln2_g": jnp.ones((N_LAYERS, 1, HIDDEN), jnp.float32),
        "ln2_b": jnp.zeros((N_LAYERS, 1, HIDDEN), jnp.float32),
        "pool_w": nrm((HIDDEN, HIDDEN)).astype(jnp.bfloat16),
        "pool_b": jnp.zeros((1, HIDDEN), jnp.float32),
        "out_w": ow_pad.astype(jnp.bfloat16),               # lane-dense [H, 128]
        "out_b": jnp.zeros((1, HEAD_PAD), jnp.float32),
    }


# -------------------------- forward pass --------------------------

def emotion_classifier_forward(params, input_ids, attention_mask):
    B, S = input_ids.shape
    assert S <= MAX_POS, "sequence length exceeds position-embedding table"

    # Embedding gather (JAX glue) — the rest of the forward is one kernel.
    # TODO(synk): token_type_ids hard-coded to segment 0.
    x = (jnp.take(params["word_emb"], input_ids, axis=0)
         + params["pos_emb"][None, :S, :]
         + params["type_emb"][0][None, None, :]).reshape(B * S, HIDDEN)

    # Combined attention bias [B*S, B*S]: 0 where (same batch AND key attended),
    # -1e9 elsewhere — one block-diagonal softmax covers every batch at once.
    att = attention_mask.astype(jnp.float32)                             # [B, S]
    ok = jnp.eye(B, dtype=jnp.float32)[:, :, None] * att[None, :, :]     # [Bq,Bk,Sk]
    ok = jnp.broadcast_to(ok[:, None, :, :], (B, S, B, S)).reshape(B * S, B * S)
    bias = (1.0 - ok) * NEG_INF

    kernel = functools.partial(_fused_bert_kernel, batch=B, seq=S)
    logits_pad = pl.pallas_call(
        kernel,
        out_shape=jax.ShapeDtypeStruct((B, HEAD_PAD), jnp.float32),
        compiler_params=pltpu.CompilerParams(vmem_limit_bytes=32 * 1024 * 1024),
    )(x, bias,
      params["emb_ln_g"], params["emb_ln_b"],
      params["wq"], params["bq"], params["wk"], params["bk"],
      params["wv"], params["bv"], params["wo"], params["bo"],
      params["ln1_g"], params["ln1_b"],
      params["w1"], params["b1"], params["w2"], params["b2"],
      params["ln2_g"], params["ln2_b"],
      params["pool_w"], params["pool_b"], params["out_w"], params["out_b"])

    return logits_pad[:, :N_CLASSES]


# -------------------------- main --------------------------

if __name__ == "__main__":
    key = jax.random.PRNGKey(0)
    k_params, k_ids = jax.random.split(key)

    params = init_params(k_params)

    B, S = 2, 8
    input_ids = jax.random.randint(k_ids, (B, S), 0, VOCAB, dtype=jnp.int32)
    attention_mask = jnp.concatenate(
        [jnp.ones((B, S - 2), jnp.int32), jnp.zeros((B, 2), jnp.int32)], axis=1)

    fwd = jax.jit(emotion_classifier_forward)
    logits = fwd(params, input_ids, attention_mask)
    jax.block_until_ready(logits)
    assert logits.shape == (B, N_CLASSES)
    assert bool(jnp.all(jnp.isfinite(logits)))
    print("KERNEL_OK")
</pallas_src>

<mosaic_0001>
module attributes {stable_mosaic.version = 11 : i64} {
  func.func @_fused_bert_kernel(%arg0: memref<16x32xf32, #tpu.memory_space<vmem>>, %arg1: memref<16x16xf32, #tpu.memory_space<vmem>>, %arg2: memref<1x32xf32, #tpu.memory_space<vmem>>, %arg3: memref<1x32xf32, #tpu.memory_space<vmem>>, %arg4: memref<2x4x32x8xbf16, #tpu.memory_space<vmem>>, %arg5: memref<2x4x1x8xf32, #tpu.memory_space<vmem>>, %arg6: memref<2x4x32x8xbf16, #tpu.memory_space<vmem>>, %arg7: memref<2x4x1x8xf32, #tpu.memory_space<vmem>>, %arg8: memref<2x4x32x8xbf16, #tpu.memory_space<vmem>>, %arg9: memref<2x4x1x8xf32, #tpu.memory_space<vmem>>, %arg10: memref<2x4x8x32xbf16, #tpu.memory_space<vmem>>, %arg11: memref<2x1x32xf32, #tpu.memory_space<vmem>>, %arg12: memref<2x1x32xf32, #tpu.memory_space<vmem>>, %arg13: memref<2x1x32xf32, #tpu.memory_space<vmem>>, %arg14: memref<2x32x64xbf16, #tpu.memory_space<vmem>>, %arg15: memref<2x1x64xf32, #tpu.memory_space<vmem>>, %arg16: memref<2x64x32xbf16, #tpu.memory_space<vmem>>, %arg17: memref<2x1x32xf32, #tpu.memory_space<vmem>>, %arg18: memref<2x1x32xf32, #tpu.memory_space<vmem>>, %arg19: memref<2x1x32xf32, #tpu.memory_space<vmem>>, %arg20: memref<32x32xbf16, #tpu.memory_space<vmem>>, %arg21: memref<1x32xf32, #tpu.memory_space<vmem>>, %arg22: memref<32x128xbf16, #tpu.memory_space<vmem>>, %arg23: memref<1x128xf32, #tpu.memory_space<vmem>>, %arg24: memref<2x128xf32, #tpu.memory_space<vmem>>) attributes {dimension_semantics = [], scalar_prefetch = 0 : i64, scratch_operands = 0 : i64, tpu.core_type = #tpu.core_type<tc>} {
    %c0 = arith.constant 0 : index
    %c0_0 = arith.constant 0 : index
    %0 = vector.load %arg0[%c0, %c0_0] : memref<16x32xf32, #tpu.memory_space<vmem>>, vector<16x32xf32>
    %c0_1 = arith.constant 0 : index
    %c0_2 = arith.constant 0 : index
    %1 = vector.load %arg2[%c0_1, %c0_2] : memref<1x32xf32, #tpu.memory_space<vmem>>, vector<1x32xf32>
    %c0_3 = arith.constant 0 : index
    %c0_4 = arith.constant 0 : index
    %2 = vector.load %arg3[%c0_3, %c0_4] : memref<1x32xf32, #tpu.memory_space<vmem>>, vector<1x32xf32>
    %cst = arith.constant dense<0.000000e+00> : vector<16xf32>
    %3 = vector.multi_reduction <add>, %0, %cst [1] : vector<16x32xf32> to vector<16xf32>
    %4 = vector.shape_cast %3 : vector<16xf32> to vector<16x1xf32>
    %cst_5 = arith.constant 3.200000e+01 : f32
    %5 = vector.broadcast %cst_5 : f32 to vector<16x1xf32>
    %6 = arith.divf %4, %5 : vector<16x1xf32>
    %7 = vector.broadcast %6 : vector<16x1xf32> to vector<16x32xf32>
    %8 = arith.subf %0, %7 : vector<16x32xf32>
    %9 = arith.mulf %8, %8 : vector<16x32xf32>
    %cst_6 = arith.constant dense<0.000000e+00> : vector<16xf32>
    %10 = vector.multi_reduction <add>, %9, %cst_6 [1] : vector<16x32xf32> to vector<16xf32>
    %11 = vector.shape_cast %10 : vector<16xf32> to vector<16x1xf32>
    %cst_7 = arith.constant 3.200000e+01 : f32
    %12 = vector.broadcast %cst_7 : f32 to vector<16x1xf32>
    %13 = arith.divf %11, %12 : vector<16x1xf32>
    %14 = vector.broadcast %6 : vector<16x1xf32> to vector<16x32xf32>
    %15 = arith.subf %0, %14 : vector<16x32xf32>
    %cst_8 = arith.constant 9.99999996E-13 : f32
    %16 = vector.broadcast %cst_8 : f32 to vector<16x1xf32>
    %17 = arith.addf %13, %16 : vector<16x1xf32>
    %18 = math.rsqrt %17 : vector<16x1xf32>
    %19 = vector.broadcast %18 : vector<16x1xf32> to vector<16x32xf32>
    %20 = arith.mulf %15, %19 : vector<16x32xf32>
    %21 = vector.broadcast %1 : vector<1x32xf32> to vector<16x32xf32>
    %22 = arith.mulf %20, %21 : vector<16x32xf32>
    %23 = vector.broadcast %2 : vector<1x32xf32> to vector<16x32xf32>
    %24 = arith.addf %22, %23 : vector<16x32xf32>
    %c0_9 = arith.constant 0 : index
    %c0_10 = arith.constant 0 : index
    %25 = vector.load %arg1[%c0_9, %c0_10] : memref<16x16xf32, #tpu.memory_space<vmem>>, vector<16x16xf32>
    %cst_11 = arith.constant 0.000000e+00 : f32
    %26 = vector.broadcast %cst_11 : f32 to vector<16x32xf32>
    %c0_12 = arith.constant 0 : index
    %c0_13 = arith.constant 0 : index
    %c0_14 = arith.constant 0 : index
    %c0_15 = arith.constant 0 : index
    %27 = vector.load %arg4[%c0_12, %c0_13, %c0_14, %c0_15] : memref<2x4x32x8xbf16, #tpu.memory_space<vmem>>, vector<1x1x32x8xbf16>
    %28 = vector.shape_cast %27 : vector<1x1x32x8xbf16> to vector<32x8xbf16>
    %29 = arith.truncf %24 : vector<16x32xf32> to vector<16x32xbf16>
    %cst_16 = arith.constant dense<0.000000e+00> : vector<16x8xf32>
    %30 = tpu.matmul %29, %28, %cst_16 {dimension_numbers = #tpu.dot_dimension_numbers<[1], [0], [0], [1], [0, 0, 1, 1], [], []>} : vector<16x32xbf16>, vector<32x8xbf16>, vector<16x8xf32> -> vector<16x8xf32>
    %c0_17 = arith.constant 0 : index
    %c0_18 = arith.constant 0 : index
    %c0_19 = arith.constant 0 : index
    %c0_20 = arith.constant 0 : index
    %31 = vector.load %arg5[%c0_17, %c0_18, %c0_19, %c0_20] : memref<2x4x1x8xf32, #tpu.memory_space<vmem>>, vector<1x1x1x8xf32>
    %32 = vector.shape_cast %31 : vector<1x1x1x8xf32> to vector<1x8xf32>
    %33 = vector.broadcast %32 : vector<1x8xf32> to vector<16x8xf32>
    %34 = arith.addf %30, %33 : vector<16x8xf32>
    %c0_21 = arith.constant 0 : index
    %c0_22 = arith.constant 0 : index
    %c0_23 = arith.constant 0 : index
    %c0_24 = arith.constant 0 : index
    %35 = vector.load %arg6[%c0_21, %c0_22, %c0_23, %c0_24] : memref<2x4x32x8xbf16, #tpu.memory_space<vmem>>, vector<1x1x32x8xbf16>
    %36 = vector.shape_cast %35 : vector<1x1x32x8xbf16> to vector<32x8xbf16>
    %37 = arith.truncf %24 : vector<16x32xf32> to vector<16x32xbf16>
    %cst_25 = arith.constant dense<0.000000e+00> : vector<16x8xf32>
    %38 = tpu.matmul %37, %36, %cst_25 {dimension_numbers = #tpu.dot_dimension_numbers<[1], [0], [0], [1], [0, 0, 1, 1], [], []>} : vector<16x32xbf16>, vector<32x8xbf16>, vector<16x8xf32> -> vector<16x8xf32>
    %c0_26 = arith.constant 0 : index
    %c0_27 = arith.constant 0 : index
    %c0_28 = arith.constant 0 : index
    %c0_29 = arith.constant 0 : index
    %39 = vector.load %arg7[%c0_26, %c0_27, %c0_28, %c0_29] : memref<2x4x1x8xf32, #tpu.memory_space<vmem>>, vector<1x1x1x8xf32>
    %40 = vector.shape_cast %39 : vector<1x1x1x8xf32> to vector<1x8xf32>
    %41 = vector.broadcast %40 : vector<1x8xf32> to vector<16x8xf32>
    %42 = arith.addf %38, %41 : vector<16x8xf32>
    %c0_30 = arith.constant 0 : index
    %c0_31 = arith.constant 0 : index
    %c0_32 = arith.constant 0 : index
    %c0_33 = arith.constant 0 : index
    %43 = vector.load %arg8[%c0_30, %c0_31, %c0_32, %c0_33] : memref<2x4x32x8xbf16, #tpu.memory_space<vmem>>, vector<1x1x32x8xbf16>
    %44 = vector.shape_cast %43 : vector<1x1x32x8xbf16> to vector<32x8xbf16>
    %45 = arith.truncf %24 : vector<16x32xf32> to vector<16x32xbf16>
    %cst_34 = arith.constant dense<0.000000e+00> : vector<16x8xf32>
    %46 = tpu.matmul %45, %44, %cst_34 {dimension_numbers = #tpu.dot_dimension_numbers<[1], [0], [0], [1], [0, 0, 1, 1], [], []>} : vector<16x32xbf16>, vector<32x8xbf16>, vector<16x8xf32> -> vector<16x8xf32>
    %c0_35 = arith.constant 0 : index
    %c0_36 = arith.constant 0 : index
    %c0_37 = arith.constant 0 : index
    %c0_38 = arith.constant 0 : index
    %47 = vector.load %arg9[%c0_35, %c0_36, %c0_37, %c0_38] : memref<2x4x1x8xf32, #tpu.memory_space<vmem>>, vector<1x1x1x8xf32>
    %48 = vector.shape_cast %47 : vector<1x1x1x8xf32> to vector<1x8xf32>
    %49 = vector.broadcast %48 : vector<1x8xf32> to vector<16x8xf32>
    %50 = arith.addf %46, %49 : vector<16x8xf32>
    %51 = arith.truncf %34 : vector<16x8xf32> to vector<16x8xbf16>
    %52 = arith.truncf %42 : vector<16x8xf32> to vector<16x8xbf16>
    %cst_39 = arith.constant dense<0.000000e+00> : vector<16x16xf32>
    %53 = tpu.matmul %51, %52, %cst_39 {dimension_numbers = #tpu.dot_dimension_numbers<[1], [1], [0], [0], [0, 0, 1, 0], [], []>} : vector<16x8xbf16>, vector<16x8xbf16>, vector<16x16xf32> -> vector<16x16xf32>
    %54 = arith.addf %53, %25 : vector<16x16xf32>
    %cst_40 = arith.constant dense<0xFF800000> : vector<16xf32>
    %55 = vector.multi_reduction <maximumf>, %54, %cst_40 [1] : vector<16x16xf32> to vector<16xf32>
    %56 = vector.shape_cast %55 : vector<16xf32> to vector<16x1xf32>
    %57 = vector.broadcast %56 : vector<16x1xf32> to vector<16x16xf32>
    %58 = arith.subf %54, %57 : vector<16x16xf32>
    %59 = math.exp %58 : vector<16x16xf32>
    %cst_41 = arith.constant dense<0.000000e+00> : vector<16xf32>
    %60 = vector.multi_reduction <add>, %59, %cst_41 [1] : vector<16x16xf32> to vector<16xf32>
    %61 = vector.shape_cast %60 : vector<16xf32> to vector<16x1xf32>
    %62 = tpu.reciprocal %61 {approx = true} : vector<16x1xf32> -> vector<16x1xf32>
    %63 = vector.broadcast %62 : vector<16x1xf32> to vector<16x16xf32>
    %64 = arith.mulf %59, %63 : vector<16x16xf32>
    %65 = arith.truncf %64 : vector<16x16xf32> to vector<16x16xbf16>
    %66 = arith.truncf %50 : vector<16x8xf32> to vector<16x8xbf16>
    %cst_42 = arith.constant dense<0.000000e+00> : vector<16x8xf32>
    %67 = tpu.matmul %65, %66, %cst_42 {dimension_numbers = #tpu.dot_dimension_numbers<[1], [0], [0], [1], [0, 0, 1, 1], [], []>} : vector<16x16xbf16>, vector<16x8xbf16>, vector<16x8xf32> -> vector<16x8xf32>
    %c0_43 = arith.constant 0 : index
    %c0_44 = arith.constant 0 : index
    %c0_45 = arith.constant 0 : index
    %c0_46 = arith.constant 0 : index
    %68 = vector.load %arg10[%c0_43, %c0_44, %c0_45, %c0_46] : memref<2x4x8x32xbf16, #tpu.memory_space<vmem>>, vector<1x1x8x32xbf16>
    %69 = vector.shape_cast %68 : vector<1x1x8x32xbf16> to vector<8x32xbf16>
    %70 = arith.truncf %67 : vector<16x8xf32> to vector<16x8xbf16>
    %cst_47 = arith.constant dense<0.000000e+00> : vector<16x32xf32>
    %71 = tpu.matmul %70, %69, %cst_47 {dimension_numbers = #tpu.dot_dimension_numbers<[1], [0], [0], [1], [0, 0, 1, 1], [], []>} : vector<16x8xbf16>, vector<8x32xbf16>, vector<16x32xf32> -> vector<16x32xf32>
    %72 = arith.addf %26, %71 : vector<16x32xf32>
    %c0_48 = arith.constant 0 : index
    %c1 = arith.constant 1 : index
    %c0_49 = arith.constant 0 : index
    %c0_50 = arith.constant 0 : index
    %73 = vector.load %arg4[%c0_48, %c1, %c0_49, %c0_50] : memref<2x4x32x8xbf16, #tpu.memory_space<vmem>>, vector<1x1x32x8xbf16>
    %74 = vector.shape_cast %73 : vector<1x1x32x8xbf16> to vector<32x8xbf16>
    %75 = arith.truncf %24 : vector<16x32xf32> to vector<16x32xbf16>
    %cst_51 = arith.constant dense<0.000000e+00> : vector<16x8xf32>
    %76 = tpu.matmul %75, %74, %cst_51 {dimension_numbers = #tpu.dot_dimension_numbers<[1], [0], [0], [1], [0, 0, 1, 1], [], []>} : vector<16x32xbf16>, vector<32x8xbf16>, vector<16x8xf32> -> vector<16x8xf32>
    %c0_52 = arith.constant 0 : index
    %c1_53 = arith.constant 1 : index
    %c0_54 = arith.constant 0 : index
    %c0_55 = arith.constant 0 : index
    %77 = vector.load %arg5[%c0_52, %c1_53, %c0_54, %c0_55] : memref<2x4x1x8xf32, #tpu.memory_space<vmem>>, vector<1x1x1x8xf32>
    %78 = vector.shape_cast %77 : vector<1x1x1x8xf32> to vector<1x8xf32>
    %79 = vector.broadcast %78 : vector<1x8xf32> to vector<16x8xf32>
    %80 = arith.addf %76, %79 : vector<16x8xf32>
    %c0_56 = arith.constant 0 : index
    %c1_57 = arith.constant 1 : index
    %c0_58 = arith.constant 0 : index
    %c0_59 = arith.constant 0 : index
    %81 = vector.load %arg6[%c0_56, %c1_57, %c0_58, %c0_59] : memref<2x4x32x8xbf16, #tpu.memory_space<vmem>>, vector<1x1x32x8xbf16>
    %82 = vector.shape_cast %81 : vector<1x1x32x8xbf16> to vector<32x8xbf16>
    %83 = arith.truncf %24 : vector<16x32xf32> to vector<16x32xbf16>
    %cst_60 = arith.constant dense<0.000000e+00> : vector<16x8xf32>
    %84 = tpu.matmul %83, %82, %cst_60 {dimension_numbers = #tpu.dot_dimension_numbers<[1], [0], [0], [1], [0, 0, 1, 1], [], []>} : vector<16x32xbf16>, vector<32x8xbf16>, vector<16x8xf32> -> vector<16x8xf32>
    %c0_61 = arith.constant 0 : index
    %c1_62 = arith.constant 1 : index
    %c0_63 = arith.constant 0 : index
    %c0_64 = arith.constant 0 : index
    %85 = vector.load %arg7[%c0_61, %c1_62, %c0_63, %c0_64] : memref<2x4x1x8xf32, #tpu.memory_space<vmem>>, vector<1x1x1x8xf32>
    %86 = vector.shape_cast %85 : vector<1x1x1x8xf32> to vector<1x8xf32>
    %87 = vector.broadcast %86 : vector<1x8xf32> to vector<16x8xf32>
    %88 = arith.addf %84, %87 : vector<16x8xf32>
    %c0_65 = arith.constant 0 : index
    %c1_66 = arith.constant 1 : index
    %c0_67 = arith.constant 0 : index
    %c0_68 = arith.constant 0 : index
    %89 = vector.load %arg8[%c0_65, %c1_66, %c0_67, %c0_68] : memref<2x4x32x8xbf16, #tpu.memory_space<vmem>>, vector<1x1x32x8xbf16>
    %90 = vector.shape_cast %89 : vector<1x1x32x8xbf16> to vector<32x8xbf16>
    %91 = arith.truncf %24 : vector<16x32xf32> to vector<16x32xbf16>
    %cst_69 = arith.constant dense<0.000000e+00> : vector<16x8xf32>
    %92 = tpu.matmul %91, %90, %cst_69 {dimension_numbers = #tpu.dot_dimension_numbers<[1], [0], [0], [1], [0, 0, 1, 1], [], []>} : vector<16x32xbf16>, vector<32x8xbf16>, vector<16x8xf32> -> vector<16x8xf32>
    %c0_70 = arith.constant 0 : index
    %c1_71 = arith.constant 1 : index
    %c0_72 = arith.constant 0 : index
    %c0_73 = arith.constant 0 : index
    %93 = vector.load %arg9[%c0_70, %c1_71, %c0_72, %c0_73] : memref<2x4x1x8xf32, #tpu.memory_space<vmem>>, vector<1x1x1x8xf32>
    %94 = vector.shape_cast %93 : vector<1x1x1x8xf32> to vector<1x8xf32>
    %95 = vector.broadcast %94 : vector<1x8xf32> to vector<16x8xf32>
    %96 = arith.addf %92, %95 : vector<16x8xf32>
    %97 = arith.truncf %80 : vector<16x8xf32> to vector<16x8xbf16>
    %98 = arith.truncf %88 : vector<16x8xf32> to vector<16x8xbf16>
    %cst_74 = arith.constant dense<0.000000e+00> : vector<16x16xf32>
    %99 = tpu.matmul %97, %98, %cst_74 {dimension_numbers = #tpu.dot_dimension_numbers<[1], [1], [0], [0], [0, 0, 1, 0], [], []>} : vector<16x8xbf16>, vector<16x8xbf16>, vector<16x16xf32> -> vector<16x16xf32>
    %100 = arith.addf %99, %25 : vector<16x16xf32>
    %cst_75 = arith.constant dense<0xFF800000> : vector<16xf32>
    %101 = vector.multi_reduction <maximumf>, %100, %cst_75 [1] : vector<16x16xf32> to vector<16xf32>
    %102 = vector.shape_cast %101 : vector<16xf32> to vector<16x1xf32>
    %103 = vector.broadcast %102 : vector<16x1xf32> to vector<16x16xf32>
    %104 = arith.subf %100, %103 : vector<16x16xf32>
    %105 = math.exp %104 : vector<16x16xf32>
    %cst_76 = arith.constant dense<0.000000e+00> : vector<16xf32>
    %106 = vector.multi_reduction <add>, %105, %cst_76 [1] : vector<16x16xf32> to vector<16xf32>
    %107 = vector.shape_cast %106 : vector<16xf32> to vector<16x1xf32>
    %108 = tpu.reciprocal %107 {approx = true} : vector<16x1xf32> -> vector<16x1xf32>
    %109 = vector.broadcast %108 : vector<16x1xf32> to vector<16x16xf32>
    %110 = arith.mulf %105, %109 : vector<16x16xf32>
    %111 = arith.truncf %110 : vector<16x16xf32> to vector<16x16xbf16>
    %112 = arith.truncf %96 : vector<16x8xf32> to vector<16x8xbf16>
    %cst_77 = arith.constant dense<0.000000e+00> : vector<16x8xf32>
    %113 = tpu.matmul %111, %112, %cst_77 {dimension_numbers = #tpu.dot_dimension_numbers<[1], [0], [0], [1], [0, 0, 1, 1], [], []>} : vector<16x16xbf16>, vector<16x8xbf16>, vector<16x8xf32> -> vector<16x8xf32>
    %c0_78 = arith.constant 0 : index
    %c1_79 = arith.constant 1 : index
    %c0_80 = arith.constant 0 : index
    %c0_81 = arith.constant 0 : index
    %114 = vector.load %arg10[%c0_78, %c1_79, %c0_80, %c0_81] : memref<2x4x8x32xbf16, #tpu.memory_space<vmem>>, vector<1x1x8x32xbf16>
    %115 = vector.shape_cast %114 : vector<1x1x8x32xbf16> to vector<8x32xbf16>
    %116 = arith.truncf %113 : vector<16x8xf32> to vector<16x8xbf16>
    %cst_82 = arith.constant dense<0.000000e+00> : vector<16x32xf32>
    %117 = tpu.matmul %116, %115, %cst_82 {dimension_numbers = #tpu.dot_dimension_numbers<[1], [0], [0], [1], [0, 0, 1, 1], [], []>} : vector<16x8xbf16>, vector<8x32xbf16>, vector<16x32xf32> -> vector<16x32xf32>
    %118 = arith.addf %72, %117 : vector<16x32xf32>
    %c0_83 = arith.constant 0 : index
    %c2 = arith.constant 2 : index
    %c0_84 = arith.constant 0 : index
    %c0_85 = arith.constant 0 : index
    %119 = vector.load %arg4[%c0_83, %c2, %c0_84, %c0_85] : memref<2x4x32x8xbf16, #tpu.memory_space<vmem>>, vector<1x1x32x8xbf16>
    %120 = vector.shape_cast %119 : vector<1x1x32x8xbf16> to vector<32x8xbf16>
    %121 = arith.truncf %24 : vector<16x32xf32> to vector<16x32xbf16>
    %cst_86 = arith.constant dense<0.000000e+00> : vector<16x8xf32>
    %122 = tpu.matmul %121, %120, %cst_86 {dimension_numbers = #tpu.dot_dimension_numbers<[1], [0], [0], [1], [0, 0, 1, 1], [], []>} : vector<16x32xbf16>, vector<32x8xbf16>, vector<16x8xf32> -> vector<16x8xf32>
    %c0_87 = arith.constant 0 : index
    %c2_88 = arith.constant 2 : index
    %c0_89 = arith.constant 0 : index
    %c0_90 = arith.constant 0 : index
    %123 = vector.load %arg5[%c0_87, %c2_88, %c0_89, %c0_90] : memref<2x4x1x8xf32, #tpu.memory_space<vmem>>, vector<1x1x1x8xf32>
    %124 = vector.shape_cast %123 : vector<1x1x1x8xf32> to vector<1x8xf32>
    %125 = vector.broadcast %124 : vector<1x8xf32> to vector<16x8xf32>
    %126 = arith.addf %122, %125 : vector<16x8xf32>
    %c0_91 = arith.constant 0 : index
    %c2_92 = arith.constant 2 : index
    %c0_93 = arith.constant 0 : index
    %c0_94 = arith.constant 0 : index
    %127 = vector.load %arg6[%c0_91, %c2_92, %c0_93, %c0_94] : memref<2x4x32x8xbf16, #tpu.memory_space<vmem>>, vector<1x1x32x8xbf16>
    %128 = vector.shape_cast %127 : vector<1x1x32x8xbf16> to vector<32x8xbf16>
    %129 = arith.truncf %24 : vector<16x32xf32> to vector<16x32xbf16>
    %cst_95 = arith.constant dense<0.000000e+00> : vector<16x8xf32>
    %130 = tpu.matmul %129, %128, %cst_95 {dimension_numbers = #tpu.dot_dimension_numbers<[1], [0], [0], [1], [0, 0, 1, 1], [], []>} : vector<16x32xbf16>, vector<32x8xbf16>, vector<16x8xf32> -> vector<16x8xf32>
    %c0_96 = arith.constant 0 : index
    %c2_97 = arith.constant 2 : index
    %c0_98 = arith.constant 0 : index
    %c0_99 = arith.constant 0 : index
    %131 = vector.load %arg7[%c0_96, %c2_97, %c0_98, %c0_99] : memref<2x4x1x8xf32, #tpu.memory_space<vmem>>, vector<1x1x1x8xf32>
    %132 = vector.shape_cast %131 : vector<1x1x1x8xf32> to vector<1x8xf32>
    %133 = vector.broadcast %132 : vector<1x8xf32> to vector<16x8xf32>
    %134 = arith.addf %130, %133 : vector<16x8xf32>
    %c0_100 = arith.constant 0 : index
    %c2_101 = arith.constant 2 : index
    %c0_102 = arith.constant 0 : index
    %c0_103 = arith.constant 0 : index
    %135 = vector.load %arg8[%c0_100, %c2_101, %c0_102, %c0_103] : memref<2x4x32x8xbf16, #tpu.memory_space<vmem>>, vector<1x1x32x8xbf16>
    %136 = vector.shape_cast %135 : vector<1x1x32x8xbf16> to vector<32x8xbf16>
    %137 = arith.truncf %24 : vector<16x32xf32> to vector<16x32xbf16>
    %cst_104 = arith.constant dense<0.000000e+00> : vector<16x8xf32>
    %138 = tpu.matmul %137, %136, %cst_104 {dimension_numbers = #tpu.dot_dimension_numbers<[1], [0], [0], [1], [0, 0, 1, 1], [], []>} : vector<16x32xbf16>, vector<32x8xbf16>, vector<16x8xf32> -> vector<16x8xf32>
    %c0_105 = arith.constant 0 : index
    %c2_106 = arith.constant 2 : index
    %c0_107 = arith.constant 0 : index
    %c0_108 = arith.constant 0 : index
    %139 = vector.load %arg9[%c0_105, %c2_106, %c0_107, %c0_108] : memref<2x4x1x8xf32, #tpu.memory_space<vmem>>, vector<1x1x1x8xf32>
    %140 = vector.shape_cast %139 : vector<1x1x1x8xf32> to vector<1x8xf32>
    %141 = vector.broadcast %140 : vector<1x8xf32> to vector<16x8xf32>
    %142 = arith.addf %138, %141 : vector<16x8xf32>
    %143 = arith.truncf %126 : vector<16x8xf32> to vector<16x8xbf16>
    %144 = arith.truncf %134 : vector<16x8xf32> to vector<16x8xbf16>
    %cst_109 = arith.constant dense<0.000000e+00> : vector<16x16xf32>
    %145 = tpu.matmul %143, %144, %cst_109 {dimension_numbers = #tpu.dot_dimension_numbers<[1], [1], [0], [0], [0, 0, 1, 0], [], []>} : vector<16x8xbf16>, vector<16x8xbf16>, vector<16x16xf32> -> vector<16x16xf32>
    %146 = arith.addf %145, %25 : vector<16x16xf32>
    %cst_110 = arith.constant dense<0xFF800000> : vector<16xf32>
    %147 = vector.multi_reduction <maximumf>, %146, %cst_110 [1] : vector<16x16xf32> to vector<16xf32>
    %148 = vector.shape_cast %147 : vector<16xf32> to vector<16x1xf32>
    %149 = vector.broadcast %148 : vector<16x1xf32> to vector<16x16xf32>
    %150 = arith.subf %146, %149 : vector<16x16xf32>
    %151 = math.exp %150 : vector<16x16xf32>
    %cst_111 = arith.constant dense<0.000000e+00> : vector<16xf32>
    %152 = vector.multi_reduction <add>, %151, %cst_111 [1] : vector<16x16xf32> to vector<16xf32>
    %153 = vector.shape_cast %152 : vector<16xf32> to vector<16x1xf32>
    %154 = tpu.reciprocal %153 {approx = true} : vector<16x1xf32> -> vector<16x1xf32>
    %155 = vector.broadcast %154 : vector<16x1xf32> to vector<16x16xf32>
    %156 = arith.mulf %151, %155 : vector<16x16xf32>
    %157 = arith.truncf %156 : vector<16x16xf32> to vector<16x16xbf16>
    %158 = arith.truncf %142 : vector<16x8xf32> to vector<16x8xbf16>
    %cst_112 = arith.constant dense<0.000000e+00> : vector<16x8xf32>
    %159 = tpu.matmul %157, %158, %cst_112 {dimension_numbers = #tpu.dot_dimension_numbers<[1], [0], [0], [1], [0, 0, 1, 1], [], []>} : vector<16x16xbf16>, vector<16x8xbf16>, vector<16x8xf32> -> vector<16x8xf32>
    %c0_113 = arith.constant 0 : index
    %c2_114 = arith.constant 2 : index
    %c0_115 = arith.constant 0 : index
    %c0_116 = arith.constant 0 : index
    %160 = vector.load %arg10[%c0_113, %c2_114, %c0_115, %c0_116] : memref<2x4x8x32xbf16, #tpu.memory_space<vmem>>, vector<1x1x8x32xbf16>
    %161 = vector.shape_cast %160 : vector<1x1x8x32xbf16> to vector<8x32xbf16>
    %162 = arith.truncf %159 : vector<16x8xf32> to vector<16x8xbf16>
    %cst_117 = arith.constant dense<0.000000e+00> : vector<16x32xf32>
    %163 = tpu.matmul %162, %161, %cst_117 {dimension_numbers = #tpu.dot_dimension_numbers<[1], [0], [0], [1], [0, 0, 1, 1], [], []>} : vector<16x8xbf16>, vector<8x32xbf16>, vector<16x32xf32> -> vector<16x32xf32>
    %164 = arith.addf %118, %163 : vector<16x32xf32>
    %c0_118 = arith.constant 0 : index
    %c3 = arith.constant 3 : index
    %c0_119 = arith.constant 0 : index
    %c0_120 = arith.constant 0 : index
    %165 = vector.load %arg4[%c0_118, %c3, %c0_119, %c0_120] : memref<2x4x32x8xbf16, #tpu.memory_space<vmem>>, vector<1x1x32x8xbf16>
    %166 = vector.shape_cast %165 : vector<1x1x32x8xbf16> to vector<32x8xbf16>
    %167 = arith.truncf %24 : vector<16x32xf32> to vector<16x32xbf16>
    %cst_121 = arith.constant dense<0.000000e+00> : vector<16x8xf32>
    %168 = tpu.matmul %167, %166, %cst_121 {dimension_numbers = #tpu.dot_dimension_numbers<[1], [0], [0], [1], [0, 0, 1, 1], [], []>} : vector<16x32xbf16>, vector<32x8xbf16>, vector<16x8xf32> -> vector<16x8xf32>
    %c0_122 = arith.constant 0 : index
    %c3_123 = arith.constant 3 : index
    %c0_124 = arith.constant 0 : index
    %c0_125 = arith.constant 0 : index
    %169 = vector.load %arg5[%c0_122, %c3_123, %c0_124, %c0_125] : memref<2x4x1x8xf32, #tpu.memory_space<vmem>>, vector<1x1x1x8xf32>
    %170 = vector.shape_cast %169 : vector<1x1x1x8xf32> to vector<1x8xf32>
    %171 = vector.broadcast %170 : vector<1x8xf32> to vector<16x8xf32>
    %172 = arith.addf %168, %171 : vector<16x8xf32>
    %c0_126 = arith.constant 0 : index
    %c3_127 = arith.constant 3 : index
    %c0_128 = arith.constant 0 : index
    %c0_129 = arith.constant 0 : index
    %173 = vector.load %arg6[%c0_126, %c3_127, %c0_128, %c0_129] : memref<2x4x32x8xbf16, #tpu.memory_space<vmem>>, vector<1x1x32x8xbf16>
    %174 = vector.shape_cast %173 : vector<1x1x32x8xbf16> to vector<32x8xbf16>
    %175 = arith.truncf %24 : vector<16x32xf32> to vector<16x32xbf16>
    %cst_130 = arith.constant dense<0.000000e+00> : vector<16x8xf32>
    %176 = tpu.matmul %175, %174, %cst_130 {dimension_numbers = #tpu.dot_dimension_numbers<[1], [0], [0], [1], [0, 0, 1, 1], [], []>} : vector<16x32xbf16>, vector<32x8xbf16>, vector<16x8xf32> -> vector<16x8xf32>
    %c0_131 = arith.constant 0 : index
    %c3_132 = arith.constant 3 : index
    %c0_133 = arith.constant 0 : index
    %c0_134 = arith.constant 0 : index
    %177 = vector.load %arg7[%c0_131, %c3_132, %c0_133, %c0_134] : memref<2x4x1x8xf32, #tpu.memory_space<vmem>>, vector<1x1x1x8xf32>
    %178 = vector.shape_cast %177 : vector<1x1x1x8xf32> to vector<1x8xf32>
    %179 = vector.broadcast %178 : vector<1x8xf32> to vector<16x8xf32>
    %180 = arith.addf %176, %179 : vector<16x8xf32>
    %c0_135 = arith.constant 0 : index
    %c3_136 = arith.constant 3 : index
    %c0_137 = arith.constant 0 : index
    %c0_138 = arith.constant 0 : index
    %181 = vector.load %arg8[%c0_135, %c3_136, %c0_137, %c0_138] : memref<2x4x32x8xbf16, #tpu.memory_space<vmem>>, vector<1x1x32x8xbf16>
    %182 = vector.shape_cast %181 : vector<1x1x32x8xbf16> to vector<32x8xbf16>
    %183 = arith.truncf %24 : vector<16x32xf32> to vector<16x32xbf16>
    %cst_139 = arith.constant dense<0.000000e+00> : vector<16x8xf32>
    %184 = tpu.matmul %183, %182, %cst_139 {dimension_numbers = #tpu.dot_dimension_numbers<[1], [0], [0], [1], [0, 0, 1, 1], [], []>} : vector<16x32xbf16>, vector<32x8xbf16>, vector<16x8xf32> -> vector<16x8xf32>
    %c0_140 = arith.constant 0 : index
    %c3_141 = arith.constant 3 : index
    %c0_142 = arith.constant 0 : index
    %c0_143 = arith.constant 0 : index
    %185 = vector.load %arg9[%c0_140, %c3_141, %c0_142, %c0_143] : memref<2x4x1x8xf32, #tpu.memory_space<vmem>>, vector<1x1x1x8xf32>
    %186 = vector.shape_cast %185 : vector<1x1x1x8xf32> to vector<1x8xf32>
    %187 = vector.broadcast %186 : vector<1x8xf32> to vector<16x8xf32>
    %188 = arith.addf %184, %187 : vector<16x8xf32>
    %189 = arith.truncf %172 : vector<16x8xf32> to vector<16x8xbf16>
    %190 = arith.truncf %180 : vector<16x8xf32> to vector<16x8xbf16>
    %cst_144 = arith.constant dense<0.000000e+00> : vector<16x16xf32>
    %191 = tpu.matmul %189, %190, %cst_144 {dimension_numbers = #tpu.dot_dimension_numbers<[1], [1], [0], [0], [0, 0, 1, 0], [], []>} : vector<16x8xbf16>, vector<16x8xbf16>, vector<16x16xf32> -> vector<16x16xf32>
    %192 = arith.addf %191, %25 : vector<16x16xf32>
    %cst_145 = arith.constant dense<0xFF800000> : vector<16xf32>
    %193 = vector.multi_reduction <maximumf>, %192, %cst_145 [1] : vector<16x16xf32> to vector<16xf32>
    %194 = vector.shape_cast %193 : vector<16xf32> to vector<16x1xf32>
    %195 = vector.broadcast %194 : vector<16x1xf32> to vector<16x16xf32>
    %196 = arith.subf %192, %195 : vector<16x16xf32>
    %197 = math.exp %196 : vector<16x16xf32>
    %cst_146 = arith.constant dense<0.000000e+00> : vector<16xf32>
    %198 = vector.multi_reduction <add>, %197, %cst_146 [1] : vector<16x16xf32> to vector<16xf32>
    %199 = vector.shape_cast %198 : vector<16xf32> to vector<16x1xf32>
    %200 = tpu.reciprocal %199 {approx = true} : vector<16x1xf32> -> vector<16x1xf32>
    %201 = vector.broadcast %200 : vector<16x1xf32> to vector<16x16xf32>
    %202 = arith.mulf %197, %201 : vector<16x16xf32>
    %203 = arith.truncf %202 : vector<16x16xf32> to vector<16x16xbf16>
    %204 = arith.truncf %188 : vector<16x8xf32> to vector<16x8xbf16>
    %cst_147 = arith.constant dense<0.000000e+00> : vector<16x8xf32>
    %205 = tpu.matmul %203, %204, %cst_147 {dimension_numbers = #tpu.dot_dimension_numbers<[1], [0], [0], [1], [0, 0, 1, 1], [], []>} : vector<16x16xbf16>, vector<16x8xbf16>, vector<16x8xf32> -> vector<16x8xf32>
    %c0_148 = arith.constant 0 : index
    %c3_149 = arith.constant 3 : index
    %c0_150 = arith.constant 0 : index
    %c0_151 = arith.constant 0 : index
    %206 = vector.load %arg10[%c0_148, %c3_149, %c0_150, %c0_151] : memref<2x4x8x32xbf16, #tpu.memory_space<vmem>>, vector<1x1x8x32xbf16>
    %207 = vector.shape_cast %206 : vector<1x1x8x32xbf16> to vector<8x32xbf16>
    %208 = arith.truncf %205 : vector<16x8xf32> to vector<16x8xbf16>
    %cst_152 = arith.constant dense<0.000000e+00> : vector<16x32xf32>
    %209 = tpu.matmul %208, %207, %cst_152 {dimension_numbers = #tpu.dot_dimension_numbers<[1], [0], [0], [1], [0, 0, 1, 1], [], []>} : vector<16x8xbf16>, vector<8x32xbf16>, vector<16x32xf32> -> vector<16x32xf32>
    %210 = arith.addf %164, %209 : vector<16x32xf32>
    %c0_153 = arith.constant 0 : index
    %c0_154 = arith.constant 0 : index
    %c0_155 = arith.constant 0 : index
    %211 = vector.load %arg11[%c0_153, %c0_154, %c0_155] : memref<2x1x32xf32, #tpu.memory_space<vmem>>, vector<1x1x32xf32>
    %212 = vector.shape_cast %211 : vector<1x1x32xf32> to vector<1x32xf32>
    %213 = vector.broadcast %212 : vector<1x32xf32> to vector<16x32xf32>
    %214 = arith.addf %210, %213 : vector<16x32xf32>
    %215 = arith.addf %214, %24 : vector<16x32xf32>
    %c0_156 = arith.constant 0 : index
    %c0_157 = arith.constant 0 : index
    %c0_158 = arith.constant 0 : index
    %216 = vector.load %arg12[%c0_156, %c0_157, %c0_158] : memref<2x1x32xf32, #tpu.memory_space<vmem>>, vector<1x1x32xf32>
    %217 = vector.shape_cast %216 : vector<1x1x32xf32> to vector<1x32xf32>
    %c0_159 = arith.constant 0 : index
    %c0_160 = arith.constant 0 : index
    %c0_161 = arith.constant 0 : index
    %218 = vector.load %arg13[%c0_159, %c0_160, %c0_161] : memref<2x1x32xf32, #tpu.memory_space<vmem>>, vector<1x1x32xf32>
    %219 = vector.shape_cast %218 : vector<1x1x32xf32> to vector<1x32xf32>
    %cst_162 = arith.constant dense<0.000000e+00> : vector<16xf32>
    %220 = vector.multi_reduction <add>, %215, %cst_162 [1] : vector<16x32xf32> to vector<16xf32>
    %221 = vector.shape_cast %220 : vector<16xf32> to vector<16x1xf32>
    %cst_163 = arith.constant 3.200000e+01 : f32
    %222 = vector.broadcast %cst_163 : f32 to vector<16x1xf32>
    %223 = arith.divf %221, %222 : vector<16x1xf32>
    %224 = vector.broadcast %223 : vector<16x1xf32> to vector<16x32xf32>
    %225 = arith.subf %215, %224 : vector<16x32xf32>
    %226 = arith.mulf %225, %225 : vector<16x32xf32>
    %cst_164 = arith.constant dense<0.000000e+00> : vector<16xf32>
    %227 = vector.multi_reduction <add>, %226, %cst_164 [1] : vector<16x32xf32> to vector<16xf32>
    %228 = vector.shape_cast %227 : vector<16xf32> to vector<16x1xf32>
    %cst_165 = arith.constant 3.200000e+01 : f32
    %229 = vector.broadcast %cst_165 : f32 to vector<16x1xf32>
    %230 = arith.divf %228, %229 : vector<16x1xf32>
    %231 = vector.broadcast %223 : vector<16x1xf32> to vector<16x32xf32>
    %232 = arith.subf %215, %231 : vector<16x32xf32>
    %cst_166 = arith.constant 9.99999996E-13 : f32
    %233 = vector.broadcast %cst_166 : f32 to vector<16x1xf32>
    %234 = arith.addf %230, %233 : vector<16x1xf32>
    %235 = math.rsqrt %234 : vector<16x1xf32>
    %236 = vector.broadcast %235 : vector<16x1xf32> to vector<16x32xf32>
    %237 = arith.mulf %232, %236 : vector<16x32xf32>
    %238 = vector.broadcast %217 : vector<1x32xf32> to vector<16x32xf32>
    %239 = arith.mulf %237, %238 : vector<16x32xf32>
    %240 = vector.broadcast %219 : vector<1x32xf32> to vector<16x32xf32>
    %241 = arith.addf %239, %240 : vector<16x32xf32>
    %c0_167 = arith.constant 0 : index
    %c0_168 = arith.constant 0 : index
    %c0_169 = arith.constant 0 : index
    %242 = vector.load %arg14[%c0_167, %c0_168, %c0_169] : memref<2x32x64xbf16, #tpu.memory_space<vmem>>, vector<1x32x64xbf16>
    %243 = vector.shape_cast %242 : vector<1x32x64xbf16> to vector<32x64xbf16>
    %244 = arith.truncf %241 : vector<16x32xf32> to vector<16x32xbf16>
    %cst_170 = arith.constant dense<0.000000e+00> : vector<16x64xf32>
    %245 = tpu.matmul %244, %243, %cst_170 {dimension_numbers = #tpu.dot_dimension_numbers<[1], [0], [0], [1], [0, 0, 1, 1], [], []>} : vector<16x32xbf16>, vector<32x64xbf16>, vector<16x64xf32> -> vector<16x64xf32>
    %c0_171 = arith.constant 0 : index
    %c0_172 = arith.constant 0 : index
    %c0_173 = arith.constant 0 : index
    %246 = vector.load %arg15[%c0_171, %c0_172, %c0_173] : memref<2x1x64xf32, #tpu.memory_space<vmem>>, vector<1x1x64xf32>
    %247 = vector.shape_cast %246 : vector<1x1x64xf32> to vector<1x64xf32>
    %248 = vector.broadcast %247 : vector<1x64xf32> to vector<16x64xf32>
    %249 = arith.addf %245, %248 : vector<16x64xf32>
    %cst_174 = arith.constant 5.000000e-01 : f32
    %250 = vector.broadcast %cst_174 : f32 to vector<16x64xf32>
    %251 = arith.mulf %250, %249 : vector<16x64xf32>
    %cst_175 = arith.constant 4.471500e-02 : f32
    %252 = vector.broadcast %cst_175 : f32 to vector<16x64xf32>
    %253 = arith.mulf %252, %249 : vector<16x64xf32>
    %254 = arith.mulf %253, %249 : vector<16x64xf32>
    %255 = arith.mulf %254, %249 : vector<16x64xf32>
    %256 = arith.addf %249, %255 : vector<16x64xf32>
    %cst_176 = arith.constant 0.797884583 : f32
    %257 = vector.broadcast %cst_176 : f32 to vector<16x64xf32>
    %258 = arith.mulf %257, %256 : vector<16x64xf32>
    %259 = math.tanh %258 : vector<16x64xf32>
    %cst_177 = arith.constant 1.000000e+00 : f32
    %260 = vector.broadcast %cst_177 : f32 to vector<16x64xf32>
    %261 = arith.addf %260, %259 : vector<16x64xf32>
    %262 = arith.mulf %251, %261 : vector<16x64xf32>
    %c0_178 = arith.constant 0 : index
    %c0_179 = arith.constant 0 : index
    %c0_180 = arith.constant 0 : index
    %263 = vector.load %arg16[%c0_178, %c0_179, %c0_180] : memref<2x64x32xbf16, #tpu.memory_space<vmem>>, vector<1x64x32xbf16>
    %264 = vector.shape_cast %263 : vector<1x64x32xbf16> to vector<64x32xbf16>
    %265 = arith.truncf %262 : vector<16x64xf32> to vector<16x64xbf16>
    %cst_181 = arith.constant dense<0.000000e+00> : vector<16x32xf32>
    %266 = tpu.matmul %265, %264, %cst_181 {dimension_numbers = #tpu.dot_dimension_numbers<[1], [0], [0], [1], [0, 0, 1, 1], [], []>} : vector<16x64xbf16>, vector<64x32xbf16>, vector<16x32xf32> -> vector<16x32xf32>
    %c0_182 = arith.constant 0 : index
    %c0_183 = arith.constant 0 : index
    %c0_184 = arith.constant 0 : index
    %267 = vector.load %arg17[%c0_182, %c0_183, %c0_184] : memref<2x1x32xf32, #tpu.memory_space<vmem>>, vector<1x1x32xf32>
    %268 = vector.shape_cast %267 : vector<1x1x32xf32> to vector<1x32xf32>
    %269 = vector.broadcast %268 : vector<1x32xf32> to vector<16x32xf32>
    %270 = arith.addf %266, %269 : vector<16x32xf32>
    %271 = arith.addf %270, %241 : vector<16x32xf32>
    %c0_185 = arith.constant 0 : index
    %c0_186 = arith.constant 0 : index
    %c0_187 = arith.constant 0 : index
    %272 = vector.load %arg18[%c0_185, %c0_186, %c0_187] : memref<2x1x32xf32, #tpu.memory_space<vmem>>, vector<1x1x32xf32>
    %273 = vector.shape_cast %272 : vector<1x1x32xf32> to vector<1x32xf32>
    %c0_188 = arith.constant 0 : index
    %c0_189 = arith.constant 0 : index
    %c0_190 = arith.constant 0 : index
    %274 = vector.load %arg19[%c0_188, %c0_189, %c0_190] : memref<2x1x32xf32, #tpu.memory_space<vmem>>, vector<1x1x32xf32>
    %275 = vector.shape_cast %274 : vector<1x1x32xf32> to vector<1x32xf32>
    %cst_191 = arith.constant dense<0.000000e+00> : vector<16xf32>
    %276 = vector.multi_reduction <add>, %271, %cst_191 [1] : vector<16x32xf32> to vector<16xf32>
    %277 = vector.shape_cast %276 : vector<16xf32> to vector<16x1xf32>
    %cst_192 = arith.constant 3.200000e+01 : f32
    %278 = vector.broadcast %cst_192 : f32 to vector<16x1xf32>
    %279 = arith.divf %277, %278 : vector<16x1xf32>
    %280 = vector.broadcast %279 : vector<16x1xf32> to vector<16x32xf32>
    %281 = arith.subf %271, %280 : vector<16x32xf32>
    %282 = arith.mulf %281, %281 : vector<16x32xf32>
    %cst_193 = arith.constant dense<0.000000e+00> : vector<16xf32>
    %283 = vector.multi_reduction <add>, %282, %cst_193 [1] : vector<16x32xf32> to vector<16xf32>
    %284 = vector.shape_cast %283 : vector<16xf32> to vector<16x1xf32>
    %cst_194 = arith.constant 3.200000e+01 : f32
    %285 = vector.broadcast %cst_194 : f32 to vector<16x1xf32>
    %286 = arith.divf %284, %285 : vector<16x1xf32>
    %287 = vector.broadcast %279 : vector<16x1xf32> to vector<16x32xf32>
    %288 = arith.subf %271, %287 : vector<16x32xf32>
    %cst_195 = arith.constant 9.99999996E-13 : f32
    %289 = vector.broadcast %cst_195 : f32 to vector<16x1xf32>
    %290 = arith.addf %286, %289 : vector<16x1xf32>
    %291 = math.rsqrt %290 : vector<16x1xf32>
    %292 = vector.broadcast %291 : vector<16x1xf32> to vector<16x32xf32>
    %293 = arith.mulf %288, %292 : vector<16x32xf32>
    %294 = vector.broadcast %273 : vector<1x32xf32> to vector<16x32xf32>
    %295 = arith.mulf %293, %294 : vector<16x32xf32>
    %296 = vector.broadcast %275 : vector<1x32xf32> to vector<16x32xf32>
    %297 = arith.addf %295, %296 : vector<16x32xf32>
    %cst_196 = arith.constant 0.000000e+00 : f32
    %298 = vector.broadcast %cst_196 : f32 to vector<16x32xf32>
    %c1_197 = arith.constant 1 : index
    %c0_198 = arith.constant 0 : index
    %c0_199 = arith.constant 0 : index
    %c0_200 = arith.constant 0 : index
    %299 = vector.load %arg4[%c1_197, %c0_198, %c0_199, %c0_200] : memref<2x4x32x8xbf16, #tpu.memory_space<vmem>>, vector<1x1x32x8xbf16>
    %300 = vector.shape_cast %299 : vector<1x1x32x8xbf16> to vector<32x8xbf16>
    %301 = arith.truncf %297 : vector<16x32xf32> to vector<16x32xbf16>
    %cst_201 = arith.constant dense<0.000000e+00> : vector<16x8xf32>
    %302 = tpu.matmul %301, %300, %cst_201 {dimension_numbers = #tpu.dot_dimension_numbers<[1], [0], [0], [1], [0, 0, 1, 1], [], []>} : vector<16x32xbf16>, vector<32x8xbf16>, vector<16x8xf32> -> vector<16x8xf32>
    %c1_202 = arith.constant 1 : index
    %c0_203 = arith.constant 0 : index
    %c0_204 = arith.constant 0 : index
    %c0_205 = arith.constant 0 : index
    %303 = vector.load %arg5[%c1_202, %c0_203, %c0_204, %c0_205] : memref<2x4x1x8xf32, #tpu.memory_space<vmem>>, vector<1x1x1x8xf32>
    %304 = vector.shape_cast %303 : vector<1x1x1x8xf32> to vector<1x8xf32>
    %305 = vector.broadcast %304 : vector<1x8xf32> to vector<16x8xf32>
    %306 = arith.addf %302, %305 : vector<16x8xf32>
    %c1_206 = arith.constant 1 : index
    %c0_207 = arith.constant 0 : index
    %c0_208 = arith.constant 0 : index
    %c0_209 = arith.constant 0 : index
    %307 = vector.load %arg6[%c1_206, %c0_207, %c0_208, %c0_209] : memref<2x4x32x8xbf16, #tpu.memory_space<vmem>>, vector<1x1x32x8xbf16>
    %308 = vector.shape_cast %307 : vector<1x1x32x8xbf16> to vector<32x8xbf16>
    %309 = arith.truncf %297 : vector<16x32xf32> to vector<16x32xbf16>
    %cst_210 = arith.constant dense<0.000000e+00> : vector<16x8xf32>
    %310 = tpu.matmul %309, %308, %cst_210 {dimension_numbers = #tpu.dot_dimension_numbers<[1], [0], [0], [1], [0, 0, 1, 1], [], []>} : vector<16x32xbf16>, vector<32x8xbf16>, vector<16x8xf32> -> vector<16x8xf32>
    %c1_211 = arith.constant 1 : index
    %c0_212 = arith.constant 0 : index
    %c0_213 = arith.constant 0 : index
    %c0_214 = arith.constant 0 : index
    %311 = vector.load %arg7[%c1_211, %c0_212, %c0_213, %c0_214] : memref<2x4x1x8xf32, #tpu.memory_space<vmem>>, vector<1x1x1x8xf32>
    %312 = vector.shape_cast %311 : vector<1x1x1x8xf32> to vector<1x8xf32>
    %313 = vector.broadcast %312 : vector<1x8xf32> to vector<16x8xf32>
    %314 = arith.addf %310, %313 : vector<16x8xf32>
    %c1_215 = arith.constant 1 : index
    %c0_216 = arith.constant 0 : index
    %c0_217 = arith.constant 0 : index
    %c0_218 = arith.constant 0 : index
    %315 = vector.load %arg8[%c1_215, %c0_216, %c0_217, %c0_218] : memref<2x4x32x8xbf16, #tpu.memory_space<vmem>>, vector<1x1x32x8xbf16>
    %316 = vector.shape_cast %315 : vector<1x1x32x8xbf16> to vector<32x8xbf16>
    %317 = arith.truncf %297 : vector<16x32xf32> to vector<16x32xbf16>
    %cst_219 = arith.constant dense<0.000000e+00> : vector<16x8xf32>
    %318 = tpu.matmul %317, %316, %cst_219 {dimension_numbers = #tpu.dot_dimension_numbers<[1], [0], [0], [1], [0, 0, 1, 1], [], []>} : vector<16x32xbf16>, vector<32x8xbf16>, vector<16x8xf32> -> vector<16x8xf32>
    %c1_220 = arith.constant 1 : index
    %c0_221 = arith.constant 0 : index
    %c0_222 = arith.constant 0 : index
    %c0_223 = arith.constant 0 : index
    %319 = vector.load %arg9[%c1_220, %c0_221, %c0_222, %c0_223] : memref<2x4x1x8xf32, #tpu.memory_space<vmem>>, vector<1x1x1x8xf32>
    %320 = vector.shape_cast %319 : vector<1x1x1x8xf32> to vector<1x8xf32>
    %321 = vector.broadcast %320 : vector<1x8xf32> to vector<16x8xf32>
    %322 = arith.addf %318, %321 : vector<16x8xf32>
    %323 = arith.truncf %306 : vector<16x8xf32> to vector<16x8xbf16>
    %324 = arith.truncf %314 : vector<16x8xf32> to vector<16x8xbf16>
    %cst_224 = arith.constant dense<0.000000e+00> : vector<16x16xf32>
    %325 = tpu.matmul %323, %324, %cst_224 {dimension_numbers = #tpu.dot_dimension_numbers<[1], [1], [0], [0], [0, 0, 1, 0], [], []>} : vector<16x8xbf16>, vector<16x8xbf16>, vector<16x16xf32> -> vector<16x16xf32>
    %326 = arith.addf %325, %25 : vector<16x16xf32>
    %cst_225 = arith.constant dense<0xFF800000> : vector<16xf32>
    %327 = vector.multi_reduction <maximumf>, %326, %cst_225 [1] : vector<16x16xf32> to vector<16xf32>
    %328 = vector.shape_cast %327 : vector<16xf32> to vector<16x1xf32>
    %329 = vector.broadcast %328 : vector<16x1xf32> to vector<16x16xf32>
    %330 = arith.subf %326, %329 : vector<16x16xf32>
    %331 = math.exp %330 : vector<16x16xf32>
    %cst_226 = arith.constant dense<0.000000e+00> : vector<16xf32>
    %332 = vector.multi_reduction <add>, %331, %cst_226 [1] : vector<16x16xf32> to vector<16xf32>
    %333 = vector.shape_cast %332 : vector<16xf32> to vector<16x1xf32>
    %334 = tpu.reciprocal %333 {approx = true} : vector<16x1xf32> -> vector<16x1xf32>
    %335 = vector.broadcast %334 : vector<16x1xf32> to vector<16x16xf32>
    %336 = arith.mulf %331, %335 : vector<16x16xf32>
    %337 = arith.truncf %336 : vector<16x16xf32> to vector<16x16xbf16>
    %338 = arith.truncf %322 : vector<16x8xf32> to vector<16x8xbf16>
    %cst_227 = arith.constant dense<0.000000e+00> : vector<16x8xf32>
    %339 = tpu.matmul %337, %338, %cst_227 {dimension_numbers = #tpu.dot_dimension_numbers<[1], [0], [0], [1], [0, 0, 1, 1], [], []>} : vector<16x16xbf16>, vector<16x8xbf16>, vector<16x8xf32> -> vector<16x8xf32>
    %c1_228 = arith.constant 1 : index
    %c0_229 = arith.constant 0 : index
    %c0_230 = arith.constant 0 : index
    %c0_231 = arith.constant 0 : index
    %340 = vector.load %arg10[%c1_228, %c0_229, %c0_230, %c0_231] : memref<2x4x8x32xbf16, #tpu.memory_space<vmem>>, vector<1x1x8x32xbf16>
    %341 = vector.shape_cast %340 : vector<1x1x8x32xbf16> to vector<8x32xbf16>
    %342 = arith.truncf %339 : vector<16x8xf32> to vector<16x8xbf16>
    %cst_232 = arith.constant dense<0.000000e+00> : vector<16x32xf32>
    %343 = tpu.matmul %342, %341, %cst_232 {dimension_numbers = #tpu.dot_dimension_numbers<[1], [0], [0], [1], [0, 0, 1, 1], [], []>} : vector<16x8xbf16>, vector<8x32xbf16>, vector<16x32xf32> -> vector<16x32xf32>
    %344 = arith.addf %298, %343 : vector<16x32xf32>
    %c1_233 = arith.constant 1 : index
    %c1_234 = arith.constant 1 : index
    %c0_235 = arith.constant 0 : index
    %c0_236 = arith.constant 0 : index
    %345 = vector.load %arg4[%c1_233, %c1_234, %c0_235, %c0_236] : memref<2x4x32x8xbf16, #tpu.memory_space<vmem>>, vector<1x1x32x8xbf16>
    %346 = vector.shape_cast %345 : vector<1x1x32x8xbf16> to vector<32x8xbf16>
    %347 = arith.truncf %297 : vector<16x32xf32> to vector<16x32xbf16>
    %cst_237 = arith.constant dense<0.000000e+00> : vector<16x8xf32>
    %348 = tpu.matmul %347, %346, %cst_237 {dimension_numbers = #tpu.dot_dimension_numbers<[1], [0], [0], [1], [0, 0, 1, 1], [], []>} : vector<16x32xbf16>, vector<32x8xbf16>, vector<16x8xf32> -> vector<16x8xf32>
    %c1_238 = arith.constant 1 : index
    %c1_239 = arith.constant 1 : index
    %c0_240 = arith.constant 0 : index
    %c0_241 = arith.constant 0 : index
    %349 = vector.load %arg5[%c1_238, %c1_239, %c0_240, %c0_241] : memref<2x4x1x8xf32, #tpu.memory_space<vmem>>, vector<1x1x1x8xf32>
    %350 = vector.shape_cast %349 : vector<1x1x1x8xf32> to vector<1x8xf32>
    %351 = vector.broadcast %350 : vector<1x8xf32> to vector<16x8xf32>
    %352 = arith.addf %348, %351 : vector<16x8xf32>
    %c1_242 = arith.constant 1 : index
    %c1_243 = arith.constant 1 : index
    %c0_244 = arith.constant 0 : index
    %c0_245 = arith.constant 0 : index
    %353 = vector.load %arg6[%c1_242, %c1_243, %c0_244, %c0_245] : memref<2x4x32x8xbf16, #tpu.memory_space<vmem>>, vector<1x1x32x8xbf16>
    %354 = vector.shape_cast %353 : vector<1x1x32x8xbf16> to vector<32x8xbf16>
    %355 = arith.truncf %297 : vector<16x32xf32> to vector<16x32xbf16>
    %cst_246 = arith.constant dense<0.000000e+00> : vector<16x8xf32>
    %356 = tpu.matmul %355, %354, %cst_246 {dimension_numbers = #tpu.dot_dimension_numbers<[1], [0], [0], [1], [0, 0, 1, 1], [], []>} : vector<16x32xbf16>, vector<32x8xbf16>, vector<16x8xf32> -> vector<16x8xf32>
    %c1_247 = arith.constant 1 : index
    %c1_248 = arith.constant 1 : index
    %c0_249 = arith.constant 0 : index
    %c0_250 = arith.constant 0 : index
    %357 = vector.load %arg7[%c1_247, %c1_248, %c0_249, %c0_250] : memref<2x4x1x8xf32, #tpu.memory_space<vmem>>, vector<1x1x1x8xf32>
    %358 = vector.shape_cast %357 : vector<1x1x1x8xf32> to vector<1x8xf32>
    %359 = vector.broadcast %358 : vector<1x8xf32> to vector<16x8xf32>
    %360 = arith.addf %356, %359 : vector<16x8xf32>
    %c1_251 = arith.constant 1 : index
    %c1_252 = arith.constant 1 : index
    %c0_253 = arith.constant 0 : index
    %c0_254 = arith.constant 0 : index
    %361 = vector.load %arg8[%c1_251, %c1_252, %c0_253, %c0_254] : memref<2x4x32x8xbf16, #tpu.memory_space<vmem>>, vector<1x1x32x8xbf16>
    %362 = vector.shape_cast %361 : vector<1x1x32x8xbf16> to vector<32x8xbf16>
    %363 = arith.truncf %297 : vector<16x32xf32> to vector<16x32xbf16>
    %cst_255 = arith.constant dense<0.000000e+00> : vector<16x8xf32>
    %364 = tpu.matmul %363, %362, %cst_255 {dimension_numbers = #tpu.dot_dimension_numbers<[1], [0], [0], [1], [0, 0, 1, 1], [], []>} : vector<16x32xbf16>, vector<32x8xbf16>, vector<16x8xf32> -> vector<16x8xf32>
    %c1_256 = arith.constant 1 : index
    %c1_257 = arith.constant 1 : index
    %c0_258 = arith.constant 0 : index
    %c0_259 = arith.constant 0 : index
    %365 = vector.load %arg9[%c1_256, %c1_257, %c0_258, %c0_259] : memref<2x4x1x8xf32, #tpu.memory_space<vmem>>, vector<1x1x1x8xf32>
    %366 = vector.shape_cast %365 : vector<1x1x1x8xf32> to vector<1x8xf32>
    %367 = vector.broadcast %366 : vector<1x8xf32> to vector<16x8xf32>
    %368 = arith.addf %364, %367 : vector<16x8xf32>
    %369 = arith.truncf %352 : vector<16x8xf32> to vector<16x8xbf16>
    %370 = arith.truncf %360 : vector<16x8xf32> to vector<16x8xbf16>
    %cst_260 = arith.constant dense<0.000000e+00> : vector<16x16xf32>
    %371 = tpu.matmul %369, %370, %cst_260 {dimension_numbers = #tpu.dot_dimension_numbers<[1], [1], [0], [0], [0, 0, 1, 0], [], []>} : vector<16x8xbf16>, vector<16x8xbf16>, vector<16x16xf32> -> vector<16x16xf32>
    %372 = arith.addf %371, %25 : vector<16x16xf32>
    %cst_261 = arith.constant dense<0xFF800000> : vector<16xf32>
    %373 = vector.multi_reduction <maximumf>, %372, %cst_261 [1] : vector<16x16xf32> to vector<16xf32>
    %374 = vector.shape_cast %373 : vector<16xf32> to vector<16x1xf32>
    %375 = vector.broadcast %374 : vector<16x1xf32> to vector<16x16xf32>
    %376 = arith.subf %372, %375 : vector<16x16xf32>
    %377 = math.exp %376 : vector<16x16xf32>
    %cst_262 = arith.constant dense<0.000000e+00> : vector<16xf32>
    %378 = vector.multi_reduction <add>, %377, %cst_262 [1] : vector<16x16xf32> to vector<16xf32>
    %379 = vector.shape_cast %378 : vector<16xf32> to vector<16x1xf32>
    %380 = tpu.reciprocal %379 {approx = true} : vector<16x1xf32> -> vector<16x1xf32>
    %381 = vector.broadcast %380 : vector<16x1xf32> to vector<16x16xf32>
    %382 = arith.mulf %377, %381 : vector<16x16xf32>
    %383 = arith.truncf %382 : vector<16x16xf32> to vector<16x16xbf16>
    %384 = arith.truncf %368 : vector<16x8xf32> to vector<16x8xbf16>
    %cst_263 = arith.constant dense<0.000000e+00> : vector<16x8xf32>
    %385 = tpu.matmul %383, %384, %cst_263 {dimension_numbers = #tpu.dot_dimension_numbers<[1], [0], [0], [1], [0, 0, 1, 1], [], []>} : vector<16x16xbf16>, vector<16x8xbf16>, vector<16x8xf32> -> vector<16x8xf32>
    %c1_264 = arith.constant 1 : index
    %c1_265 = arith.constant 1 : index
    %c0_266 = arith.constant 0 : index
    %c0_267 = arith.constant 0 : index
    %386 = vector.load %arg10[%c1_264, %c1_265, %c0_266, %c0_267] : memref<2x4x8x32xbf16, #tpu.memory_space<vmem>>, vector<1x1x8x32xbf16>
    %387 = vector.shape_cast %386 : vector<1x1x8x32xbf16> to vector<8x32xbf16>
    %388 = arith.truncf %385 : vector<16x8xf32> to vector<16x8xbf16>
    %cst_268 = arith.constant dense<0.000000e+00> : vector<16x32xf32>
    %389 = tpu.matmul %388, %387, %cst_268 {dimension_numbers = #tpu.dot_dimension_numbers<[1], [0], [0], [1], [0, 0, 1, 1], [], []>} : vector<16x8xbf16>, vector<8x32xbf16>, vector<16x32xf32> -> vector<16x32xf32>
    %390 = arith.addf %344, %389 : vector<16x32xf32>
    %c1_269 = arith.constant 1 : index
    %c2_270 = arith.constant 2 : index
    %c0_271 = arith.constant 0 : index
    %c0_272 = arith.constant 0 : index
    %391 = vector.load %arg4[%c1_269, %c2_270, %c0_271, %c0_272] : memref<2x4x32x8xbf16, #tpu.memory_space<vmem>>, vector<1x1x32x8xbf16>
    %392 = vector.shape_cast %391 : vector<1x1x32x8xbf16> to vector<32x8xbf16>
    %393 = arith.truncf %297 : vector<16x32xf32> to vector<16x32xbf16>
    %cst_273 = arith.constant dense<0.000000e+00> : vector<16x8xf32>
    %394 = tpu.matmul %393, %392, %cst_273 {dimension_numbers = #tpu.dot_dimension_numbers<[1], [0], [0], [1], [0, 0, 1, 1], [], []>} : vector<16x32xbf16>, vector<32x8xbf16>, vector<16x8xf32> -> vector<16x8xf32>
    %c1_274 = arith.constant 1 : index
    %c2_275 = arith.constant 2 : index
    %c0_276 = arith.constant 0 : index
    %c0_277 = arith.constant 0 : index
    %395 = vector.load %arg5[%c1_274, %c2_275, %c0_276, %c0_277] : memref<2x4x1x8xf32, #tpu.memory_space<vmem>>, vector<1x1x1x8xf32>
    %396 = vector.shape_cast %395 : vector<1x1x1x8xf32> to vector<1x8xf32>
    %397 = vector.broadcast %396 : vector<1x8xf32> to vector<16x8xf32>
    %398 = arith.addf %394, %397 : vector<16x8xf32>
    %c1_278 = arith.constant 1 : index
    %c2_279 = arith.constant 2 : index
    %c0_280 = arith.constant 0 : index
    %c0_281 = arith.constant 0 : index
    %399 = vector.load %arg6[%c1_278, %c2_279, %c0_280, %c0_281] : memref<2x4x32x8xbf16, #tpu.memory_space<vmem>>, vector<1x1x32x8xbf16>
    %400 = vector.shape_cast %399 : vector<1x1x32x8xbf16> to vector<32x8xbf16>
    %401 = arith.truncf %297 : vector<16x32xf32> to vector<16x32xbf16>
    %cst_282 = arith.constant dense<0.000000e+00> : vector<16x8xf32>
    %402 = tpu.matmul %401, %400, %cst_282 {dimension_numbers = #tpu.dot_dimension_numbers<[1], [0], [0], [1], [0, 0, 1, 1], [], []>} : vector<16x32xbf16>, vector<32x8xbf16>, vector<16x8xf32> -> vector<16x8xf32>
    %c1_283 = arith.constant 1 : index
    %c2_284 = arith.constant 2 : index
    %c0_285 = arith.constant 0 : index
    %c0_286 = arith.constant 0 : index
    %403 = vector.load %arg7[%c1_283, %c2_284, %c0_285, %c0_286] : memref<2x4x1x8xf32, #tpu.memory_space<vmem>>, vector<1x1x1x8xf32>
    %404 = vector.shape_cast %403 : vector<1x1x1x8xf32> to vector<1x8xf32>
    %405 = vector.broadcast %404 : vector<1x8xf32> to vector<16x8xf32>
    %406 = arith.addf %402, %405 : vector<16x8xf32>
    %c1_287 = arith.constant 1 : index
    %c2_288 = arith.constant 2 : index
    %c0_289 = arith.constant 0 : index
    %c0_290 = arith.constant 0 : index
    %407 = vector.load %arg8[%c1_287, %c2_288, %c0_289, %c0_290] : memref<2x4x32x8xbf16, #tpu.memory_space<vmem>>, vector<1x1x32x8xbf16>
    %408 = vector.shape_cast %407 : vector<1x1x32x8xbf16> to vector<32x8xbf16>
    %409 = arith.truncf %297 : vector<16x32xf32> to vector<16x32xbf16>
    %cst_291 = arith.constant dense<0.000000e+00> : vector<16x8xf32>
    %410 = tpu.matmul %409, %408, %cst_291 {dimension_numbers = #tpu.dot_dimension_numbers<[1], [0], [0], [1], [0, 0, 1, 1], [], []>} : vector<16x32xbf16>, vector<32x8xbf16>, vector<16x8xf32> -> vector<16x8xf32>
    %c1_292 = arith.constant 1 : index
    %c2_293 = arith.constant 2 : index
    %c0_294 = arith.constant 0 : index
    %c0_295 = arith.constant 0 : index
    %411 = vector.load %arg9[%c1_292, %c2_293, %c0_294, %c0_295] : memref<2x4x1x8xf32, #tpu.memory_space<vmem>>, vector<1x1x1x8xf32>
    %412 = vector.shape_cast %411 : vector<1x1x1x8xf32> to vector<1x8xf32>
    %413 = vector.broadcast %412 : vector<1x8xf32> to vector<16x8xf32>
    %414 = arith.addf %410, %413 : vector<16x8xf32>
    %415 = arith.truncf %398 : vector<16x8xf32> to vector<16x8xbf16>
    %416 = arith.truncf %406 : vector<16x8xf32> to vector<16x8xbf16>
    %cst_296 = arith.constant dense<0.000000e+00> : vector<16x16xf32>
    %417 = tpu.matmul %415, %416, %cst_296 {dimension_numbers = #tpu.dot_dimension_numbers<[1], [1], [0], [0], [0, 0, 1, 0], [], []>} : vector<16x8xbf16>, vector<16x8xbf16>, vector<16x16xf32> -> vector<16x16xf32>
    %418 = arith.addf %417, %25 : vector<16x16xf32>
    %cst_297 = arith.constant dense<0xFF800000> : vector<16xf32>
    %419 = vector.multi_reduction <maximumf>, %418, %cst_297 [1] : vector<16x16xf32> to vector<16xf32>
    %420 = vector.shape_cast %419 : vector<16xf32> to vector<16x1xf32>
    %421 = vector.broadcast %420 : vector<16x1xf32> to vector<16x16xf32>
    %422 = arith.subf %418, %421 : vector<16x16xf32>
    %423 = math.exp %422 : vector<16x16xf32>
    %cst_298 = arith.constant dense<0.000000e+00> : vector<16xf32>
    %424 = vector.multi_reduction <add>, %423, %cst_298 [1] : vector<16x16xf32> to vector<16xf32>
    %425 = vector.shape_cast %424 : vector<16xf32> to vector<16x1xf32>
    %426 = tpu.reciprocal %425 {approx = true} : vector<16x1xf32> -> vector<16x1xf32>
    %427 = vector.broadcast %426 : vector<16x1xf32> to vector<16x16xf32>
    %428 = arith.mulf %423, %427 : vector<16x16xf32>
    %429 = arith.truncf %428 : vector<16x16xf32> to vector<16x16xbf16>
    %430 = arith.truncf %414 : vector<16x8xf32> to vector<16x8xbf16>
    %cst_299 = arith.constant dense<0.000000e+00> : vector<16x8xf32>
    %431 = tpu.matmul %429, %430, %cst_299 {dimension_numbers = #tpu.dot_dimension_numbers<[1], [0], [0], [1], [0, 0, 1, 1], [], []>} : vector<16x16xbf16>, vector<16x8xbf16>, vector<16x8xf32> -> vector<16x8xf32>
    %c1_300 = arith.constant 1 : index
    %c2_301 = arith.constant 2 : index
    %c0_302 = arith.constant 0 : index
    %c0_303 = arith.constant 0 : index
    %432 = vector.load %arg10[%c1_300, %c2_301, %c0_302, %c0_303] : memref<2x4x8x32xbf16, #tpu.memory_space<vmem>>, vector<1x1x8x32xbf16>
    %433 = vector.shape_cast %432 : vector<1x1x8x32xbf16> to vector<8x32xbf16>
    %434 = arith.truncf %431 : vector<16x8xf32> to vector<16x8xbf16>
    %cst_304 = arith.constant dense<0.000000e+00> : vector<16x32xf32>
    %435 = tpu.matmul %434, %433, %cst_304 {dimension_numbers = #tpu.dot_dimension_numbers<[1], [0], [0], [1], [0, 0, 1, 1], [], []>} : vector<16x8xbf16>, vector<8x32xbf16>, vector<16x32xf32> -> vector<16x32xf32>
    %436 = arith.addf %390, %435 : vector<16x32xf32>
    %c1_305 = arith.constant 1 : index
    %c3_306 = arith.constant 3 : index
    %c0_307 = arith.constant 0 : index
    %c0_308 = arith.constant 0 : index
    %437 = vector.load %arg4[%c1_305, %c3_306, %c0_307, %c0_308] : memref<2x4x32x8xbf16, #tpu.memory_space<vmem>>, vector<1x1x32x8xbf16>
    %438 = vector.shape_cast %437 : vector<1x1x32x8xbf16> to vector<32x8xbf16>
    %439 = arith.truncf %297 : vector<16x32xf32> to vector<16x32xbf16>
    %cst_309 = arith.constant dense<0.000000e+00> : vector<16x8xf32>
    %440 = tpu.matmul %439, %438, %cst_309 {dimension_numbers = #tpu.dot_dimension_numbers<[1], [0], [0], [1], [0, 0, 1, 1], [], []>} : vector<16x32xbf16>, vector<32x8xbf16>, vector<16x8xf32> -> vector<16x8xf32>
    %c1_310 = arith.constant 1 : index
    %c3_311 = arith.constant 3 : index
    %c0_312 = arith.constant 0 : index
    %c0_313 = arith.constant 0 : index
    %441 = vector.load %arg5[%c1_310, %c3_311, %c0_312, %c0_313] : memref<2x4x1x8xf32, #tpu.memory_space<vmem>>, vector<1x1x1x8xf32>
    %442 = vector.shape_cast %441 : vector<1x1x1x8xf32> to vector<1x8xf32>
    %443 = vector.broadcast %442 : vector<1x8xf32> to vector<16x8xf32>
    %444 = arith.addf %440, %443 : vector<16x8xf32>
    %c1_314 = arith.constant 1 : index
    %c3_315 = arith.constant 3 : index
    %c0_316 = arith.constant 0 : index
    %c0_317 = arith.constant 0 : index
    %445 = vector.load %arg6[%c1_314, %c3_315, %c0_316, %c0_317] : memref<2x4x32x8xbf16, #tpu.memory_space<vmem>>, vector<1x1x32x8xbf16>
    %446 = vector.shape_cast %445 : vector<1x1x32x8xbf16> to vector<32x8xbf16>
    %447 = arith.truncf %297 : vector<16x32xf32> to vector<16x32xbf16>
    %cst_318 = arith.constant dense<0.000000e+00> : vector<16x8xf32>
    %448 = tpu.matmul %447, %446, %cst_318 {dimension_numbers = #tpu.dot_dimension_numbers<[1], [0], [0], [1], [0, 0, 1, 1], [], []>} : vector<16x32xbf16>, vector<32x8xbf16>, vector<16x8xf32> -> vector<16x8xf32>
    %c1_319 = arith.constant 1 : index
    %c3_320 = arith.constant 3 : index
    %c0_321 = arith.constant 0 : index
    %c0_322 = arith.constant 0 : index
    %449 = vector.load %arg7[%c1_319, %c3_320, %c0_321, %c0_322] : memref<2x4x1x8xf32, #tpu.memory_space<vmem>>, vector<1x1x1x8xf32>
    %450 = vector.shape_cast %449 : vector<1x1x1x8xf32> to vector<1x8xf32>
    %451 = vector.broadcast %450 : vector<1x8xf32> to vector<16x8xf32>
    %452 = arith.addf %448, %451 : vector<16x8xf32>
    %c1_323 = arith.constant 1 : index
    %c3_324 = arith.constant 3 : index
    %c0_325 = arith.constant 0 : index
    %c0_326 = arith.constant 0 : index
    %453 = vector.load %arg8[%c1_323, %c3_324, %c0_325, %c0_326] : memref<2x4x32x8xbf16, #tpu.memory_space<vmem>>, vector<1x1x32x8xbf16>
    %454 = vector.shape_cast %453 : vector<1x1x32x8xbf16> to vector<32x8xbf16>
    %455 = arith.truncf %297 : vector<16x32xf32> to vector<16x32xbf16>
    %cst_327 = arith.constant dense<0.000000e+00> : vector<16x8xf32>
    %456 = tpu.matmul %455, %454, %cst_327 {dimension_numbers = #tpu.dot_dimension_numbers<[1], [0], [0], [1], [0, 0, 1, 1], [], []>} : vector<16x32xbf16>, vector<32x8xbf16>, vector<16x8xf32> -> vector<16x8xf32>
    %c1_328 = arith.constant 1 : index
    %c3_329 = arith.constant 3 : index
    %c0_330 = arith.constant 0 : index
    %c0_331 = arith.constant 0 : index
    %457 = vector.load %arg9[%c1_328, %c3_329, %c0_330, %c0_331] : memref<2x4x1x8xf32, #tpu.memory_space<vmem>>, vector<1x1x1x8xf32>
    %458 = vector.shape_cast %457 : vector<1x1x1x8xf32> to vector<1x8xf32>
    %459 = vector.broadcast %458 : vector<1x8xf32> to vector<16x8xf32>
    %460 = arith.addf %456, %459 : vector<16x8xf32>
    %461 = arith.truncf %444 : vector<16x8xf32> to vector<16x8xbf16>
    %462 = arith.truncf %452 : vector<16x8xf32> to vector<16x8xbf16>
    %cst_332 = arith.constant dense<0.000000e+00> : vector<16x16xf32>
    %463 = tpu.matmul %461, %462, %cst_332 {dimension_numbers = #tpu.dot_dimension_numbers<[1], [1], [0], [0], [0, 0, 1, 0], [], []>} : vector<16x8xbf16>, vector<16x8xbf16>, vector<16x16xf32> -> vector<16x16xf32>
    %464 = arith.addf %463, %25 : vector<16x16xf32>
    %cst_333 = arith.constant dense<0xFF800000> : vector<16xf32>
    %465 = vector.multi_reduction <maximumf>, %464, %cst_333 [1] : vector<16x16xf32> to vector<16xf32>
    %466 = vector.shape_cast %465 : vector<16xf32> to vector<16x1xf32>
    %467 = vector.broadcast %466 : vector<16x1xf32> to vector<16x16xf32>
    %468 = arith.subf %464, %467 : vector<16x16xf32>
    %469 = math.exp %468 : vector<16x16xf32>
    %cst_334 = arith.constant dense<0.000000e+00> : vector<16xf32>
    %470 = vector.multi_reduction <add>, %469, %cst_334 [1] : vector<16x16xf32> to vector<16xf32>
    %471 = vector.shape_cast %470 : vector<16xf32> to vector<16x1xf32>
    %472 = tpu.reciprocal %471 {approx = true} : vector<16x1xf32> -> vector<16x1xf32>
    %473 = vector.broadcast %472 : vector<16x1xf32> to vector<16x16xf32>
    %474 = arith.mulf %469, %473 : vector<16x16xf32>
    %475 = arith.truncf %474 : vector<16x16xf32> to vector<16x16xbf16>
    %476 = arith.truncf %460 : vector<16x8xf32> to vector<16x8xbf16>
    %cst_335 = arith.constant dense<0.000000e+00> : vector<16x8xf32>
    %477 = tpu.matmul %475, %476, %cst_335 {dimension_numbers = #tpu.dot_dimension_numbers<[1], [0], [0], [1], [0, 0, 1, 1], [], []>} : vector<16x16xbf16>, vector<16x8xbf16>, vector<16x8xf32> -> vector<16x8xf32>
    %c1_336 = arith.constant 1 : index
    %c3_337 = arith.constant 3 : index
    %c0_338 = arith.constant 0 : index
    %c0_339 = arith.constant 0 : index
    %478 = vector.load %arg10[%c1_336, %c3_337, %c0_338, %c0_339] : memref<2x4x8x32xbf16, #tpu.memory_space<vmem>>, vector<1x1x8x32xbf16>
    %479 = vector.shape_cast %478 : vector<1x1x8x32xbf16> to vector<8x32xbf16>
    %480 = arith.truncf %477 : vector<16x8xf32> to vector<16x8xbf16>
    %cst_340 = arith.constant dense<0.000000e+00> : vector<16x32xf32>
    %481 = tpu.matmul %480, %479, %cst_340 {dimension_numbers = #tpu.dot_dimension_numbers<[1], [0], [0], [1], [0, 0, 1, 1], [], []>} : vector<16x8xbf16>, vector<8x32xbf16>, vector<16x32xf32> -> vector<16x32xf32>
    %482 = arith.addf %436, %481 : vector<16x32xf32>
    %c1_341 = arith.constant 1 : index
    %c0_342 = arith.constant 0 : index
    %c0_343 = arith.constant 0 : index
    %483 = vector.load %arg11[%c1_341, %c0_342, %c0_343] : memref<2x1x32xf32, #tpu.memory_space<vmem>>, vector<1x1x32xf32>
    %484 = vector.shape_cast %483 : vector<1x1x32xf32> to vector<1x32xf32>
    %485 = vector.broadcast %484 : vector<1x32xf32> to vector<16x32xf32>
    %486 = arith.addf %482, %485 : vector<16x32xf32>
    %487 = arith.addf %486, %297 : vector<16x32xf32>
    %c1_344 = arith.constant 1 : index
    %c0_345 = arith.constant 0 : index
    %c0_346 = arith.constant 0 : index
    %488 = vector.load %arg12[%c1_344, %c0_345, %c0_346] : memref<2x1x32xf32, #tpu.memory_space<vmem>>, vector<1x1x32xf32>
    %489 = vector.shape_cast %488 : vector<1x1x32xf32> to vector<1x32xf32>
    %c1_347 = arith.constant 1 : index
    %c0_348 = arith.constant 0 : index
    %c0_349 = arith.constant 0 : index
    %490 = vector.load %arg13[%c1_347, %c0_348, %c0_349] : memref<2x1x32xf32, #tpu.memory_space<vmem>>, vector<1x1x32xf32>
    %491 = vector.shape_cast %490 : vector<1x1x32xf32> to vector<1x32xf32>
    %cst_350 = arith.constant dense<0.000000e+00> : vector<16xf32>
    %492 = vector.multi_reduction <add>, %487, %cst_350 [1] : vector<16x32xf32> to vector<16xf32>
    %493 = vector.shape_cast %492 : vector<16xf32> to vector<16x1xf32>
    %cst_351 = arith.constant 3.200000e+01 : f32
    %494 = vector.broadcast %cst_351 : f32 to vector<16x1xf32>
    %495 = arith.divf %493, %494 : vector<16x1xf32>
    %496 = vector.broadcast %495 : vector<16x1xf32> to vector<16x32xf32>
    %497 = arith.subf %487, %496 : vector<16x32xf32>
    %498 = arith.mulf %497, %497 : vector<16x32xf32>
    %cst_352 = arith.constant dense<0.000000e+00> : vector<16xf32>
    %499 = vector.multi_reduction <add>, %498, %cst_352 [1] : vector<16x32xf32> to vector<16xf32>
    %500 = vector.shape_cast %499 : vector<16xf32> to vector<16x1xf32>
    %cst_353 = arith.constant 3.200000e+01 : f32
    %501 = vector.broadcast %cst_353 : f32 to vector<16x1xf32>
    %502 = arith.divf %500, %501 : vector<16x1xf32>
    %503 = vector.broadcast %495 : vector<16x1xf32> to vector<16x32xf32>
    %504 = arith.subf %487, %503 : vector<16x32xf32>
    %cst_354 = arith.constant 9.99999996E-13 : f32
    %505 = vector.broadcast %cst_354 : f32 to vector<16x1xf32>
    %506 = arith.addf %502, %505 : vector<16x1xf32>
    %507 = math.rsqrt %506 : vector<16x1xf32>
    %508 = vector.broadcast %507 : vector<16x1xf32> to vector<16x32xf32>
    %509 = arith.mulf %504, %508 : vector<16x32xf32>
    %510 = vector.broadcast %489 : vector<1x32xf32> to vector<16x32xf32>
    %511 = arith.mulf %509, %510 : vector<16x32xf32>
    %512 = vector.broadcast %491 : vector<1x32xf32> to vector<16x32xf32>
    %513 = arith.addf %511, %512 : vector<16x32xf32>
    %c1_355 = arith.constant 1 : index
    %c0_356 = arith.constant 0 : index
    %c0_357 = arith.constant 0 : index
    %514 = vector.load %arg14[%c1_355, %c0_356, %c0_357] : memref<2x32x64xbf16, #tpu.memory_space<vmem>>, vector<1x32x64xbf16>
    %515 = vector.shape_cast %514 : vector<1x32x64xbf16> to vector<32x64xbf16>
    %516 = arith.truncf %513 : vector<16x32xf32> to vector<16x32xbf16>
    %cst_358 = arith.constant dense<0.000000e+00> : vector<16x64xf32>
    %517 = tpu.matmul %516, %515, %cst_358 {dimension_numbers = #tpu.dot_dimension_numbers<[1], [0], [0], [1], [0, 0, 1, 1], [], []>} : vector<16x32xbf16>, vector<32x64xbf16>, vector<16x64xf32> -> vector<16x64xf32>
    %c1_359 = arith.constant 1 : index
    %c0_360 = arith.constant 0 : index
    %c0_361 = arith.constant 0 : index
    %518 = vector.load %arg15[%c1_359, %c0_360, %c0_361] : memref<2x1x64xf32, #tpu.memory_space<vmem>>, vector<1x1x64xf32>
    %519 = vector.shape_cast %518 : vector<1x1x64xf32> to vector<1x64xf32>
    %520 = vector.broadcast %519 : vector<1x64xf32> to vector<16x64xf32>
    %521 = arith.addf %517, %520 : vector<16x64xf32>
    %cst_362 = arith.constant 5.000000e-01 : f32
    %522 = vector.broadcast %cst_362 : f32 to vector<16x64xf32>
    %523 = arith.mulf %522, %521 : vector<16x64xf32>
    %cst_363 = arith.constant 4.471500e-02 : f32
    %524 = vector.broadcast %cst_363 : f32 to vector<16x64xf32>
    %525 = arith.mulf %524, %521 : vector<16x64xf32>
    %526 = arith.mulf %525, %521 : vector<16x64xf32>
    %527 = arith.mulf %526, %521 : vector<16x64xf32>
    %528 = arith.addf %521, %527 : vector<16x64xf32>
    %cst_364 = arith.constant 0.797884583 : f32
    %529 = vector.broadcast %cst_364 : f32 to vector<16x64xf32>
    %530 = arith.mulf %529, %528 : vector<16x64xf32>
    %531 = math.tanh %530 : vector<16x64xf32>
    %cst_365 = arith.constant 1.000000e+00 : f32
    %532 = vector.broadcast %cst_365 : f32 to vector<16x64xf32>
    %533 = arith.addf %532, %531 : vector<16x64xf32>
    %534 = arith.mulf %523, %533 : vector<16x64xf32>
    %c1_366 = arith.constant 1 : index
    %c0_367 = arith.constant 0 : index
    %c0_368 = arith.constant 0 : index
    %535 = vector.load %arg16[%c1_366, %c0_367, %c0_368] : memref<2x64x32xbf16, #tpu.memory_space<vmem>>, vector<1x64x32xbf16>
    %536 = vector.shape_cast %535 : vector<1x64x32xbf16> to vector<64x32xbf16>
    %537 = arith.truncf %534 : vector<16x64xf32> to vector<16x64xbf16>
    %cst_369 = arith.constant dense<0.000000e+00> : vector<16x32xf32>
    %538 = tpu.matmul %537, %536, %cst_369 {dimension_numbers = #tpu.dot_dimension_numbers<[1], [0], [0], [1], [0, 0, 1, 1], [], []>} : vector<16x64xbf16>, vector<64x32xbf16>, vector<16x32xf32> -> vector<16x32xf32>
    %c1_370 = arith.constant 1 : index
    %c0_371 = arith.constant 0 : index
    %c0_372 = arith.constant 0 : index
    %539 = vector.load %arg17[%c1_370, %c0_371, %c0_372] : memref<2x1x32xf32, #tpu.memory_space<vmem>>, vector<1x1x32xf32>
    %540 = vector.shape_cast %539 : vector<1x1x32xf32> to vector<1x32xf32>
    %541 = vector.broadcast %540 : vector<1x32xf32> to vector<16x32xf32>
    %542 = arith.addf %538, %541 : vector<16x32xf32>
    %543 = arith.addf %542, %513 : vector<16x32xf32>
    %c1_373 = arith.constant 1 : index
    %c0_374 = arith.constant 0 : index
    %c0_375 = arith.constant 0 : index
    %544 = vector.load %arg18[%c1_373, %c0_374, %c0_375] : memref<2x1x32xf32, #tpu.memory_space<vmem>>, vector<1x1x32xf32>
    %545 = vector.shape_cast %544 : vector<1x1x32xf32> to vector<1x32xf32>
    %c1_376 = arith.constant 1 : index
    %c0_377 = arith.constant 0 : index
    %c0_378 = arith.constant 0 : index
    %546 = vector.load %arg19[%c1_376, %c0_377, %c0_378] : memref<2x1x32xf32, #tpu.memory_space<vmem>>, vector<1x1x32xf32>
    %547 = vector.shape_cast %546 : vector<1x1x32xf32> to vector<1x32xf32>
    %cst_379 = arith.constant dense<0.000000e+00> : vector<16xf32>
    %548 = vector.multi_reduction <add>, %543, %cst_379 [1] : vector<16x32xf32> to vector<16xf32>
    %549 = vector.shape_cast %548 : vector<16xf32> to vector<16x1xf32>
    %cst_380 = arith.constant 3.200000e+01 : f32
    %550 = vector.broadcast %cst_380 : f32 to vector<16x1xf32>
    %551 = arith.divf %549, %550 : vector<16x1xf32>
    %552 = vector.broadcast %551 : vector<16x1xf32> to vector<16x32xf32>
    %553 = arith.subf %543, %552 : vector<16x32xf32>
    %554 = arith.mulf %553, %553 : vector<16x32xf32>
    %cst_381 = arith.constant dense<0.000000e+00> : vector<16xf32>
    %555 = vector.multi_reduction <add>, %554, %cst_381 [1] : vector<16x32xf32> to vector<16xf32>
    %556 = vector.shape_cast %555 : vector<16xf32> to vector<16x1xf32>
    %cst_382 = arith.constant 3.200000e+01 : f32
    %557 = vector.broadcast %cst_382 : f32 to vector<16x1xf32>
    %558 = arith.divf %556, %557 : vector<16x1xf32>
    %559 = vector.broadcast %551 : vector<16x1xf32> to vector<16x32xf32>
    %560 = arith.subf %543, %559 : vector<16x32xf32>
    %cst_383 = arith.constant 9.99999996E-13 : f32
    %561 = vector.broadcast %cst_383 : f32 to vector<16x1xf32>
    %562 = arith.addf %558, %561 : vector<16x1xf32>
    %563 = math.rsqrt %562 : vector<16x1xf32>
    %564 = vector.broadcast %563 : vector<16x1xf32> to vector<16x32xf32>
    %565 = arith.mulf %560, %564 : vector<16x32xf32>
    %566 = vector.broadcast %545 : vector<1x32xf32> to vector<16x32xf32>
    %567 = arith.mulf %565, %566 : vector<16x32xf32>
    %568 = vector.broadcast %547 : vector<1x32xf32> to vector<16x32xf32>
    %569 = arith.addf %567, %568 : vector<16x32xf32>
    %570 = tpu.iota {dimensions = array<i32: 0>} : vector<2x16xi32>
    %571 = tpu.iota {dimensions = array<i32: 1>} : vector<2x16xi32>
    %c8_i32 = arith.constant 8 : i32
    %572 = vector.broadcast %c8_i32 : i32 to vector<2x16xi32>
    %573 = arith.muli %570, %572 : vector<2x16xi32>
    %574 = arith.cmpi eq, %571, %573 : vector<2x16xi32>
    %575 = arith.extui %574 : vector<2x16xi1> to vector<2x16xi32>
    %576 = arith.sitofp %575 : vector<2x16xi32> to vector<2x16xf32>
    %cst_384 = arith.constant dense<0.000000e+00> : vector<2x32xf32>
    %577 = tpu.matmul %576, %569, %cst_384 {dimension_numbers = #tpu.dot_dimension_numbers<[1], [0], [0], [1], [0, 0, 1, 1], [], []>} : vector<2x16xf32>, vector<16x32xf32>, vector<2x32xf32> -> vector<2x32xf32>
    %c0_385 = arith.constant 0 : index
    %c0_386 = arith.constant 0 : index
    %578 = vector.load %arg20[%c0_385, %c0_386] : memref<32x32xbf16, #tpu.memory_space<vmem>>, vector<32x32xbf16>
    %579 = arith.truncf %577 : vector<2x32xf32> to vector<2x32xbf16>
    %cst_387 = arith.constant dense<0.000000e+00> : vector<2x32xf32>
    %580 = tpu.matmul %579, %578, %cst_387 {dimension_numbers = #tpu.dot_dimension_numbers<[1], [0], [0], [1], [0, 0, 1, 1], [], []>} : vector<2x32xbf16>, vector<32x32xbf16>, vector<2x32xf32> -> vector<2x32xf32>
    %c0_388 = arith.constant 0 : index
    %c0_389 = arith.constant 0 : index
    %581 = vector.load %arg21[%c0_388, %c0_389] : memref<1x32xf32, #tpu.memory_space<vmem>>, vector<1x32xf32>
    %582 = vector.broadcast %581 : vector<1x32xf32> to vector<2x32xf32>
    %583 = arith.addf %580, %582 : vector<2x32xf32>
    %584 = math.tanh %583 : vector<2x32xf32>
    %c0_390 = arith.constant 0 : index
    %c0_391 = arith.constant 0 : index
    %585 = vector.load %arg22[%c0_390, %c0_391] : memref<32x128xbf16, #tpu.memory_space<vmem>>, vector<32x128xbf16>
    %586 = arith.truncf %584 : vector<2x32xf32> to vector<2x32xbf16>
    %cst_392 = arith.constant dense<0.000000e+00> : vector<2x128xf32>
    %587 = tpu.matmul %586, %585, %cst_392 {dimension_numbers = #tpu.dot_dimension_numbers<[1], [0], [0], [1], [0, 0, 1, 1], [], []>} : vector<2x32xbf16>, vector<32x128xbf16>, vector<2x128xf32> -> vector<2x128xf32>
    %c0_393 = arith.constant 0 : index
    %c0_394 = arith.constant 0 : index
    %588 = vector.load %arg23[%c0_393, %c0_394] : memref<1x128xf32, #tpu.memory_space<vmem>>, vector<1x128xf32>
    %589 = vector.broadcast %588 : vector<1x128xf32> to vector<2x128xf32>
    %590 = arith.addf %587, %589 : vector<2x128xf32>
    %c0_395 = arith.constant 0 : index
    %c0_396 = arith.constant 0 : index
    %591 = vector.load %arg24[%c0_395, %c0_396] : memref<2x128xf32, #tpu.memory_space<vmem>>, vector<2x128xf32>
    tpu.vector_store %arg24[%c0_395, %c0_396], %590 {strides = array<i32>} : memref<2x128xf32, #tpu.memory_space<vmem>>, vector<2x128xf32>,
    return
  }
}

</mosaic_0001>

<llo_original>
// kernel: emotion_classifier_forward.1
$region0: #{emotion_classifier_forward.1}
  #allocation0 [shape = 'u32[]', space=smem, size = 0x4, offset = 0x4, fixed_abs, tag = 'smem constant byte address 0x4 - core index']
  #allocation1 [shape = 'u32[144,128]{1,0:T(1,128)}', space=vmem, size = 0x12000, scoped, tag = 'internal scratch']
  %s0 = inlined_call_operand.vmem [shape: f32[16,32], index: 0, kind: input, shape index: {}]
  %s1 = inlined_call_operand.vmem [shape: f32[16,16], index: 1, kind: input, shape index: {}]
  %s2 = inlined_call_operand.vmem [shape: f32[1,32], index: 2, kind: input, shape index: {}]
  %s3 = inlined_call_operand.vmem [shape: f32[1,32], index: 3, kind: input, shape index: {}]
  %s4 = inlined_call_operand.vmem [shape: bf16[2,4,32,8], index: 4, kind: input, shape index: {}]
  %s5 = inlined_call_operand.vmem [shape: f32[2,4,1,8], index: 5, kind: input, shape index: {}]
  %s6 = inlined_call_operand.vmem [shape: bf16[2,4,32,8], index: 6, kind: input, shape index: {}]
  %s7 = inlined_call_operand.vmem [shape: f32[2,4,1,8], index: 7, kind: input, shape index: {}]
  %s8 = inlined_call_operand.vmem [shape: bf16[2,4,32,8], index: 8, kind: input, shape index: {}]
  %s9 = inlined_call_operand.vmem [shape: f32[2,4,1,8], index: 9, kind: input, shape index: {}]
  %s10 = inlined_call_operand.vmem [shape: bf16[2,4,8,32], index: 10, kind: input, shape index: {}]
  %s11 = inlined_call_operand.vmem [shape: f32[2,1,32], index: 11, kind: input, shape index: {}]
  %s12 = inlined_call_operand.vmem [shape: f32[2,1,32], index: 12, kind: input, shape index: {}]
  %s13 = inlined_call_operand.vmem [shape: f32[2,1,32], index: 13, kind: input, shape index: {}]
  %s14 = inlined_call_operand.vmem [shape: bf16[2,32,64], index: 14, kind: input, shape index: {}]
  %s15 = inlined_call_operand.vmem [shape: f32[2,1,64], index: 15, kind: input, shape index: {}]
  %s16 = inlined_call_operand.vmem [shape: bf16[2,64,32], index: 16, kind: input, shape index: {}]
  %s17 = inlined_call_operand.vmem [shape: f32[2,1,32], index: 17, kind: input, shape index: {}]
  %s18 = inlined_call_operand.vmem [shape: f32[2,1,32], index: 18, kind: input, shape index: {}]
  %s19 = inlined_call_operand.vmem [shape: f32[2,1,32], index: 19, kind: input, shape index: {}]
  %s20 = inlined_call_operand.vmem [shape: bf16[32,32], index: 20, kind: input, shape index: {}]
  %s21 = inlined_call_operand.vmem [shape: f32[1,32], index: 21, kind: input, shape index: {}]
  %s22 = inlined_call_operand.vmem [shape: bf16[32,128], index: 22, kind: input, shape index: {}]
  %s23 = inlined_call_operand.vmem [shape: f32[1,128], index: 23, kind: input, shape index: {}]
  %s24 = inlined_call_operand.hbm [shape: f32[2,128], index: 24, kind: output, shape index: {}]
  %s25 = sld [smem:[#allocation0]]
  $region106: #{emotion_classifier_forward.1} parent=0
    _
  %s27 = ssub.s32 1, %s25
  %s28 = scalar_select 0, %s27, %s25
  $region1: #{emotion_classifier_forward.1} parent=0
    #allocation2 [shape = 'u8[1024]{0}', space=vmem, size = 0x400, scoped, tag = 'output window, operand 0, single buffered']
    #allocation3 [shape = 's32[1]{0}', space=sflag, size = 0x4, scoped, tag = 'scoped memory for emotion_classifier_forward.1']
    %29 = vsyncpa [#allocation3], 0
    // Predicated region
    $region2: #{emotion_classifier_forward.1} parent=1 // pred_check
      _
    $region3: #{emotion_classifier_forward.1} parent=1 // pred_check_branch
      %31 = sbr.rel (0) target = $region5
    $region4: #{emotion_classifier_forward.1} parent=1 // pred_region
      _
    $region5: #{emotion_classifier_forward.1} parent=1 // pred_fallthru
      _
    // Predicated region
    $region6: #{emotion_classifier_forward.1} parent=1 // pred_check
      _
    $region7: #{emotion_classifier_forward.1} parent=1 // pred_check_branch
      %33 = sbr.rel (0) target = $region9
    $region8: #{emotion_classifier_forward.1} parent=1 // pred_region
      _
    $region9: #{emotion_classifier_forward.1} parent=1 // pred_fallthru
      _
    // Predicated region
    $region10: #{emotion_classifier_forward.1} parent=1 // pred_check
      _
    $region11: #{emotion_classifier_forward.1} parent=1 // pred_check_branch
      %35 = sbr.rel (0) target = $region13
    $region12: #{emotion_classifier_forward.1} parent=1 // pred_region
      _
    $region13: #{emotion_classifier_forward.1} parent=1 // pred_fallthru
      _
    // Predicated region
    $region14: #{emotion_classifier_forward.1} parent=1 // pred_check
      _
    $region15: #{emotion_classifier_forward.1} parent=1 // pred_check_branch
      %37 = sbr.rel (0) target = $region17
    $region16: #{emotion_classifier_forward.1} parent=1 // pred_region
      _
    $region17: #{emotion_classifier_forward.1} parent=1 // pred_fallthru
      _
    // Predicated region
    $region18: #{emotion_classifier_forward.1} parent=1 // pred_check
      _
    $region19: #{emotion_classifier_forward.1} parent=1 // pred_check_branch
      %39 = sbr.rel (0) target = $region21
    $region20: #{emotion_classifier_forward.1} parent=1 // pred_region
      _
    $region21: #{emotion_classifier_forward.1} parent=1 // pred_fallthru
      _
    // Predicated region
    $region22: #{emotion_classifier_forward.1} parent=1 // pred_check
      _
    $region23: #{emotion_classifier_forward.1} parent=1 // pred_check_branch
      %41 = sbr.rel (0) target = $region25
    $region24: #{emotion_classifier_forward.1} parent=1 // pred_region
      _
    $region25: #{emotion_classifier_forward.1} parent=1 // pred_fallthru
      _
    // Predicated region
    $region26: #{emotion_classifier_forward.1} parent=1 // pred_check
      _
    $region27: #{emotion_classifier_forward.1} parent=1 // pred_check_branch
      %43 = sbr.rel (0) target = $region29
    $region28: #{emotion_classifier_forward.1} parent=1 // pred_region
      _
    $region29: #{emotion_classifier_forward.1} parent=1 // pred_fallthru
      _
    // Predicated region
    $region30: #{emotion_classifier_forward.1} parent=1 // pred_check
      _
    $region31: #{emotion_classifier_forward.1} parent=1 // pred_check_branch
      %45 = sbr.rel (0) target = $region33
    $region32: #{emotion_classifier_forward.1} parent=1 // pred_region
      _
    $region33: #{emotion_classifier_forward.1} parent=1 // pred_fallthru
      _
    // Predicated region
    $region34: #{emotion_classifier_forward.1} parent=1 // pred_check
      _
    $region35: #{emotion_classifier_forward.1} parent=1 // pred_check_branch
      %47 = sbr.rel (0) target = $region37
    $region36: #{emotion_classifier_forward.1} parent=1 // pred_region
      _
    $region37: #{emotion_classifier_forward.1} parent=1 // pred_fallthru
      _
    // Predicated region
    $region38: #{emotion_classifier_forward.1} parent=1 // pred_check
      _
    $region39: #{emotion_classifier_forward.1} parent=1 // pred_check_branch
      %49 = sbr.rel (0) target = $region41
    $region40: #{emotion_classifier_forward.1} parent=1 // pred_region
      _
    $region41: #{emotion_classifier_forward.1} parent=1 // pred_fallthru
      _
    // Predicated region
    $region42: #{emotion_classifier_forward.1} parent=1 // pred_check
      _
    $region43: #{emotion_classifier_forward.1} parent=1 // pred_check_branch
      %51 = sbr.rel (0) target = $region45
    $region44: #{emotion_classifier_forward.1} parent=1 // pred_region
      _
    $region45: #{emotion_classifier_forward.1} parent=1 // pred_fallthru
      _
    // Predicated region
    $region46: #{emotion_classifier_forward.1} parent=1 // pred_check
      _
    $region47: #{emotion_classifier_forward.1} parent=1 // pred_check_branch
      %53 = sbr.rel (0) target = $region49
    $region48: #{emotion_classifier_forward.1} parent=1 // pred_region
      _
    $region49: #{emotion_classifier_forward.1} parent=1 // pred_fallthru
      _
    // Predicated region
    $region50: #{emotion_classifier_forward.1} parent=1 // pred_check
      _
    $region51: #{emotion_classifier_forward.1} parent=1 // pred_check_branch
      %55 = sbr.rel (0) target = $region53
    $region52: #{emotion_classifier_forward.1} parent=1 // pred_region
      _
    $region53: #{emotion_classifier_forward.1} parent=1 // pred_fallthru
      _
    // Predicated region
    $region54: #{emotion_classifier_forward.1} parent=1 // pred_check
      _
    $region55: #{emotion_classifier_forward.1} parent=1 // pred_check_branch
      %57 = sbr.rel (0) target = $region57
    $region56: #{emotion_classifier_forward.1} parent=1 // pred_region
      _
    $region57: #{emotion_classifier_forward.1} parent=1 // pred_fallthru
      _
    // Predicated region
    $region58: #{emotion_classifier_forward.1} parent=1 // pred_check
      _
    $region59: #{emotion_classifier_forward.1} parent=1 // pred_check_branch
      %59 = sbr.rel (0) target = $region61
    $region60: #{emotion_classifier_forward.1} parent=1 // pred_region
      _
    $region61: #{emotion_classifier_forward.1} parent=1 // pred_fallthru
      _
    // Predicated region
    $region62: #{emotion_classifier_forward.1} parent=1 // pred_check
      _
    $region63: #{emotion_classifier_forward.1} parent=1 // pred_check_branch
      %61 = sbr.rel (0) target = $region65
    $region64: #{emotion_classifier_forward.1} parent=1 // pred_region
      _
    $region65: #{emotion_classifier_forward.1} parent=1 // pred_fallthru
      _
    // Predicated region
    $region66: #{emotion_classifier_forward.1} parent=1 // pred_check
      _
    $region67: #{emotion_classifier_forward.1} parent=1 // pred_check_branch
      %63 = sbr.rel (0) target = $region69
    $region68: #{emotion_classifier_forward.1} parent=1 // pred_region
      _
    $region69: #{emotion_classifier_forward.1} parent=1 // pred_fallthru
      _
    // Predicated region
    $region70: #{emotion_classifier_forward.1} parent=1 // pred_check
      _
    $region71: #{emotion_classifier_forward.1} parent=1 // pred_check_branch
      %65 = sbr.rel (0) target = $region73
    $region72: #{emotion_classifier_forward.1} parent=1 // pred_region
      _
    $region73: #{emotion_classifier_forward.1} parent=1 // pred_fallthru
      _
    // Predicated region
    $region74: #{emotion_classifier_forward.1} parent=1 // pred_check
      _
    $region75: #{emotion_classifier_forward.1} parent=1 // pred_check_branch
      %67 = sbr.rel (0) target = $region77
    $region76: #{emotion_classifier_forward.1} parent=1 // pred_region
      _
    $region77: #{emotion_classifier_forward.1} parent=1 // pred_fallthru
      _
    // Predicated region
    $region78: #{emotion_classifier_forward.1} parent=1 // pred_check
      _
    $region79: #{emotion_classifier_forward.1} parent=1 // pred_check_branch
      %69 = sbr.rel (0) target = $region81
    $region80: #{emotion_classifier_forward.1} parent=1 // pred_region
      _
    $region81: #{emotion_classifier_forward.1} parent=1 // pred_fallthru
      _
    // Predicated region
    $region82: #{emotion_classifier_forward.1} parent=1 // pred_check
      _
    $region83: #{emotion_classifier_forward.1} parent=1 // pred_check_branch
      %71 = sbr.rel (0) target = $region85
    $region84: #{emotion_classifier_forward.1} parent=1 // pred_region
      _
    $region85: #{emotion_classifier_forward.1} parent=1 // pred_fallthru
      _
    // Predicated region
    $region86: #{emotion_classifier_forward.1} parent=1 // pred_check
      _
    $region87: #{emotion_classifier_forward.1} parent=1 // pred_check_branch
      %73 = sbr.rel (0) target = $region89
    $region88: #{emotion_classifier_forward.1} parent=1 // pred_region
      _
    $region89: #{emotion_classifier_forward.1} parent=1 // pred_fallthru
      _
    // Predicated region
    $region90: #{emotion_classifier_forward.1} parent=1 // pred_check
      _
    $region91: #{emotion_classifier_forward.1} parent=1 // pred_check_branch
      %75 = sbr.rel (0) target = $region93
    $region92: #{emotion_classifier_forward.1} parent=1 // pred_region
      _
    $region93: #{emotion_classifier_forward.1} parent=1 // pred_fallthru
      _
    // Predicated region
    $region94: #{emotion_classifier_forward.1} parent=1 // pred_check
      _
    $region95: #{emotion_classifier_forward.1} parent=1 // pred_check_branch
      %77 = sbr.rel (0) target = $region97
    $region96: #{emotion_classifier_forward.1} parent=1 // pred_region
      _
    $region97: #{emotion_classifier_forward.1} parent=1 // pred_fallthru
      _
    %v79 = vld [vmem:[%s0] sm:$0xff]
    %v80 = vld [vmem:[%s0 + $0x8] sm:$0xff]
    %v81 = vld [vmem:[%s2] sm:$0x1]
    %v82 = vld [vmem:[%s3] sm:$0x1]
    %vm83 = vcmask 261120
    %v84 = vsel %vm83, %v79, 0.0
    %85 = vadd.xlane.f32.xlu0 %v84
    %v86 = vpop.xlane.xlu0 %85
    %v87 = vsel %vm83, %v80, 0.0
    %88 = vadd.xlane.f32.xlu0 %v87
    %v89 = vpop.xlane.xlu0 %88
    %v90 = vrcp.pop 32.0
    %v91 = vmul.f32 %v86, %v90
    %v92 = vmul.f32 %v89, %v90
    %v93 = vsub.f32 %v79, %v91
    %v94 = vsub.f32 %v80, %v92
    %v95 = vmul.f32 %v93, %v93
    %v96 = vmul.f32 %v94, %v94
    %v97 = vsel %vm83, %v95, 0.0
    %98 = vadd.xlane.f32.xlu0 %v97
    %v99 = vpop.xlane.xlu0 %98
    %v100 = vsel %vm83, %v96, 0.0
    %101 = vadd.xlane.f32.xlu0 %v100
    %v102 = vpop.xlane.xlu0 %101
    %v103 = vmul.f32 %v99, %v90
    %v104 = vmul.f32 %v102, %v90
    %v105 = vadd.f32 %v103, 1e-12
    %v106 = vadd.f32 %v104, 1e-12
    %v107 = vrsqrt.pop %v105
    %v108 = vrsqrt.pop %v106
    %v109 = vmul.f32 %v93, %v107
    %v110 = vmul.f32 %v94, %v108
    %v112 = vlaneseq
    %v113 = vshrl.u32 %v112, 7
    %v114 = vsub.s32 0, %v113
    %v115 = vrot.slane %v81, %v114
    %v117 = vmul.f32 %v109, %v115
    %v118 = vmul.f32 %v110, %v115
    %v120 = vlaneseq
    %v121 = vshrl.u32 %v120, 7
    %v122 = vsub.s32 0, %v121
    %v123 = vrot.slane %v82, %v122
    %v125 = vadd.f32 %v117, %v123
    %v126 = vadd.f32 %v118, %v123
    %v127 = vld [vmem:[%s1] sm:$0xff]
    %v128 = vld [vmem:[%s1 + $0x8] sm:$0xff]
    %v129 = vld [vmem:[%s4] sm:$0xf]
    %v130 = vld [vmem:[%s4 + $0x4] sm:$0xf]
    %v131 = vld [vmem:[%s4 + $0x8] sm:$0xf]
    %v132 = vld [vmem:[%s4 + $0xc] sm:$0xf]
    %v133 = vpack.c.bf16 %v126, %v125
    %v134 = vld [vmem:[%s5] sm:$0x1]
    %v136 = vlaneseq
    %v137 = vshrl.u32 %v136, 7
    %v138 = vsub.s32 0, %v137
    %v139 = vrot.slane %v134, %v138
    %v145 = vunpack.c.l.b16 %v129
    %v146 = vunpack.c.l.b16 %v130
    %v147 = vunpack.c.l.b16 %v131
    %v148 = vunpack.c.l.b16 %v132
    %v149 = vpack.c.b16 %v146, %v145
    %v150 = vpack.c.b16 %v148, %v147
    %v154 = vsel %vm83, %v133, 0
    %156 = vmatprep.subr.bf16.mxu0 0
    %157 = vmatpush1.bf16.msra.mxu0 %v149
    %158 = vmatprep.subr.bf16.mxu0 0
    %159 = vmatpush1.bf16.msra.mxu0 %v150
    %160 = vmatprep.subr.bf16.mxu0 0
    %161 = vmatpush1.bf16.msra.mxu0 0
    %162 = vmatprep.subr.bf16.mxu0 0
    %163 = vmatpush1.bf16.msra.mxu0 0
    %164 = vmatprep.subr.bf16.mxu0 0
    %165 = vmatpush1.bf16.msra.mxu0 0
    %166 = vmatprep.subr.bf16.mxu0 0
    %167 = vmatpush1.bf16.msra.mxu0 0
    %168 = vmatprep.subr.bf16.mxu0 0
    %169 = vmatpush1.bf16.msra.mxu0 0
    %170 = vmatprep.subr.bf16.mxu0 0
    %171 = vmatpush1.bf16.msra.mxu0 0
    %172 = vmatprep.subr.bf16.mxu0 0
    %173 = vmatpush1.bf16.msra.mxu0 0
    %174 = vmatprep.subr.bf16.mxu0 0
    %175 = vmatpush1.bf16.msra.mxu0 0
    %176 = vmatprep.subr.bf16.mxu0 0
    %177 = vmatpush1.bf16.msra.mxu0 0
    %178 = vmatprep.subr.bf16.mxu0 0
    %179 = vmatpush1.bf16.msra.mxu0 0
    %180 = vmatprep.subr.bf16.mxu0 0
    %181 = vmatpush1.bf16.msra.mxu0 0
    %182 = vmatprep.subr.bf16.mxu0 0
    %183 = vmatpush1.bf16.msra.mxu0 0
    %184 = vmatprep.subr.bf16.mxu0 0
    %185 = vmatpush1.bf16.msra.mxu0 0
    %186 = vmatprep.subr.bf16.mxu0 0
    %187 = vmatpush1.bf16.msra.mxu0 0
    %188 = vmatprep.mubr.bf16.mxu0 0
    %189 = vmatmul.mubr.bf16.gmra.mrb[0].mxu0 %v154
    %v190 = vpop.f32.mrb[0].mxu0
    %v191 = vadd.f32 %v139, %v190
    %v192 = vpop.f32.mrb[0].mxu0
    %v193 = vpop.f32.mrb[0].mxu0
    %v194 = vadd.f32 %v139, %v193
    %v195 = vpop.f32.mrb[0].mxu0
    %196 = vdwg.mxu0
    %v197 = vld [vmem:[%s6] sm:$0xf]
    %v198 = vld [vmem:[%s6 + $0x4] sm:$0xf]
    %v199 = vld [vmem:[%s6 + $0x8] sm:$0xf]
    %v200 = vld [vmem:[%s6 + $0xc] sm:$0xf]
    %v201 = vld [vmem:[%s7] sm:$0x1]
    %v203 = vlaneseq
    %v204 = vshrl.u32 %v203, 7
    %v205 = vsub.s32 0, %v204
    %v206 = vrot.slane %v201, %v205
    %v212 = vunpack.c.l.b16 %v197
    %v213 = vunpack.c.l.b16 %v198
    %v214 = vunpack.c.l.b16 %v199
    %v215 = vunpack.c.l.b16 %v200
    %v216 = vpack.c.b16 %v213, %v212
    %v217 = vpack.c.b16 %v215, %v214
    %220 = vmatprep.subr.bf16.mxu0 0
    %221 = vmatpush1.bf16.msra.mxu0 %v216
    %222 = vmatprep.subr.bf16.mxu0 0
    %223 = vmatpush1.bf16.msra.mxu0 %v217
    %224 = vmatprep.subr.bf16.mxu0 0
    %225 = vmatpush1.bf16.msra.mxu0 0
    %226 = vmatprep.subr.bf16.mxu0 0
    %227 = vmatpush1.bf16.msra.mxu0 0
    %228 = vmatprep.subr.bf16.mxu0 0
    %229 = vmatpush1.bf16.msra.mxu0 0
    %230 = vmatprep.subr.bf16.mxu0 0
    %231 = vmatpush1.bf16.msra.mxu0 0
    %232 = vmatprep.subr.bf16.mxu0 0
    %233 = vmatpush1.bf16.msra.mxu0 0
    %234 = vmatprep.subr.bf16.mxu0 0
    %235 = vmatpush1.bf16.msra.mxu0 0
    %236 = vmatprep.subr.bf16.mxu0 0
    %237 = vmatpush1.bf16.msra.mxu0 0
    %238 = vmatprep.subr.bf16.mxu0 0
    %239 = vmatpush1.bf16.msra.mxu0 0
    %240 = vmatprep.subr.bf16.mxu0 0
    %241 = vmatpush1.bf16.msra.mxu0 0
    %242 = vmatprep.subr.bf16.mxu0 0
    %243 = vmatpush1.bf16.msra.mxu0 0
    %244 = vmatprep.subr.bf16.mxu0 0
    %245 = vmatpush1.bf16.msra.mxu0 0
    %246 = vmatprep.subr.bf16.mxu0 0
    %247 = vmatpush1.bf16.msra.mxu0 0
    %248 = vmatprep.subr.bf16.mxu0 0
    %249 = vmatpush1.bf16.msra.mxu0 0
    %250 = vmatprep.subr.bf16.mxu0 0
    %251 = vmatpush1.bf16.msra.mxu0 0
    %252 = vmatprep.mubr.bf16.mxu0 0
    %253 = vmatmul.mubr.bf16.gmra.mrb[0].mxu0 %v154
    %v254 = vpop.f32.mrb[0].mxu0
    %v255 = vadd.f32 %v206, %v254
    %v256 = vpop.f32.mrb[0].mxu0
    %v257 = vpop.f32.mrb[0].mxu0
    %v258 = vadd.f32 %v206, %v257
    %v259 = vpop.f32.mrb[0].mxu0
    %260 = vdwg.mxu0
    %v261 = vld [vmem:[%s8] sm:$0xf]
    %v262 = vld [vmem:[%s8 + $0x4] sm:$0xf]
    %v263 = vld [vmem:[%s8 + $0x8] sm:$0xf]
    %v264 = vld [vmem:[%s8 + $0xc] sm:$0xf]
    %v265 = vld [vmem:[%s9] sm:$0x1]
    %v267 = vlaneseq
    %v268 = vshrl.u32 %v267, 7
    %v269 = vsub.s32 0, %v268
    %v270 = vrot.slane %v265, %v269
    %v276 = vunpack.c.l.b16 %v261
    %v277 = vunpack.c.l.b16 %v262
    %v278 = vunpack.c.l.b16 %v263
    %v279 = vunpack.c.l.b16 %v264
    %v280 = vpack.c.b16 %v277, %v276
    %v281 = vpack.c.b16 %v279, %v278
    %284 = vmatprep.subr.bf16.mxu0 0
    %285 = vmatpush1.bf16.msra.mxu0 %v280
    %286 = vmatprep.subr.bf16.mxu0 0
    %287 = vmatpush1.bf16.msra.mxu0 %v281
    %288 = vmatprep.subr.bf16.mxu0 0
    %289 = vmatpush1.bf16.msra.mxu0 0
    %290 = vmatprep.subr.bf16.mxu0 0
    %291 = vmatpush1.bf16.msra.mxu0 0
    %292 = vmatprep.subr.bf16.mxu0 0
    %293 = vmatpush1.bf16.msra.mxu0 0
    %294 = vmatprep.subr.bf16.mxu0 0
    %295 = vmatpush1.bf16.msra.mxu0 0
    %296 = vmatprep.subr.bf16.mxu0 0
    %297 = vmatpush1.bf16.msra.mxu0 0
    %298 = vmatprep.subr.bf16.mxu0 0
    %299 = vmatpush1.bf16.msra.mxu0 0
    %300 = vmatprep.subr.bf16.mxu0 0
    %301 = vmatpush1.bf16.msra.mxu0 0
    %302 = vmatprep.subr.bf16.mxu0 0
    %303 = vmatpush1.bf16.msra.mxu0 0
    %304 = vmatprep.subr.bf16.mxu0 0
    %305 = vmatpush1.bf16.msra.mxu0 0
    %306 = vmatprep.subr.bf16.mxu0 0
    %307 = vmatpush1.bf16.msra.mxu0 0
    %308 = vmatprep.subr.bf16.mxu0 0
    %309 = vmatpush1.bf16.msra.mxu0 0
    %310 = vmatprep.subr.bf16.mxu0 0
    %311 = vmatpush1.bf16.msra.mxu0 0
    %312 = vmatprep.subr.bf16.mxu0 0
    %313 = vmatpush1.bf16.msra.mxu0 0
    %314 = vmatprep.subr.bf16.mxu0 0
    %315 = vmatpush1.bf16.msra.mxu0 0
    %316 = vmatprep.mubr.bf16.mxu0 0
    %317 = vmatmul.mubr.bf16.gmra.mrb[0].mxu0 %v154
    %v318 = vpop.f32.mrb[0].mxu0
    %v319 = vadd.f32 %v270, %v318
    %v320 = vpop.f32.mrb[0].mxu0
    %v321 = vpop.f32.mrb[0].mxu0
    %v322 = vadd.f32 %v270, %v321
    %v323 = vpop.f32.mrb[0].mxu0
    %324 = vdwg.mxu0
    %v325 = vpack.c.bf16 %v194, %v191
    %v326 = vpack.c.bf16 %v258, %v255
    %vm327 = vcmask 64512
    %v329 = vsel %vm327, %v325, 0
    %v332 = vsel %vm327, %v326, 0
    %334 = vmatprep.subr.bf16.mxu0 0
    %335 = vmatpush1.bf16.xpose.msra.mxu0 %v332
    %336 = vmatprep.subr.bf16.mxu0 0
    %337 = vmatpush1.bf16.xpose.msra.mxu0 0
    %338 = vmatprep.subr.bf16.mxu0 0
    %339 = vmatpush1.bf16.xpose.msra.mxu0 0
    %340 = vmatprep.subr.bf16.mxu0 0
    %341 = vmatpush1.bf16.xpose.msra.mxu0 0
    %342 = vmatprep.subr.bf16.mxu0 0
    %343 = vmatpush1.bf16.xpose.msra.mxu0 0
    %344 = vmatprep.subr.bf16.mxu0 0
    %345 = vmatpush1.bf16.xpose.msra.mxu0 0
    %346 = vmatprep.subr.bf16.mxu0 0
    %347 = vmatpush1.bf16.xpose.msra.mxu0 0
    %348 = vmatprep.subr.bf16.mxu0 0
    %349 = vmatpush1.bf16.xpose.msra.mxu0 0
    %350 = vmatprep.subr.bf16.mxu0 0
    %351 = vmatpush1.bf16.xpose.msra.mxu0 0
    %352 = vmatprep.subr.bf16.mxu0 0
    %353 = vmatpush1.bf16.xpose.msra.mxu0 0
    %354 = vmatprep.subr.bf16.mxu0 0
    %355 = vmatpush1.bf16.xpose.msra.mxu0 0
    %356 = vmatprep.subr.bf16.mxu0 0
    %357 = vmatpush1.bf16.xpose.msra.mxu0 0
    %358 = vmatprep.subr.bf16.mxu0 0
    %359 = vmatpush1.bf16.xpose.msra.mxu0 0
    %360 = vmatprep.subr.bf16.mxu0 0
    %361 = vmatpush1.bf16.xpose.msra.mxu0 0
    %362 = vmatprep.subr.bf16.mxu0 0
    %363 = vmatpush1.bf16.xpose.msra.mxu0 0
    %364 = vmatprep.subr.bf16.mxu0 0
    %365 = vmatpush1.bf16.xpose.msra.mxu0 0
    %366 = vmatprep.mubr.bf16.mxu0 0
    %367 = vmatmul.mubr.bf16.gmra.mrb[0].mxu0 %v329
    %v368 = vpop.f32.mrb[0].mxu0
    %v369 = vadd.f32 %v127, %v368
    %v370 = vpop.f32.mrb[0].mxu0
    %v371 = vpop.f32.mrb[0].mxu0
    %v372 = vadd.f32 %v128, %v371
    %v373 = vpop.f32.mrb[0].mxu0
    %374 = vdwg.mxu0
    %vm375 = vcmask 130048
    %v376 = vsel %vm375, %v369, -inf
    %377 = vmax.xlane.f32.xlu0 %v376
    %v378 = vpop.xlane.xlu0 %377
    %v379 = vsel %vm375, %v372, -inf
    %380 = vmax.xlane.f32.xlu0 %v379
    %v381 = vpop.xlane.xlu0 %380
    %v382 = vsub.f32 %v369, %v378
    %v383 = vsub.f32 %v372, %v381
    %v384 = vmul.f32 %v382, 1.442695
    %v385 = vpow.pop %v384
    %v386 = vmul.f32 %v383, 1.442695
    %v387 = vpow.pop %v386
    %v388 = vsel %vm375, %v385, 0.0
    %389 = vadd.xlane.f32.xlu0 %v388
    %v390 = vpop.xlane.xlu0 %389
    %v391 = vsel %vm375, %v387, 0.0
    %392 = vadd.xlane.f32.xlu0 %v391
    %v393 = vpop.xlane.xlu0 %392
    %v394 = vrcp.pop %v390
    %v395 = vrcp.pop %v393
    %v396 = vmul.f32 %v385, %v394
    %v397 = vmul.f32 %v387, %v395
    %v398 = vpack.c.bf16 %v397, %v396
    %v399 = vpack.c.bf16 %v322, %v319
    %v401 = vsel %vm375, %v398, 0
    %403 = vmatprep.subr.bf16.mxu0 0
    %404 = vmatpush1.bf16.msra.mxu0 %v399
    %405 = vmatprep.subr.bf16.mxu0 0
    %406 = vmatpush1.bf16.msra.mxu0 0
    %407 = vmatprep.subr.bf16.mxu0 0
    %408 = vmatpush1.bf16.msra.mxu0 0
    %409 = vmatprep.subr.bf16.mxu0 0
    %410 = vmatpush1.bf16.msra.mxu0 0
    %411 = vmatprep.subr.bf16.mxu0 0
    %412 = vmatpush1.bf16.msra.mxu0 0
    %413 = vmatprep.subr.bf16.mxu0 0
    %414 = vmatpush1.bf16.msra.mxu0 0
    %415 = vmatprep.subr.bf16.mxu0 0
    %416 = vmatpush1.bf16.msra.mxu0 0
    %417 = vmatprep.subr.bf16.mxu0 0
    %418 = vmatpush1.bf16.msra.mxu0 0
    %419 = vmatprep.subr.bf16.mxu0 0
    %420 = vmatpush1.bf16.msra.mxu0 0
    %421 = vmatprep.subr.bf16.mxu0 0
    %422 = vmatpush1.bf16.msra.mxu0 0
    %423 = vmatprep.subr.bf16.mxu0 0
    %424 = vmatpush1.bf16.msra.mxu0 0
    %425 = vmatprep.subr.bf16.mxu0 0
    %426 = vmatpush1.bf16.msra.mxu0 0
    %427 = vmatprep.subr.bf16.mxu0 0
    %428 = vmatpush1.bf16.msra.mxu0 0
    %429 = vmatprep.subr.bf16.mxu0 0
    %430 = vmatpush1.bf16.msra.mxu0 0
    %431 = vmatprep.subr.bf16.mxu0 0
    %432 = vmatpush1.bf16.msra.mxu0 0
    %433 = vmatprep.subr.bf16.mxu0 0
    %434 = vmatpush1.bf16.msra.mxu0 0
    %435 = vmatprep.mubr.bf16.mxu0 0
    %436 = vmatmul.mubr.bf16.gmra.mrb[0].mxu0 %v401
    %v437 = vpop.f32.mrb[0].mxu0
    %v438 = vadd.f32 0.0, %v437
    %v439 = vpop.f32.mrb[0].mxu0
    %v440 = vpop.f32.mrb[0].mxu0
    %v441 = vadd.f32 0.0, %v440
    %v442 = vpop.f32.mrb[0].mxu0
    %443 = vdwg.mxu0
    %v444 = vld [vmem:[%s10] sm:$0xf]
    %v445 = vpack.c.bf16 %v441, %v438
    %s446 = scalar_lea.vmem %s4, 16
    %v447 = vld [vmem:[%s446] sm:$0xf]
    %v448 = vld [vmem:[%s446 + $0x4] sm:$0xf]
    %v449 = vld [vmem:[%s446 + $0x8] sm:$0xf]
    %v450 = vld [vmem:[%s446 + $0xc] sm:$0xf]
    %s451 = scalar_lea.vmem %s5, 1
    %v452 = vld [vmem:[%s451] sm:$0x1]
    %v454 = vlaneseq
    %v455 = vshrl.u32 %v454, 7
    %v456 = vsub.s32 0, %v455
    %v457 = vrot.slane %v452, %v456
    %v463 = vunpack.c.l.b16 %v447
    %v464 = vunpack.c.l.b16 %v448
    %v465 = vunpack.c.l.b16 %v449
    %v466 = vunpack.c.l.b16 %v450
    %v467 = vpack.c.b16 %v464, %v463
    %v468 = vpack.c.b16 %v466, %v465
    %471 = vmatprep.subr.bf16.mxu0 0
    %472 = vmatpush1.bf16.msra.mxu0 %v467
    %473 = vmatprep.subr.bf16.mxu0 0
    %474 = vmatpush1.bf16.msra.mxu0 %v468
    %475 = vmatprep.subr.bf16.mxu0 0
    %476 = vmatpush1.bf16.msra.mxu0 0
    %477 = vmatprep.subr.bf16.mxu0 0
    %478 = vmatpush1.bf16.msra.mxu0 0
    %479 = vmatprep.subr.bf16.mxu0 0
    %480 = vmatpush1.bf16.msra.mxu0 0
    %481 = vmatprep.subr.bf16.mxu0 0
    %482 = vmatpush1.bf16.msra.mxu0 0
    %483 = vmatprep.subr.bf16.mxu0 0
    %484 = vmatpush1.bf16.msra.mxu0 0
    %485 = vmatprep.subr.bf16.mxu0 0
    %486 = vmatpush1.bf16.msra.mxu0 0
    %487 = vmatprep.subr.bf16.mxu0 0
    %488 = vmatpush1.bf16.msra.mxu0 0
    %489 = vmatprep.subr.bf16.mxu0 0
    %490 = vmatpush1.bf16.msra.mxu0 0
    %491 = vmatprep.subr.bf16.mxu0 0
    %492 = vmatpush1.bf16.msra.mxu0 0
    %493 = vmatprep.subr.bf16.mxu0 0
    %494 = vmatpush1.bf16.msra.mxu0 0
    %495 = vmatprep.subr.bf16.mxu0 0
    %496 = vmatpush1.bf16.msra.mxu0 0
    %497 = vmatprep.subr.bf16.mxu0 0
    %498 = vmatpush1.bf16.msra.mxu0 0
    %499 = vmatprep.subr.bf16.mxu0 0
    %500 = vmatpush1.bf16.msra.mxu0 0
    %501 = vmatprep.subr.bf16.mxu0 0
    %502 = vmatpush1.bf16.msra.mxu0 0
    %503 = vmatprep.mubr.bf16.mxu0 0
    %504 = vmatmul.mubr.bf16.gmra.mrb[0].mxu0 %v154
    %v505 = vpop.f32.mrb[0].mxu0
    %v506 = vadd.f32 %v457, %v505
    %v507 = vpop.f32.mrb[0].mxu0
    %v508 = vpop.f32.mrb[0].mxu0
    %v509 = vadd.f32 %v457, %v508
    %v510 = vpop.f32.mrb[0].mxu0
    %511 = vdwg.mxu0
    %s512 = scalar_lea.vmem %s6, 16
    %v513 = vld [vmem:[%s512] sm:$0xf]
    %v514 = vld [vmem:[%s512 + $0x4] sm:$0xf]
    %v515 = vld [vmem:[%s512 + $0x8] sm:$0xf]
    %v516 = vld [vmem:[%s512 + $0xc] sm:$0xf]
    %s517 = scalar_lea.vmem %s7, 1
    %v518 = vld [vmem:[%s517] sm:$0x1]
    %v520 = vlaneseq
    %v521 = vshrl.u32 %v520, 7
    %v522 = vsub.s32 0, %v521
    %v523 = vrot.slane %v518, %v522
    %v529 = vunpack.c.l.b16 %v513
    %v530 = vunpack.c.l.b16 %v514
    %v531 = vunpack.c.l.b16 %v515
    %v532 = vunpack.c.l.b16 %v516
    %v533 = vpack.c.b16 %v530, %v529
    %v534 = vpack.c.b16 %v532, %v531
    %537 = vmatprep.subr.bf16.mxu0 0
    %538 = vmatpush1.bf16.msra.mxu0 %v533
    %539 = vmatprep.subr.bf16.mxu0 0
    %540 = vmatpush1.bf16.msra.mxu0 %v534
    %541 = vmatprep.subr.bf16.mxu0 0
    %542 = vmatpush1.bf16.msra.mxu0 0
    %543 = vmatprep.subr.bf16.mxu0 0
    %544 = vmatpush1.bf16.msra.mxu0 0
    %545 = vmatprep.subr.bf16.mxu0 0
    %546 = vmatpush1.bf16.msra.mxu0 0
    %547 = vmatprep.subr.bf16.mxu0 0
    %548 = vmatpush1.bf16.msra.mxu0 0
    %549 = vmatprep.subr.bf16.mxu0 0
    %550 = vmatpush1.bf16.msra.mxu0 0
    %551 = vmatprep.subr.bf16.mxu0 0
    %552 = vmatpush1.bf16.msra.mxu0 0
    %553 = vmatprep.subr.bf16.mxu0 0
    %554 = vmatpush1.bf16.msra.mxu0 0
    %555 = vmatprep.subr.bf16.mxu0 0
    %556 = vmatpush1.bf16.msra.mxu0 0
    %557 = vmatprep.subr.bf16.mxu0 0
    %558 = vmatpush1.bf16.msra.mxu0 0
    %559 = vmatprep.subr.bf16.mxu0 0
    %560 = vmatpush1.bf16.msra.mxu0 0
    %561 = vmatprep.subr.bf16.mxu0 0
    %562 = vmatpush1.bf16.msra.mxu0 0
    %563 = vmatprep.subr.bf16.mxu0 0
    %564 = vmatpush1.bf16.msra.mxu0 0
    %565 = vmatprep.subr.bf16.mxu0 0
    %566 = vmatpush1.bf16.msra.mxu0 0
    %567 = vmatprep.subr.bf16.mxu0 0
    %568 = vmatpush1.bf16.msra.mxu0 0
    %569 = vmatprep.mubr.bf16.mxu0 0
    %570 = vmatmul.mubr.bf16.gmra.mrb[0].mxu0 %v154
    %v571 = vpop.f32.mrb[0].mxu0
    %v572 = vadd.f32 %v523, %v571
    %v573 = vpop.f32.mrb[0].mxu0
    %v574 = vpop.f32.mrb[0].mxu0
    %v575 = vadd.f32 %v523, %v574
    %v576 = vpop.f32.mrb[0].mxu0
    %577 = vdwg.mxu0
    %s578 = scalar_lea.vmem %s8, 16
    %v579 = vld [vmem:[%s578] sm:$0xf]
    %v580 = vld [vmem:[%s578 + $0x4] sm:$0xf]
    %v581 = vld [vmem:[%s578 + $0x8] sm:$0xf]
    %v582 = vld [vmem:[%s578 + $0xc] sm:$0xf]
    %s583 = scalar_lea.vmem %s9, 1
    %v584 = vld [vmem:[%s583] sm:$0x1]
    %v586 = vlaneseq
    %v587 = vshrl.u32 %v586, 7
    %v588 = vsub.s32 0, %v587
    %v589 = vrot.slane %v584, %v588
    %v595 = vunpack.c.l.b16 %v579
    %v596 = vunpack.c.l.b16 %v580
    %v597 = vunpack.c.l.b16 %v581
    %v598 = vunpack.c.l.b16 %v582
    %v599 = vpack.c.b16 %v596, %v595
    %v600 = vpack.c.b16 %v598, %v597
    %603 = vmatprep.subr.bf16.mxu0 0
    %604 = vmatpush1.bf16.msra.mxu0 %v599
    %605 = vmatprep.subr.bf16.mxu0 0
    %606 = vmatpush1.bf16.msra.mxu0 %v600
    %607 = vmatprep.subr.bf16.mxu0 0
    %608 = vmatpush1.bf16.msra.mxu0 0
    %609 = vmatprep.subr.bf16.mxu0 0
    %610 = vmatpush1.bf16.msra.mxu0 0
    %611 = vmatprep.subr.bf16.mxu0 0
    %612 = vmatpush1.bf16.msra.mxu0 0
    %613 = vmatprep.subr.bf16.mxu0 0
    %614 = vmatpush1.bf16.msra.mxu0 0
    %615 = vmatprep.subr.bf16.mxu0 0
    %616 = vmatpush1.bf16.msra.mxu0 0
    %617 = vmatprep.subr.bf16.mxu0 0
    %618 = vmatpush1.bf16.msra.mxu0 0
    %619 = vmatprep.subr.bf16.mxu0 0
    %620 = vmatpush1.bf16.msra.mxu0 0
    %621 = vmatprep.subr.bf16.mxu0 0
    %622 = vmatpush1.bf16.msra.mxu0 0
    %623 = vmatprep.subr.bf16.mxu0 0
    %624 = vmatpush1.bf16.msra.mxu0 0
    %625 = vmatprep.subr.bf16.mxu0 0
    %626 = vmatpush1.bf16.msra.mxu0 0
    %627 = vmatprep.subr.bf16.mxu0 0
    %628 = vmatpush1.bf16.msra.mxu0 0
    %629 = vmatprep.subr.bf16.mxu0 0
    %630 = vmatpush1.bf16.msra.mxu0 0
    %631 = vmatprep.subr.bf16.mxu0 0
    %632 = vmatpush1.bf16.msra.mxu0 0
    %633 = vmatprep.subr.bf16.mxu0 0
    %634 = vmatpush1.bf16.msra.mxu0 0
    %635 = vmatprep.mubr.bf16.mxu0 0
    %636 = vmatmul.mubr.bf16.gmra.mrb[0].mxu0 %v154
    %v637 = vpop.f32.mrb[0].mxu0
    %v638 = vadd.f32 %v589, %v637
    %v639 = vpop.f32.mrb[0].mxu0
    %v640 = vpop.f32.mrb[0].mxu0
    %v641 = vadd.f32 %v589, %v640
    %v642 = vpop.f32.mrb[0].mxu0
    %643 = vdwg.mxu0
    %v644 = vpack.c.bf16 %v509, %v506
    %v645 = vpack.c.bf16 %v575, %v572
    %v647 = vsel %vm327, %v644, 0
    %v650 = vsel %vm327, %v645, 0
    %652 = vmatprep.subr.bf16.mxu0 0
    %653 = vmatpush1.bf16.xpose.msra.mxu0 %v650
    %654 = vmatprep.subr.bf16.mxu0 0
    %655 = vmatpush1.bf16.xpose.msra.mxu0 0
    %656 = vmatprep.subr.bf16.mxu0 0
    %657 = vmatpush1.bf16.xpose.msra.mxu0 0
    %658 = vmatprep.subr.bf16.mxu0 0
    %659 = vmatpush1.bf16.xpose.msra.mxu0 0
    %660 = vmatprep.subr.bf16.mxu0 0
    %661 = vmatpush1.bf16.xpose.msra.mxu0 0
    %662 = vmatprep.subr.bf16.mxu0 0
    %663 = vmatpush1.bf16.xpose.msra.mxu0 0
    %664 = vmatprep.subr.bf16.mxu0 0
    %665 = vmatpush1.bf16.xpose.msra.mxu0 0
    %666 = vmatprep.subr.bf16.mxu0 0
    %667 = vmatpush1.bf16.xpose.msra.mxu0 0
    %668 = vmatprep.subr.bf16.mxu0 0
    %669 = vmatpush1.bf16.xpose.msra.mxu0 0
    %670 = vmatprep.subr.bf16.mxu0 0
    %671 = vmatpush1.bf16.xpose.msra.mxu0 0
    %672 = vmatprep.subr.bf16.mxu0 0
    %673 = vmatpush1.bf16.xpose.msra.mxu0 0
    %674 = vmatprep.subr.bf16.mxu0 0
    %675 = vmatpush1.bf16.xpose.msra.mxu0 0
    %676 = vmatprep.subr.bf16.mxu0 0
    %677 = vmatpush1.bf16.xpose.msra.mxu0 0
    %678 = vmatprep.subr.bf16.mxu0 0
    %679 = vmatpush1.bf16.xpose.msra.mxu0 0
    %680 = vmatprep.subr.bf16.mxu0 0
    %681 = vmatpush1.bf16.xpose.msra.mxu0 0
    %682 = vmatprep.subr.bf16.mxu0 0
    %683 = vmatpush1.bf16.xpose.msra.mxu0 0
    %684 = vmatprep.mubr.bf16.mxu0 0
    %685 = vmatmul.mubr.bf16.gmra.mrb[0].mxu0 %v647
    %v686 = vpop.f32.mrb[0].mxu0
    %v687 = vadd.f32 %v127, %v686
    %v688 = vpop.f32.mrb[0].mxu0
    %v689 = vpop.f32.mrb[0].mxu0
    %v690 = vadd.f32 %v128, %v689
    %v691 = vpop.f32.mrb[0].mxu0
    %692 = vdwg.mxu0
    %v693 = vsel %vm375, %v687, -inf
    %694 = vmax.xlane.f32.xlu0 %v693
    %v695 = vpop.xlane.xlu0 %694
    %v696 = vsel %vm375, %v690, -inf
    %697 = vmax.xlane.f32.xlu0 %v696
    %v698 = vpop.xlane.xlu0 %697
    %v699 = vsub.f32 %v687, %v695
    %v700 = vsub.f32 %v690, %v698
    %v701 = vmul.f32 %v699, 1.442695
    %v702 = vpow.pop %v701
    %v703 = vmul.f32 %v700, 1.442695
    %v704 = vpow.pop %v703
    %v705 = vsel %vm375, %v702, 0.0
    %706 = vadd.xlane.f32.xlu0 %v705
    %v707 = vpop.xlane.xlu0 %706
    %v708 = vsel %vm375, %v704, 0.0
    %709 = vadd.xlane.f32.xlu0 %v708
    %v710 = vpop.xlane.xlu0 %709
    %v711 = vrcp.pop %v707
    %v712 = vrcp.pop %v710
    %v713 = vmul.f32 %v702, %v711
    %v714 = vmul.f32 %v704, %v712
    %v715 = vpack.c.bf16 %v714, %v713
    %v716 = vpack.c.bf16 %v641, %v638
    %v718 = vsel %vm375, %v715, 0
    %720 = vmatprep.subr.bf16.mxu0 0
    %721 = vmatpush1.bf16.msra.mxu0 %v716
    %722 = vmatprep.subr.bf16.mxu0 0
    %723 = vmatpush1.bf16.msra.mxu0 0
    %724 = vmatprep.subr.bf16.mxu0 0
    %725 = vmatpush1.bf16.msra.mxu0 0
    %726 = vmatprep.subr.bf16.mxu0 0
    %727 = vmatpush1.bf16.msra.mxu0 0
    %728 = vmatprep.subr.bf16.mxu0 0
    %729 = vmatpush1.bf16.msra.mxu0 0
    %730 = vmatprep.subr.bf16.mxu0 0
    %731 = vmatpush1.bf16.msra.mxu0 0
    %732 = vmatprep.subr.bf16.mxu0 0
    %733 = vmatpush1.bf16.msra.mxu0 0
    %734 = vmatprep.subr.bf16.mxu0 0
    %735 = vmatpush1.bf16.msra.mxu0 0
    %736 = vmatprep.subr.bf16.mxu0 0
    %737 = vmatpush1.bf16.msra.mxu0 0
    %738 = vmatprep.subr.bf16.mxu0 0
    %739 = vmatpush1.bf16.msra.mxu0 0
    %740 = vmatprep.subr.bf16.mxu0 0
    %741 = vmatpush1.bf16.msra.mxu0 0
    %742 = vmatprep.subr.bf16.mxu0 0
    %743 = vmatpush1.bf16.msra.mxu0 0
    %744 = vmatprep.subr.bf16.mxu0 0
    %745 = vmatpush1.bf16.msra.mxu0 0
    %746 = vmatprep.subr.bf16.mxu0 0
    %747 = vmatpush1.bf16.msra.mxu0 0
    %748 = vmatprep.subr.bf16.mxu0 0
    %749 = vmatpush1.bf16.msra.mxu0 0
    %750 = vmatprep.subr.bf16.mxu0 0
    %751 = vmatpush1.bf16.msra.mxu0 0
    %752 = vmatprep.mubr.bf16.mxu0 0
    %753 = vmatmul.mubr.bf16.gmra.mrb[0].mxu0 %v718
    %v754 = vpop.f32.mrb[0].mxu0
    %v755 = vadd.f32 0.0, %v754
    %v756 = vpop.f32.mrb[0].mxu0
    %v757 = vpop.f32.mrb[0].mxu0
    %v758 = vadd.f32 0.0, %v757
    %v759 = vpop.f32.mrb[0].mxu0
    %760 = vdwg.mxu0
    %s761 = scalar_lea.vmem %s10, 4
    %v762 = vld [vmem:[%s761] sm:$0xf]
    %v763 = vpack.c.bf16 %v758, %v755
    %v765 = vsel %vm327, %v763, 0
    %vm767 = vcmask 1043456
    %v769 = vsel %vm767, %v762, 0
    %771 = vmatprep.subr.bf16.mxu0 0
    %772 = vmatpush1.bf16.msra.mxu0 %v769
    %773 = vmatprep.subr.bf16.mxu0 0
    %774 = vmatpush1.bf16.msra.mxu0 0
    %775 = vmatprep.subr.bf16.mxu0 0
    %776 = vmatpush1.bf16.msra.mxu0 0
    %777 = vmatprep.subr.bf16.mxu0 0
    %778 = vmatpush1.bf16.msra.mxu0 0
    %779 = vmatprep.subr.bf16.mxu0 0
    %780 = vmatpush1.bf16.msra.mxu0 0
    %781 = vmatprep.subr.bf16.mxu0 0
    %782 = vmatpush1.bf16.msra.mxu0 0
    %783 = vmatprep.subr.bf16.mxu0 0
    %784 = vmatpush1.bf16.msra.mxu0 0
    %785 = vmatprep.subr.bf16.mxu0 0
    %786 = vmatpush1.bf16.msra.mxu0 0
    %787 = vmatprep.subr.bf16.mxu0 0
    %788 = vmatpush1.bf16.msra.mxu0 0
    %789 = vmatprep.subr.bf16.mxu0 0
    %790 = vmatpush1.bf16.msra.mxu0 0
    %791 = vmatprep.subr.bf16.mxu0 0
    %792 = vmatpush1.bf16.msra.mxu0 0
    %793 = vmatprep.subr.bf16.mxu0 0
    %794 = vmatpush1.bf16.msra.mxu0 0
    %795 = vmatprep.subr.bf16.mxu0 0
    %796 = vmatpush1.bf16.msra.mxu0 0
    %797 = vmatprep.subr.bf16.mxu0 0
    %798 = vmatpush1.bf16.msra.mxu0 0
    %799 = vmatprep.subr.bf16.mxu0 0
    %800 = vmatpush1.bf16.msra.mxu0 0
    %801 = vmatprep.subr.bf16.mxu0 0
    %802 = vmatpush1.bf16.msra.mxu0 0
    %803 = vmatprep.mubr.bf16.mxu0 0
    %804 = vmatmul.mubr.bf16.gmra.mrb[0].mxu0 %v765
    %v805 = vpop.f32.mrb[0].mxu0
    %v806 = vadd.f32 0.0, %v805
    %v807 = vpop.f32.mrb[0].mxu0
    %v808 = vpop.f32.mrb[0].mxu0
    %v809 = vadd.f32 0.0, %v808
    %v810 = vpop.f32.mrb[0].mxu0
    %811 = vdwg.mxu0
    %v813 = vsel %vm327, %v445, 0
    %v816 = vsel %vm767, %v444, 0
    %818 = vmatprep.subr.bf16.mxu0 0
    %819 = vmatpush1.bf16.msra.mxu0 %v816
    %820 = vmatprep.subr.bf16.mxu0 0
    %821 = vmatpush1.bf16.msra.mxu0 0
    %822 = vmatprep.subr.bf16.mxu0 0
    %823 = vmatpush1.bf16.msra.mxu0 0
    %824 = vmatprep.subr.bf16.mxu0 0
    %825 = vmatpush1.bf16.msra.mxu0 0
    %826 = vmatprep.subr.bf16.mxu0 0
    %827 = vmatpush1.bf16.msra.mxu0 0
    %828 = vmatprep.subr.bf16.mxu0 0
    %829 = vmatpush1.bf16.msra.mxu0 0
    %830 = vmatprep.subr.bf16.mxu0 0
    %831 = vmatpush1.bf16.msra.mxu0 0
    %832 = vmatprep.subr.bf16.mxu0 0
    %833 = vmatpush1.bf16.msra.mxu0 0
    %834 = vmatprep.subr.bf16.mxu0 0
    %835 = vmatpush1.bf16.msra.mxu0 0
    %836 = vmatprep.subr.bf16.mxu0 0
    %837 = vmatpush1.bf16.msra.mxu0 0
    %838 = vmatprep.subr.bf16.mxu0 0
    %839 = vmatpush1.bf16.msra.mxu0 0
    %840 = vmatprep.subr.bf16.mxu0 0
    %841 = vmatpush1.bf16.msra.mxu0 0
    %842 = vmatprep.subr.bf16.mxu0 0
    %843 = vmatpush1.bf16.msra.mxu0 0
    %844 = vmatprep.subr.bf16.mxu0 0
    %845 = vmatpush1.bf16.msra.mxu0 0
    %846 = vmatprep.subr.bf16.mxu0 0
    %847 = vmatpush1.bf16.msra.mxu0 0
    %848 = vmatprep.subr.bf16.mxu0 0
    %849 = vmatpush1.bf16.msra.mxu0 0
    %850 = vmatprep.mubr.bf16.mxu0 0
    %851 = vmatmul.mubr.bf16.gmra.mrb[0].mxu0 %v813
    %v852 = vpop.f32.mrb[0].mxu0
    %v853 = vadd.f32 %v806, %v852
    %v854 = vpop.f32.mrb[0].mxu0
    %v855 = vpop.f32.mrb[0].mxu0
    %v856 = vadd.f32 %v809, %v855
    %v857 = vpop.f32.mrb[0].mxu0
    %858 = vdwg.mxu0
    %s859 = scalar_lea.vmem %s4, 32
    %v860 = vld [vmem:[%s859] sm:$0xf]
    %v861 = vld [vmem:[%s859 + $0x4] sm:$0xf]
    %v862 = vld [vmem:[%s859 + $0x8] sm:$0xf]
    %v863 = vld [vmem:[%s859 + $0xc] sm:$0xf]
    %s864 = scalar_lea.vmem %s5, 2
    %v865 = vld [vmem:[%s864] sm:$0x1]
    %v867 = vlaneseq
    %v868 = vshrl.u32 %v867, 7
    %v869 = vsub.s32 0, %v868
    %v870 = vrot.slane %v865, %v869
    %v876 = vunpack.c.l.b16 %v860
    %v877 = vunpack.c.l.b16 %v861
    %v878 = vunpack.c.l.b16 %v862
    %v879 = vunpack.c.l.b16 %v863
    %v880 = vpack.c.b16 %v877, %v876
    %v881 = vpack.c.b16 %v879, %v878
    %884 = vmatprep.subr.bf16.mxu0 0
    %885 = vmatpush1.bf16.msra.mxu0 %v880
    %886 = vmatprep.subr.bf16.mxu0 0
    %887 = vmatpush1.bf16.msra.mxu0 %v881
    %888 = vmatprep.subr.bf16.mxu0 0
    %889 = vmatpush1.bf16.msra.mxu0 0
    %890 = vmatprep.subr.bf16.mxu0 0
    %891 = vmatpush1.bf16.msra.mxu0 0
    %892 = vmatprep.subr.bf16.mxu0 0
    %893 = vmatpush1.bf16.msra.mxu0 0
    %894 = vmatprep.subr.bf16.mxu0 0
    %895 = vmatpush1.bf16.msra.mxu0 0
    %896 = vmatprep.subr.bf16.mxu0 0
    %897 = vmatpush1.bf16.msra.mxu0 0
    %898 = vmatprep.subr.bf16.mxu0 0
    %899 = vmatpush1.bf16.msra.mxu0 0
    %900 = vmatprep.subr.bf16.mxu0 0
    %901 = vmatpush1.bf16.msra.mxu0 0
    %902 = vmatprep.subr.bf16.mxu0 0
    %903 = vmatpush1.bf16.msra.mxu0 0
    %904 = vmatprep.subr.bf16.mxu0 0
    %905 = vmatpush1.bf16.msra.mxu0 0
    %906 = vmatprep.subr.bf16.mxu0 0
    %907 = vmatpush1.bf16.msra.mxu0 0
    %908 = vmatprep.subr.bf16.mxu0 0
    %909 = vmatpush1.bf16.msra.mxu0 0
    %910 = vmatprep.subr.bf16.mxu0 0
    %911 = vmatpush1.bf16.msra.mxu0 0
    %912 = vmatprep.subr.bf16.mxu0 0
    %913 = vmatpush1.bf16.msra.mxu0 0
    %914 = vmatprep.subr.bf16.mxu0 0
    %915 = vmatpush1.bf16.msra.mxu0 0
    %916 = vmatprep.mubr.bf16.mxu0 0
    %917 = vmatmul.mubr.bf16.gmra.mrb[0].mxu0 %v154
    %v918 = vpop.f32.mrb[0].mxu0
    %v919 = vadd.f32 %v870, %v918
    %v920 = vpop.f32.mrb[0].mxu0
    %v921 = vpop.f32.mrb[0].mxu0
    %v922 = vadd.f32 %v870, %v921
    %v923 = vpop.f32.mrb[0].mxu0
    %924 = vdwg.mxu0
    %s925 = scalar_lea.vmem %s6, 32
    %v926 = vld [vmem:[%s925] sm:$0xf]
    %v927 = vld [vmem:[%s925 + $0x4] sm:$0xf]
    %v928 = vld [vmem:[%s925 + $0x8] sm:$0xf]
    %v929 = vld [vmem:[%s925 + $0xc] sm:$0xf]
    %s930 = scalar_lea.vmem %s7, 2
    %v931 = vld [vmem:[%s930] sm:$0x1]
    %v933 = vlaneseq
    %v934 = vshrl.u32 %v933, 7
    %v935 = vsub.s32 0, %v934
    %v936 = vrot.slane %v931, %v935
    %v942 = vunpack.c.l.b16 %v926
    %v943 = vunpack.c.l.b16 %v927
    %v944 = vunpack.c.l.b16 %v928
    %v945 = vunpack.c.l.b16 %v929
    %v946 = vpack.c.b16 %v943, %v942
    %v947 = vpack.c.b16 %v945, %v944
    %950 = vmatprep.subr.bf16.mxu0 0
    %951 = vmatpush1.bf16.msra.mxu0 %v946
    %952 = vmatprep.subr.bf16.mxu0 0
    %953 = vmatpush1.bf16.msra.mxu0 %v947
    %954 = vmatprep.subr.bf16.mxu0 0
    %955 = vmatpush1.bf16.msra.mxu0 0
    %956 = vmatprep.subr.bf16.mxu0 0
    %957 = vmatpush1.bf16.msra.mxu0 0
    %958 = vmatprep.subr.bf16.mxu0 0
    %959 = vmatpush1.bf16.msra.mxu0 0
    %960 = vmatprep.subr.bf16.mxu0 0
    %961 = vmatpush1.bf16.msra.mxu0 0
    %962 = vmatprep.subr.bf16.mxu0 0
    %963 = vmatpush1.bf16.msra.mxu0 0
    %964 = vmatprep.subr.bf16.mxu0 0
    %965 = vmatpush1.bf16.msra.mxu0 0
    %966 = vmatprep.subr.bf16.mxu0 0
    %967 = vmatpush1.bf16.msra.mxu0 0
    %968 = vmatprep.subr.bf16.mxu0 0
    %969 = vmatpush1.bf16.msra.mxu0 0
    %970 = vmatprep.subr.bf16.mxu0 0
    %971 = vmatpush1.bf16.msra.mxu0 0
    %972 = vmatprep.subr.bf16.mxu0 0
    %973 = vmatpush1.bf16.msra.mxu0 0
    %974 = vmatprep.subr.bf16.mxu0 0
    %975 = vmatpush1.bf16.msra.mxu0 0
    %976 = vmatprep.subr.bf16.mxu0 0
    %977 = vmatpush1.bf16.msra.mxu0 0
    %978 = vmatprep.subr.bf16.mxu0 0
    %979 = vmatpush1.bf16.msra.mxu0 0
    %980 = vmatprep.subr.bf16.mxu0 0
    %981 = vmatpush1.bf16.msra.mxu0 0
    %982 = vmatprep.mubr.bf16.mxu0 0
    %983 = vmatmul.mubr.bf16.gmra.mrb[0].mxu0 %v154
    %v984 = vpop.f32.mrb[0].mxu0
    %v985 = vadd.f32 %v936, %v984
    %v986 = vpop.f32.mrb[0].mxu0
    %v987 = vpop.f32.mrb[0].mxu0
    %v988 = vadd.f32 %v936, %v987
    %v989 = vpop.f32.mrb[0].mxu0
    %990 = vdwg.mxu0
    %s991 = scalar_lea.vmem %s8, 32
    %v992 = vld [vmem:[%s991] sm:$0xf]
    %v993 = vld [vmem:[%s991 + $0x4] sm:$0xf]
    %v994 = vld [vmem:[%s991 + $0x8] sm:$0xf]
    %v995 = vld [vmem:[%s991 + $0xc] sm:$0xf]
    %s996 = scalar_lea.vmem %s9, 2
    %v997 = vld [vmem:[%s996] sm:$0x1]
    %v999 = vlaneseq
    %v1000 = vshrl.u32 %v999, 7
    %v1001 = vsub.s32 0, %v1000
    %v1002 = vrot.slane %v997, %v1001
    %v1008 = vunpack.c.l.b16 %v992
    %v1009 = vunpack.c.l.b16 %v993
    %v1010 = vunpack.c.l.b16 %v994
    %v1011 = vunpack.c.l.b16 %v995
    %v1012 = vpack.c.b16 %v1009, %v1008
    %v1013 = vpack.c.b16 %v1011, %v1010
    %1016 = vmatprep.subr.bf16.mxu0 0
    %1017 = vmatpush1.bf16.msra.mxu0 %v1012
    %1018 = vmatprep.subr.bf16.mxu0 0
    %1019 = vmatpush1.bf16.msra.mxu0 %v1013
    %1020 = vmatprep.subr.bf16.mxu0 0
    %1021 = vmatpush1.bf16.msra.mxu0 0
    %1022 = vmatprep.subr.bf16.mxu0 0
    %1023 = vmatpush1.bf16.msra.mxu0 0
    %1024 = vmatprep.subr.bf16.mxu0 0
    %1025 = vmatpush1.bf16.msra.mxu0 0
    %1026 = vmatprep.subr.bf16.mxu0 0
    %1027 = vmatpush1.bf16.msra.mxu0 0
    %1028 = vmatprep.subr.bf16.mxu0 0
    %1029 = vmatpush1.bf16.msra.mxu0 0
    %1030 = vmatprep.subr.bf16.mxu0 0
    %1031 = vmatpush1.bf16.msra.mxu0 0
    %1032 = vmatprep.subr.bf16.mxu0 0
    %1033 = vmatpush1.bf16.msra.mxu0 0
    %1034 = vmatprep.subr.bf16.mxu0 0
    %1035 = vmatpush1.bf16.msra.mxu0 0
    %1036 = vmatprep.subr.bf16.mxu0 0
    %1037 = vmatpush1.bf16.msra.mxu0 0
    %1038 = vmatprep.subr.bf16.mxu0 0
    %1039 = vmatpush1.bf16.msra.mxu0 0
    %1040 = vmatprep.subr.bf16.mxu0 0
    %1041 = vmatpush1.bf16.msra.mxu0 0
    %1042 = vmatprep.subr.bf16.mxu0 0
    %1043 = vmatpush1.bf16.msra.mxu0 0
    %1044 = vmatprep.subr.bf16.mxu0 0
    %1045 = vmatpush1.bf16.msra.mxu0 0
    %1046 = vmatprep.subr.bf16.mxu0 0
    %1047 = vmatpush1.bf16.msra.mxu0 0
    %1048 = vmatprep.mubr.bf16.mxu0 0
    %1049 = vmatmul.mubr.bf16.gmra.mrb[0].mxu0 %v154
    %v1050 = vpop.f32.mrb[0].mxu0
    %v1051 = vadd.f32 %v1002, %v1050
    %v1052 = vpop.f32.mrb[0].mxu0
    %v1053 = vpop.f32.mrb[0].mxu0
    %v1054 = vadd.f32 %v1002, %v1053
    %v1055 = vpop.f32.mrb[0].mxu0
    %1056 = vdwg.mxu0
    %v1057 = vpack.c.bf16 %v922, %v919
    %v1058 = vpack.c.bf16 %v988, %v985
    %v1060 = vsel %vm327, %v1057, 0
    %v1063 = vsel %vm327, %v1058, 0
    %1065 = vmatprep.subr.bf16.mxu0 0
    %1066 = vmatpush1.bf16.xpose.msra.mxu0 %v1063
    %1067 = vmatprep.subr.bf16.mxu0 0
    %1068 = vmatpush1.bf16.xpose.msra.mxu0 0
    %1069 = vmatprep.subr.bf16.mxu0 0
    %1070 = vmatpush1.bf16.xpose.msra.mxu0 0
    %1071 = vmatprep.subr.bf16.mxu0 0
    %1072 = vmatpush1.bf16.xpose.msra.mxu0 0
    %1073 = vmatprep.subr.bf16.mxu0 0
    %1074 = vmatpush1.bf16.xpose.msra.mxu0 0
    %1075 = vmatprep.subr.bf16.mxu0 0
    %1076 = vmatpush1.bf16.xpose.msra.mxu0 0
    %1077 = vmatprep.subr.bf16.mxu0 0
    %1078 = vmatpush1.bf16.xpose.msra.mxu0 0
    %1079 = vmatprep.subr.bf16.mxu0 0
    %1080 = vmatpush1.bf16.xpose.msra.mxu0 0
    %1081 = vmatprep.subr.bf16.mxu0 0
    %1082 = vmatpush1.bf16.xpose.msra.mxu0 0
    %1083 = vmatprep.subr.bf16.mxu0 0
    %1084 = vmatpush1.bf16.xpose.msra.mxu0 0
    %1085 = vmatprep.subr.bf16.mxu0 0
    %1086 = vmatpush1.bf16.xpose.msra.mxu0 0
    %1087 = vmatprep.subr.bf16.mxu0 0
    %1088 = vmatpush1.bf16.xpose.msra.mxu0 0
    %1089 = vmatprep.subr.bf16.mxu0 0
    %1090 = vmatpush1.bf16.xpose.msra.mxu0 0
    %1091 = vmatprep.subr.bf16.mxu0 0
    %1092 = vmatpush1.bf16.xpose.msra.mxu0 0
    %1093 = vmatprep.subr.bf16.mxu0 0
    %1094 = vmatpush1.bf16.xpose.msra.mxu0 0
    %1095 = vmatprep.subr.bf16.mxu0 0
    %1096 = vmatpush1.bf16.xpose.msra.mxu0 0
    %1097 = vmatprep.mubr.bf16.mxu0 0
    %1098 = vmatmul.mubr.bf16.gmra.mrb[0].mxu0 %v1060
    %v1099 = vpop.f32.mrb[0].mxu0
    %v1100 = vadd.f32 %v127, %v1099
    %v1101 = vpop.f32.mrb[0].mxu0
    %v1102 = vpop.f32.mrb[0].mxu0
    %v1103 = vadd.f32 %v128, %v1102
    %v1104 = vpop.f32.mrb[0].mxu0
    %1105 = vdwg.mxu0
    %v1106 = vsel %vm375, %v1100, -inf
    %1107 = vmax.xlane.f32.xlu0 %v1106
    %v1108 = vpop.xlane.xlu0 %1107
    %v1109 = vsel %vm375, %v1103, -inf
    %1110 = vmax.xlane.f32.xlu0 %v1109
    %v1111 = vpop.xlane.xlu0 %1110
    %v1112 = vsub.f32 %v1100, %v1108
    %v1113 = vsub.f32 %v1103, %v1111
    %v1114 = vmul.f32 %v1112, 1.442695
    %v1115 = vpow.pop %v1114
    %v1116 = vmul.f32 %v1113, 1.442695
    %v1117 = vpow.pop %v1116
    %v1118 = vsel %vm375, %v1115, 0.0
    %1119 = vadd.xlane.f32.xlu0 %v1118
    %v1120 = vpop.xlane.xlu0 %1119
    %v1121 = vsel %vm375, %v1117, 0.0
    %1122 = vadd.xlane.f32.xlu0 %v1121
    %v1123 = vpop.xlane.xlu0 %1122
    %v1124 = vrcp.pop %v1120
    %v1125 = vrcp.pop %v1123
    %v1126 = vmul.f32 %v1115, %v1124
    %v1127 = vmul.f32 %v1117, %v1125
    %v1128 = vpack.c.bf16 %v1127, %v1126
    %v1129 = vpack.c.bf16 %v1054, %v1051
    %v1131 = vsel %vm375, %v1128, 0
    %1133 = vmatprep.subr.bf16.mxu0 0
    %1134 = vmatpush1.bf16.msra.mxu0 %v1129
    %1135 = vmatprep.subr.bf16.mxu0 0
    %1136 = vmatpush1.bf16.msra.mxu0 0
    %1137 = vmatprep.subr.bf16.mxu0 0
    %1138 = vmatpush1.bf16.msra.mxu0 0
    %1139 = vmatprep.subr.bf16.mxu0 0
    %1140 = vmatpush1.bf16.msra.mxu0 0
    %1141 = vmatprep.subr.bf16.mxu0 0
    %1142 = vmatpush1.bf16.msra.mxu0 0
    %1143 = vmatprep.subr.bf16.mxu0 0
    %1144 = vmatpush1.bf16.msra.mxu0 0
    %1145 = vmatprep.subr.bf16.mxu0 0
    %1146 = vmatpush1.bf16.msra.mxu0 0
    %1147 = vmatprep.subr.bf16.mxu0 0
    %1148 = vmatpush1.bf16.msra.mxu0 0
    %1149 = vmatprep.subr.bf16.mxu0 0
    %1150 = vmatpush1.bf16.msra.mxu0 0
    %1151 = vmatprep.subr.bf16.mxu0 0
    %1152 = vmatpush1.bf16.msra.mxu0 0
    %1153 = vmatprep.subr.bf16.mxu0 0
    %1154 = vmatpush1.bf16.msra.mxu0 0
    %1155 = vmatprep.subr.bf16.mxu0 0
    %1156 = vmatpush1.bf16.msra.mxu0 0
    %1157 = vmatprep.subr.bf16.mxu0 0
    %1158 = vmatpush1.bf16.msra.mxu0 0
    %1159 = vmatprep.subr.bf16.mxu0 0
    %1160 = vmatpush1.bf16.msra.mxu0 0
    %1161 = vmatprep.subr.bf16.mxu0 0
    %1162 = vmatpush1.bf16.msra.mxu0 0
    %1163 = vmatprep.subr.bf16.mxu0 0
    %1164 = vmatpush1.bf16.msra.mxu0 0
    %1165 = vmatprep.mubr.bf16.mxu0 0
    %1166 = vmatmul.mubr.bf16.gmra.mrb[0].mxu0 %v1131
    %v1167 = vpop.f32.mrb[0].mxu0
    %v1168 = vadd.f32 0.0, %v1167
    %v1169 = vpop.f32.mrb[0].mxu0
    %v1170 = vpop.f32.mrb[0].mxu0
    %v1171 = vadd.f32 0.0, %v1170
    %v1172 = vpop.f32.mrb[0].mxu0
    %1173 = vdwg.mxu0
    %s1174 = scalar_lea.vmem %s10, 8
    %v1175 = vld [vmem:[%s1174] sm:$0xf]
    %v1176 = vpack.c.bf16 %v1171, %v1168
    %v1178 = vsel %vm327, %v1176, 0
    %v1181 = vsel %vm767, %v1175, 0
    %1183 = vmatprep.subr.bf16.mxu0 0
    %1184 = vmatpush1.bf16.msra.mxu0 %v1181
    %1185 = vmatprep.subr.bf16.mxu0 0
    %1186 = vmatpush1.bf16.msra.mxu0 0
    %1187 = vmatprep.subr.bf16.mxu0 0
    %1188 = vmatpush1.bf16.msra.mxu0 0
    %1189 = vmatprep.subr.bf16.mxu0 0
    %1190 = vmatpush1.bf16.msra.mxu0 0
    %1191 = vmatprep.subr.bf16.mxu0 0
    %1192 = vmatpush1.bf16.msra.mxu0 0
    %1193 = vmatprep.subr.bf16.mxu0 0
    %1194 = vmatpush1.bf16.msra.mxu0 0
    %1195 = vmatprep.subr.bf16.mxu0 0
    %1196 = vmatpush1.bf16.msra.mxu0 0
    %1197 = vmatprep.subr.bf16.mxu0 0
    %1198 = vmatpush1.bf16.msra.mxu0 0
    %1199 = vmatprep.subr.bf16.mxu0 0
    %1200 = vmatpush1.bf16.msra.mxu0 0
    %1201 = vmatprep.subr.bf16.mxu0 0
    %1202 = vmatpush1.bf16.msra.mxu0 0
    %1203 = vmatprep.subr.bf16.mxu0 0
    %1204 = vmatpush1.bf16.msra.mxu0 0
    %1205 = vmatprep.subr.bf16.mxu0 0
    %1206 = vmatpush1.bf16.msra.mxu0 0
    %1207 = vmatprep.subr.bf16.mxu0 0
    %1208 = vmatpush1.bf16.msra.mxu0 0
    %1209 = vmatprep.subr.bf16.mxu0 0
    %1210 = vmatpush1.bf16.msra.mxu0 0
    %1211 = vmatprep.subr.bf16.mxu0 0
    %1212 = vmatpush1.bf16.msra.mxu0 0
    %1213 = vmatprep.subr.bf16.mxu0 0
    %1214 = vmatpush1.bf16.msra.mxu0 0
    %1215 = vmatprep.mubr.bf16.mxu0 0
    %1216 = vmatmul.mubr.bf16.gmra.mrb[0].mxu0 %v1178
    %v1217 = vpop.f32.mrb[0].mxu0
    %v1218 = vadd.f32 0.0, %v1217
    %v1219 = vpop.f32.mrb[0].mxu0
    %v1220 = vpop.f32.mrb[0].mxu0
    %v1221 = vadd.f32 0.0, %v1220
    %v1222 = vpop.f32.mrb[0].mxu0
    %1223 = vdwg.mxu0
    %v1224 = vadd.f32 %v853, %v1218
    %v1225 = vadd.f32 %v856, %v1221
    %s1226 = scalar_lea.vmem %s4, 48
    %v1227 = vld [vmem:[%s1226] sm:$0xf]
    %v1228 = vld [vmem:[%s1226 + $0x4] sm:$0xf]
    %v1229 = vld [vmem:[%s1226 + $0x8] sm:$0xf]
    %v1230 = vld [vmem:[%s1226 + $0xc] sm:$0xf]
    %s1231 = scalar_lea.vmem %s5, 3
    %v1232 = vld [vmem:[%s1231] sm:$0x1]
    %v1234 = vlaneseq
    %v1235 = vshrl.u32 %v1234, 7
    %v1236 = vsub.s32 0, %v1235
    %v1237 = vrot.slane %v1232, %v1236
    %v1243 = vunpack.c.l.b16 %v1227
    %v1244 = vunpack.c.l.b16 %v1228
    %v1245 = vunpack.c.l.b16 %v1229
    %v1246 = vunpack.c.l.b16 %v1230
    %v1247 = vpack.c.b16 %v1244, %v1243
    %v1248 = vpack.c.b16 %v1246, %v1245
    %1251 = vmatprep.subr.bf16.mxu0 0
    %1252 = vmatpush1.bf16.msra.mxu0 %v1247
    %1253 = vmatprep.subr.bf16.mxu0 0
    %1254 = vmatpush1.bf16.msra.mxu0 %v1248
    %1255 = vmatprep.subr.bf16.mxu0 0
    %1256 = vmatpush1.bf16.msra.mxu0 0
    %1257 = vmatprep.subr.bf16.mxu0 0
    %1258 = vmatpush1.bf16.msra.mxu0 0
    %1259 = vmatprep.subr.bf16.mxu0 0
    %1260 = vmatpush1.bf16.msra.mxu0 0
    %1261 = vmatprep.subr.bf16.mxu0 0
    %1262 = vmatpush1.bf16.msra.mxu0 0
    %1263 = vmatprep.subr.bf16.mxu0 0
    %1264 = vmatpush1.bf16.msra.mxu0 0
    %1265 = vmatprep.subr.bf16.mxu0 0
    %1266 = vmatpush1.bf16.msra.mxu0 0
    %1267 = vmatprep.subr.bf16.mxu0 0
    %1268 = vmatpush1.bf16.msra.mxu0 0
    %1269 = vmatprep.subr.bf16.mxu0 0
    %1270 = vmatpush1.bf16.msra.mxu0 0
    %1271 = vmatprep.subr.bf16.mxu0 0
    %1272 = vmatpush1.bf16.msra.mxu0 0
    %1273 = vmatprep.subr.bf16.mxu0 0
    %1274 = vmatpush1.bf16.msra.mxu0 0
    %1275 = vmatprep.subr.bf16.mxu0 0
    %1276 = vmatpush1.bf16.msra.mxu0 0
    %1277 = vmatprep.subr.bf16.mxu0 0
    %1278 = vmatpush1.bf16.msra.mxu0 0
    %1279 = vmatprep.subr.bf16.mxu0 0
    %1280 = vmatpush1.bf16.msra.mxu0 0
    %1281 = vmatprep.subr.bf16.mxu0 0
    %1282 = vmatpush1.bf16.msra.mxu0 0
    %1283 = vmatprep.mubr.bf16.mxu0 0
    %1284 = vmatmul.mubr.bf16.gmra.mrb[0].mxu0 %v154
    %v1285 = vpop.f32.mrb[0].mxu0
    %v1286 = vadd.f32 %v1237, %v1285
    %v1287 = vpop.f32.mrb[0].mxu0
    %v1288 = vpop.f32.mrb[0].mxu0
    %v1289 = vadd.f32 %v1237, %v1288
    %v1290 = vpop.f32.mrb[0].mxu0
    %1291 = vdwg.mxu0
    %s1292 = scalar_lea.vmem %s6, 48
    %v1293 = vld [vmem:[%s1292] sm:$0xf]
    %v1294 = vld [vmem:[%s1292 + $0x4] sm:$0xf]
    %v1295 = vld [vmem:[%s1292 + $0x8] sm:$0xf]
    %v1296 = vld [vmem:[%s1292 + $0xc] sm:$0xf]
    %s1297 = scalar_lea.vmem %s7, 3
    %v1298 = vld [vmem:[%s1297] sm:$0x1]
    %v1300 = vlaneseq
    %v1301 = vshrl.u32 %v1300, 7
    %v1302 = vsub.s32 0, %v1301
    %v1303 = vrot.slane %v1298, %v1302
    %v1309 = vunpack.c.l.b16 %v1293
    %v1310 = vunpack.c.l.b16 %v1294
    %v1311 = vunpack.c.l.b16 %v1295
    %v1312 = vunpack.c.l.b16 %v1296
    %v1313 = vpack.c.b16 %v1310, %v1309
    %v1314 = vpack.c.b16 %v1312, %v1311
    %1317 = vmatprep.subr.bf16.mxu0 0
    %1318 = vmatpush1.bf16.msra.mxu0 %v1313
    %1319 = vmatprep.subr.bf16.mxu0 0
    %1320 = vmatpush1.bf16.msra.mxu0 %v1314
    %1321 = vmatprep.subr.bf16.mxu0 0
    %1322 = vmatpush1.bf16.msra.mxu0 0
    %1323 = vmatprep.subr.bf16.mxu0 0
    %1324 = vmatpush1.bf16.msra.mxu0 0
    %1325 = vmatprep.subr.bf16.mxu0 0
    %1326 = vmatpush1.bf16.msra.mxu0 0
    %1327 = vmatprep.subr.bf16.mxu0 0
    %1328 = vmatpush1.bf16.msra.mxu0 0
    %1329 = vmatprep.subr.bf16.mxu0 0
    %1330 = vmatpush1.bf16.msra.mxu0 0
    %1331 = vmatprep.subr.bf16.mxu0 0
    %1332 = vmatpush1.bf16.msra.mxu0 0
    %1333 = vmatprep.subr.bf16.mxu0 0
    %1334 = vmatpush1.bf16.msra.mxu0 0
    %1335 = vmatprep.subr.bf16.mxu0 0
    %1336 = vmatpush1.bf16.msra.mxu0 0
    %1337 = vmatprep.subr.bf16.mxu0 0
    %1338 = vmatpush1.bf16.msra.mxu0 0
    %1339 = vmatprep.subr.bf16.mxu0 0
    %1340 = vmatpush1.bf16.msra.mxu0 0
    %1341 = vmatprep.subr.bf16.mxu0 0
    %1342 = vmatpush1.bf16.msra.mxu0 0
    %1343 = vmatprep.subr.bf16.mxu0 0
    %1344 = vmatpush1.bf16.msra.mxu0 0
    %1345 = vmatprep.subr.bf16.mxu0 0
    %1346 = vmatpush1.bf16.msra.mxu0 0
    %1347 = vmatprep.subr.bf16.mxu0 0
    %1348 = vmatpush1.bf16.msra.mxu0 0
    %1349 = vmatprep.mubr.bf16.mxu0 0
    %1350 = vmatmul.mubr.bf16.gmra.mrb[0].mxu0 %v154
    %v1351 = vpop.f32.mrb[0].mxu0
    %v1352 = vadd.f32 %v1303, %v1351
    %v1353 = vpop.f32.mrb[0].mxu0
    %v1354 = vpop.f32.mrb[0].mxu0
    %v1355 = vadd.f32 %v1303, %v1354
    %v1356 = vpop.f32.mrb[0].mxu0
    %1357 = vdwg.mxu0
    %s1358 = scalar_lea.vmem %s8, 48
    %v1359 = vld [vmem:[%s1358] sm:$0xf]
    %v1360 = vld [vmem:[%s1358 + $0x4] sm:$0xf]
    %v1361 = vld [vmem:[%s1358 + $0x8] sm:$0xf]
    %v1362 = vld [vmem:[%s1358 + $0xc] sm:$0xf]
    %s1363 = scalar_lea.vmem %s9, 3
    %v1364 = vld [vmem:[%s1363] sm:$0x1]
    %v1366 = vlaneseq
    %v1367 = vshrl.u32 %v1366, 7
    %v1368 = vsub.s32 0, %v1367
    %v1369 = vrot.slane %v1364, %v1368
    %v1375 = vunpack.c.l.b16 %v1359
    %v1376 = vunpack.c.l.b16 %v1360
    %v1377 = vunpack.c.l.b16 %v1361
    %v1378 = vunpack.c.l.b16 %v1362
    %v1379 = vpack.c.b16 %v1376, %v1375
    %v1380 = vpack.c.b16 %v1378, %v1377
    %1383 = vmatprep.subr.bf16.mxu0 0
    %1384 = vmatpush1.bf16.msra.mxu0 %v1379
    %1385 = vmatprep.subr.bf16.mxu0 0
    %1386 = vmatpush1.bf16.msra.mxu0 %v1380
    %1387 = vmatprep.subr.bf16.mxu0 0
    %1388 = vmatpush1.bf16.msra.mxu0 0
    %1389 = vmatprep.subr.bf16.mxu0 0
    %1390 = vmatpush1.bf16.msra.mxu0 0
    %1391 = vmatprep.subr.bf16.mxu0 0
    %1392 = vmatpush1.bf16.msra.mxu0 0
    %1393 = vmatprep.subr.bf16.mxu0 0
    %1394 = vmatpush1.bf16.msra.mxu0 0
    %1395 = vmatprep.subr.bf16.mxu0 0
    %1396 = vmatpush1.bf16.msra.mxu0 0
    %1397 = vmatprep.subr.bf16.mxu0 0
    %1398 = vmatpush1.bf16.msra.mxu0 0
    %1399 = vmatprep.subr.bf16.mxu0 0
    %1400 = vmatpush1.bf16.msra.mxu0 0
    %1401 = vmatprep.subr.bf16.mxu0 0
    %1402 = vmatpush1.bf16.msra.mxu0 0
    %1403 = vmatprep.subr.bf16.mxu0 0
    %1404 = vmatpush1.bf16.msra.mxu0 0
    %1405 = vmatprep.subr.bf16.mxu0 0
    %1406 = vmatpush1.bf16.msra.mxu0 0
    %1407 = vmatprep.subr.bf16.mxu0 0
    %1408 = vmatpush1.bf16.msra.mxu0 0
    %1409 = vmatprep.subr.bf16.mxu0 0
    %1410 = vmatpush1.bf16.msra.mxu0 0
    %1411 = vmatprep.subr.bf16.mxu0 0
    %1412 = vmatpush1.bf16.msra.mxu0 0
    %1413 = vmatprep.subr.bf16.mxu0 0
    %1414 = vmatpush1.bf16.msra.mxu0 0
    %1415 = vmatprep.mubr.bf16.mxu0 0
    %1416 = vmatmul.mubr.bf16.gmra.mrb[0].mxu0 %v154
    %v1417 = vpop.f32.mrb[0].mxu0
    %v1418 = vadd.f32 %v1369, %v1417
    %v1419 = vpop.f32.mrb[0].mxu0
    %v1420 = vpop.f32.mrb[0].mxu0
    %v1421 = vadd.f32 %v1369, %v1420
    %v1422 = vpop.f32.mrb[0].mxu0
    %1423 = vdwg.mxu0
    %v1424 = vpack.c.bf16 %v1289, %v1286
    %v1425 = vpack.c.bf16 %v1355, %v1352
    %v1427 = vsel %vm327, %v1424, 0
    %v1430 = vsel %vm327, %v1425, 0
    %1432 = vmatprep.subr.bf16.mxu0 0
    %1433 = vmatpush1.bf16.xpose.msra.mxu0 %v1430
    %1434 = vmatprep.subr.bf16.mxu0 0
    %1435 = vmatpush1.bf16.xpose.msra.mxu0 0
    %1436 = vmatprep.subr.bf16.mxu0 0
    %1437 = vmatpush1.bf16.xpose.msra.mxu0 0
    %1438 = vmatprep.subr.bf16.mxu0 0
    %1439 = vmatpush1.bf16.xpose.msra.mxu0 0
    %1440 = vmatprep.subr.bf16.mxu0 0
    %1441 = vmatpush1.bf16.xpose.msra.mxu0 0
    %1442 = vmatprep.subr.bf16.mxu0 0
    %1443 = vmatpush1.bf16.xpose.msra.mxu0 0
    %1444 = vmatprep.subr.bf16.mxu0 0
    %1445 = vmatpush1.bf16.xpose.msra.mxu0 0
    %1446 = vmatprep.subr.bf16.mxu0 0
    %1447 = vmatpush1.bf16.xpose.msra.mxu0 0
    %1448 = vmatprep.subr.bf16.mxu0 0
    %1449 = vmatpush1.bf16.xpose.msra.mxu0 0
    %1450 = vmatprep.subr.bf16.mxu0 0
    %1451 = vmatpush1.bf16.xpose.msra.mxu0 0
    %1452 = vmatprep.subr.bf16.mxu0 0
    %1453 = vmatpush1.bf16.xpose.msra.mxu0 0
    %1454 = vmatprep.subr.bf16.mxu0 0
    %1455 = vmatpush1.bf16.xpose.msra.mxu0 0
    %1456 = vmatprep.subr.bf16.mxu0 0
    %1457 = vmatpush1.bf16.xpose.msra.mxu0 0
    %1458 = vmatprep.subr.bf16.mxu0 0
    %1459 = vmatpush1.bf16.xpose.msra.mxu0 0
    %1460 = vmatprep.subr.bf16.mxu0 0
    %1461 = vmatpush1.bf16.xpose.msra.mxu0 0
    %1462 = vmatprep.subr.bf16.mxu0 0
    %1463 = vmatpush1.bf16.xpose.msra.mxu0 0
    %1464 = vmatprep.mubr.bf16.mxu0 0
    %1465 = vmatmul.mubr.bf16.gmra.mrb[0].mxu0 %v1427
    %v1466 = vpop.f32.mrb[0].mxu0
    %v1467 = vadd.f32 %v127, %v1466
    %v1468 = vpop.f32.mrb[0].mxu0
    %v1469 = vpop.f32.mrb[0].mxu0
    %v1470 = vadd.f32 %v128, %v1469
    %v1471 = vpop.f32.mrb[0].mxu0
    %1472 = vdwg.mxu0
    %v1473 = vsel %vm375, %v1467, -inf
    %1474 = vmax.xlane.f32.xlu0 %v1473
    %v1475 = vpop.xlane.xlu0 %1474
    %v1476 = vsel %vm375, %v1470, -inf
    %1477 = vmax.xlane.f32.xlu0 %v1476
    %v1478 = vpop.xlane.xlu0 %1477
    %v1479 = vsub.f32 %v1467, %v1475
    %v1480 = vsub.f32 %v1470, %v1478
    %v1481 = vmul.f32 %v1479, 1.442695
    %v1482 = vpow.pop %v1481
    %v1483 = vmul.f32 %v1480, 1.442695
    %v1484 = vpow.pop %v1483
    %v1485 = vsel %vm375, %v1482, 0.0
    %1486 = vadd.xlane.f32.xlu0 %v1485
    %v1487 = vpop.xlane.xlu0 %1486
    %v1488 = vsel %vm375, %v1484, 0.0
    %1489 = vadd.xlane.f32.xlu0 %v1488
    %v1490 = vpop.xlane.xlu0 %1489
    %v1491 = vrcp.pop %v1487
    %v1492 = vrcp.pop %v1490
    %v1493 = vmul.f32 %v1482, %v1491
    %v1494 = vmul.f32 %v1484, %v1492
    %v1495 = vpack.c.bf16 %v1494, %v1493
    %v1496 = vpack.c.bf16 %v1421, %v1418
    %v1498 = vsel %vm375, %v1495, 0
    %1500 = vmatprep.subr.bf16.mxu0 0
    %1501 = vmatpush1.bf16.msra.mxu0 %v1496
    %1502 = vmatprep.subr.bf16.mxu0 0
    %1503 = vmatpush1.bf16.msra.mxu0 0
    %1504 = vmatprep.subr.bf16.mxu0 0
    %1505 = vmatpush1.bf16.msra.mxu0 0
    %1506 = vmatprep.subr.bf16.mxu0 0
    %1507 = vmatpush1.bf16.msra.mxu0 0
    %1508 = vmatprep.subr.bf16.mxu0 0
    %1509 = vmatpush1.bf16.msra.mxu0 0
    %1510 = vmatprep.subr.bf16.mxu0 0
    %1511 = vmatpush1.bf16.msra.mxu0 0
    %1512 = vmatprep.subr.bf16.mxu0 0
    %1513 = vmatpush1.bf16.msra.mxu0 0
    %1514 = vmatprep.subr.bf16.mxu0 0
    %1515 = vmatpush1.bf16.msra.mxu0 0
    %1516 = vmatprep.subr.bf16.mxu0 0
    %1517 = vmatpush1.bf16.msra.mxu0 0
    %1518 = vmatprep.subr.bf16.mxu0 0
    %1519 = vmatpush1.bf16.msra.mxu0 0
    %1520 = vmatprep.subr.bf16.mxu0 0
    %1521 = vmatpush1.bf16.msra.mxu0 0
    %1522 = vmatprep.subr.bf16.mxu0 0
    %1523 = vmatpush1.bf16.msra.mxu0 0
    %1524 = vmatprep.subr.bf16.mxu0 0
    %1525 = vmatpush1.bf16.msra.mxu0 0
    %1526 = vmatprep.subr.bf16.mxu0 0
    %1527 = vmatpush1.bf16.msra.mxu0 0
    %1528 = vmatprep.subr.bf16.mxu0 0
    %1529 = vmatpush1.bf16.msra.mxu0 0
    %1530 = vmatprep.subr.bf16.mxu0 0
    %1531 = vmatpush1.bf16.msra.mxu0 0
    %1532 = vmatprep.mubr.bf16.mxu0 0
    %1533 = vmatmul.mubr.bf16.gmra.mrb[0].mxu0 %v1498
    %v1534 = vpop.f32.mrb[0].mxu0
    %v1535 = vadd.f32 0.0, %v1534
    %v1536 = vpop.f32.mrb[0].mxu0
    %v1537 = vpop.f32.mrb[0].mxu0
    %v1538 = vadd.f32 0.0, %v1537
    %v1539 = vpop.f32.mrb[0].mxu0
    %1540 = vdwg.mxu0
    %s1541 = scalar_lea.vmem %s10, 12
    %v1542 = vld [vmem:[%s1541] sm:$0xf]
    %v1543 = vpack.c.bf16 %v1538, %v1535
    %v1545 = vsel %vm327, %v1543, 0
    %v1548 = vsel %vm767, %v1542, 0
    %1550 = vmatprep.subr.bf16.mxu0 0
    %1551 = vmatpush1.bf16.msra.mxu0 %v1548
    %1552 = vmatprep.subr.bf16.mxu0 0
    %1553 = vmatpush1.bf16.msra.mxu0 0
    %1554 = vmatprep.subr.bf16.mxu0 0
    %1555 = vmatpush1.bf16.msra.mxu0 0
    %1556 = vmatprep.subr.bf16.mxu0 0
    %1557 = vmatpush1.bf16.msra.mxu0 0
    %1558 = vmatprep.subr.bf16.mxu0 0
    %1559 = vmatpush1.bf16.msra.mxu0 0
    %1560 = vmatprep.subr.bf16.mxu0 0
    %1561 = vmatpush1.bf16.msra.mxu0 0
    %1562 = vmatprep.subr.bf16.mxu0 0
    %1563 = vmatpush1.bf16.msra.mxu0 0
    %1564 = vmatprep.subr.bf16.mxu0 0
    %1565 = vmatpush1.bf16.msra.mxu0 0
    %1566 = vmatprep.subr.bf16.mxu0 0
    %1567 = vmatpush1.bf16.msra.mxu0 0
    %1568 = vmatprep.subr.bf16.mxu0 0
    %1569 = vmatpush1.bf16.msra.mxu0 0
    %1570 = vmatprep.subr.bf16.mxu0 0
    %1571 = vmatpush1.bf16.msra.mxu0 0
    %1572 = vmatprep.subr.bf16.mxu0 0
    %1573 = vmatpush1.bf16.msra.mxu0 0
    %1574 = vmatprep.subr.bf16.mxu0 0
    %1575 = vmatpush1.bf16.msra.mxu0 0
    %1576 = vmatprep.subr.bf16.mxu0 0
    %1577 = vmatpush1.bf16.msra.mxu0 0
    %1578 = vmatprep.subr.bf16.mxu0 0
    %1579 = vmatpush1.bf16.msra.mxu0 0
    %1580 = vmatprep.subr.bf16.mxu0 0
    %1581 = vmatpush1.bf16.msra.mxu0 0
    %1582 = vmatprep.mubr.bf16.mxu0 0
    %1583 = vmatmul.mubr.bf16.gmra.mrb[0].mxu0 %v1545
    %v1584 = vpop.f32.mrb[0].mxu0
    %v1585 = vadd.f32 0.0, %v1584
    %v1586 = vpop.f32.mrb[0].mxu0
    %v1587 = vpop.f32.mrb[0].mxu0
    %v1588 = vadd.f32 0.0, %v1587
    %v1589 = vpop.f32.mrb[0].mxu0
    %1590 = vdwg.mxu0
    %v1591 = vadd.f32 %v1224, %v1585
    %v1592 = vadd.f32 %v1225, %v1588
    %v1593 = vld [vmem:[%s11] sm:$0x1]
    %v1595 = vlaneseq
    %v1596 = vshrl.u32 %v1595, 7
    %v1597 = vsub.s32 0, %v1596
    %v1598 = vrot.slane %v1593, %v1597
    %v1600 = vadd.f32 %v1591, %v1598
    %v1601 = vadd.f32 %v1592, %v1598
    %v1602 = vadd.f32 %v1600, %v125
    %v1603 = vadd.f32 %v1601, %v126
    %v1604 = vld [vmem:[%s12] sm:$0x1]
    %v1605 = vld [vmem:[%s13] sm:$0x1]
    %v1606 = vsel %vm83, %v1602, 0.0
    %1607 = vadd.xlane.f32.xlu0 %v1606
    %v1608 = vpop.xlane.xlu0 %1607
    %v1609 = vsel %vm83, %v1603, 0.0
    %1610 = vadd.xlane.f32.xlu0 %v1609
    %v1611 = vpop.xlane.xlu0 %1610
    %v1612 = vmul.f32 %v1608, %v90
    %v1613 = vmul.f32 %v1611, %v90
    %v1614 = vsub.f32 %v1602, %v1612
    %v1615 = vsub.f32 %v1603, %v1613
    %v1616 = vmul.f32 %v1614, %v1614
    %v1617 = vmul.f32 %v1615, %v1615
    %v1618 = vsel %vm83, %v1616, 0.0
    %1619 = vadd.xlane.f32.xlu0 %v1618
    %v1620 = vpop.xlane.xlu0 %1619
    %v1621 = vsel %vm83, %v1617, 0.0
    %1622 = vadd.xlane.f32.xlu0 %v1621
    %v1623 = vpop.xlane.xlu0 %1622
    %v1624 = vmul.f32 %v1620, %v90
    %v1625 = vmul.f32 %v1623, %v90
    %v1626 = vadd.f32 %v1624, 1e-12
    %v1627 = vadd.f32 %v1625, 1e-12
    %v1628 = vrsqrt.pop %v1626
    %v1629 = vrsqrt.pop %v1627
    %v1630 = vmul.f32 %v1614, %v1628
    %v1631 = vmul.f32 %v1615, %v1629
    %v1633 = vlaneseq
    %v1634 = vshrl.u32 %v1633, 7
    %v1635 = vsub.s32 0, %v1634
    %v1636 = vrot.slane %v1604, %v1635
    %v1638 = vmul.f32 %v1630, %v1636
    %v1639 = vmul.f32 %v1631, %v1636
    %v1641 = vlaneseq
    %v1642 = vshrl.u32 %v1641, 7
    %v1643 = vsub.s32 0, %v1642
    %v1644 = vrot.slane %v1605, %v1643
    %v1646 = vadd.f32 %v1638, %v1644
    %v1647 = vadd.f32 %v1639, %v1644
    %v1648 = vld [vmem:[%s14] sm:$0xf]
    %v1649 = vld [vmem:[%s14 + $0x4] sm:$0xf]
    %v1650 = vld [vmem:[%s14 + $0x8] sm:$0xf]
    %v1651 = vld [vmem:[%s14 + $0xc] sm:$0xf]
    %v1652 = vpack.c.bf16 %v1647, %v1646
    %v1653 = vld [vmem:[%s15] sm:$0x1]
    %v1655 = vlaneseq
    %v1656 = vshrl.u32 %v1655, 7
    %v1657 = vsub.s32 0, %v1656
    %v1658 = vrot.slane %v1653, %v1657
    %v1664 = vunpack.c.l.b16 %v1648
    %v1665 = vunpack.c.l.b16 %v1649
    %v1666 = vunpack.c.l.b16 %v1650
    %v1667 = vunpack.c.l.b16 %v1651
    %v1668 = vpack.c.b16 %v1665, %v1664
    %v1669 = vpack.c.b16 %v1667, %v1666
    %v1673 = vsel %vm83, %v1652, 0
    %1675 = vmatprep.subr.bf16.mxu0 0
    %1676 = vmatpush1.bf16.msra.mxu0 %v1668
    %1677 = vmatprep.subr.bf16.mxu0 0
    %1678 = vmatpush1.bf16.msra.mxu0 %v1669
    %1679 = vmatprep.subr.bf16.mxu0 0
    %1680 = vmatpush1.bf16.msra.mxu0 0
    %1681 = vmatprep.subr.bf16.mxu0 0
    %1682 = vmatpush1.bf16.msra.mxu0 0
    %1683 = vmatprep.subr.bf16.mxu0 0
    %1684 = vmatpush1.bf16.msra.mxu0 0
    %1685 = vmatprep.subr.bf16.mxu0 0
    %1686 = vmatpush1.bf16.msra.mxu0 0
    %1687 = vmatprep.subr.bf16.mxu0 0
    %1688 = vmatpush1.bf16.msra.mxu0 0
    %1689 = vmatprep.subr.bf16.mxu0 0
    %1690 = vmatpush1.bf16.msra.mxu0 0
    %1691 = vmatprep.subr.bf16.mxu0 0
    %1692 = vmatpush1.bf16.msra.mxu0 0
    %1693 = vmatprep.subr.bf16.mxu0 0
    %1694 = vmatpush1.bf16.msra.mxu0 0
    %1695 = vmatprep.subr.bf16.mxu0 0
    %1696 = vmatpush1.bf16.msra.mxu0 0
    %1697 = vmatprep.subr.bf16.mxu0 0
    %1698 = vmatpush1.bf16.msra.mxu0 0
    %1699 = vmatprep.subr.bf16.mxu0 0
    %1700 = vmatpush1.bf16.msra.mxu0 0
    %1701 = vmatprep.subr.bf16.mxu0 0
    %1702 = vmatpush1.bf16.msra.mxu0 0
    %1703 = vmatprep.subr.bf16.mxu0 0
    %1704 = vmatpush1.bf16.msra.mxu0 0
    %1705 = vmatprep.subr.bf16.mxu0 0
    %1706 = vmatpush1.bf16.msra.mxu0 0
    %1707 = vmatprep.mubr.bf16.mxu0 0
    %1708 = vmatmul.mubr.bf16.gmra.mrb[0].mxu0 %v1673
    %v1709 = vpop.f32.mrb[0].mxu0
    %v1710 = vadd.f32 %v1658, %v1709
    %v1711 = vpop.f32.mrb[0].mxu0
    %v1712 = vpop.f32.mrb[0].mxu0
    %v1713 = vadd.f32 %v1658, %v1712
    %v1714 = vpop.f32.mrb[0].mxu0
    %1715 = vdwg.mxu0
    %v1716 = vmul.f32 %v1710, 0.5
    %v1717 = vmul.f32 %v1713, 0.5
    %v1718 = vmul.f32 %v1710, 0.044715
    %v1719 = vmul.f32 %v1713, 0.044715
    %v1720 = vmul.f32 %v1718, %v1710
    %v1721 = vmul.f32 %v1719, %v1713
    %v1722 = vmul.f32 %v1720, %v1710
    %v1723 = vmul.f32 %v1721, %v1713
    %v1724 = vadd.f32 %v1710, %v1722
    %v1725 = vadd.f32 %v1713, %v1723
    %v1726 = vmul.f32 %v1724, 0.7978846
    %v1727 = vmul.f32 %v1725, 0.7978846
    %v1728 = vtanh.pop %v1726
    %v1729 = vtanh.pop %v1727
    %v1730 = vadd.f32 %v1728, 1.0
    %v1731 = vadd.f32 %v1729, 1.0
    %v1732 = vmul.f32 %v1716, %v1730
    %v1733 = vmul.f32 %v1717, %v1731
    %v1734 = vld [vmem:[%s16] sm:$0xf]
    %v1735 = vld [vmem:[%s16 + $0x4] sm:$0xf]
    %v1736 = vld [vmem:[%s16 + $0x8] sm:$0xf]
    %v1737 = vld [vmem:[%s16 + $0xc] sm:$0xf]
    %v1738 = vld [vmem:[%s16 + $0x10] sm:$0xf]
    %v1739 = vld [vmem:[%s16 + $0x14] sm:$0xf]
    %v1740 = vld [vmem:[%s16 + $0x18] sm:$0xf]
    %v1741 = vld [vmem:[%s16 + $0x1c] sm:$0xf]
    %v1742 = vpack.c.bf16 %v1733, %v1732
    %v1743 = vld [vmem:[%s17] sm:$0x1]
    %v1745 = vlaneseq
    %v1746 = vshrl.u32 %v1745, 7
    %v1747 = vsub.s32 0, %v1746
    %v1748 = vrot.slane %v1743, %v1747
    %v1758 = vunpack.c.l.b16 %v1734
    %v1759 = vunpack.c.l.b16 %v1735
    %v1760 = vunpack.c.l.b16 %v1736
    %v1761 = vunpack.c.l.b16 %v1737
    %v1762 = vunpack.c.l.b16 %v1738
    %v1763 = vunpack.c.l.b16 %v1739
    %v1764 = vunpack.c.l.b16 %v1740
    %v1765 = vunpack.c.l.b16 %v1741
    %v1766 = vpack.c.b16 %v1759, %v1758
    %v1767 = vpack.c.b16 %v1761, %v1760
    %v1768 = vpack.c.b16 %v1763, %v1762
    %v1769 = vpack.c.b16 %v1765, %v1764
    %vm1774 = vcmask 523264
    %v1776 = vsel %vm1774, %v1742, 0
    %1778 = vmatprep.subr.bf16.mxu0 0
    %1779 = vmatpush1.bf16.msra.mxu0 %v1766
    %1780 = vmatprep.subr.bf16.mxu0 0
    %1781 = vmatpush1.bf16.msra.mxu0 %v1767
    %1782 = vmatprep.subr.bf16.mxu0 0
    %1783 = vmatpush1.bf16.msra.mxu0 %v1768
    %1784 = vmatprep.subr.bf16.mxu0 0
    %1785 = vmatpush1.bf16.msra.mxu0 %v1769
    %1786 = vmatprep.subr.bf16.mxu0 0
    %1787 = vmatpush1.bf16.msra.mxu0 0
    %1788 = vmatprep.subr.bf16.mxu0 0
    %1789 = vmatpush1.bf16.msra.mxu0 0
    %1790 = vmatprep.subr.bf16.mxu0 0
    %1791 = vmatpush1.bf16.msra.mxu0 0
    %1792 = vmatprep.subr.bf16.mxu0 0
    %1793 = vmatpush1.bf16.msra.mxu0 0
    %1794 = vmatprep.subr.bf16.mxu0 0
    %1795 = vmatpush1.bf16.msra.mxu0 0
    %1796 = vmatprep.subr.bf16.mxu0 0
    %1797 = vmatpush1.bf16.msra.mxu0 0
    %1798 = vmatprep.subr.bf16.mxu0 0
    %1799 = vmatpush1.bf16.msra.mxu0 0
    %1800 = vmatprep.subr.bf16.mxu0 0
    %1801 = vmatpush1.bf16.msra.mxu0 0
    %1802 = vmatprep.subr.bf16.mxu0 0
    %1803 = vmatpush1.bf16.msra.mxu0 0
    %1804 = vmatprep.subr.bf16.mxu0 0
    %1805 = vmatpush1.bf16.msra.mxu0 0
    %1806 = vmatprep.subr.bf16.mxu0 0
    %1807 = vmatpush1.bf16.msra.mxu0 0
    %1808 = vmatprep.subr.bf16.mxu0 0
    %1809 = vmatpush1.bf16.msra.mxu0 0
    %1810 = vmatprep.mubr.bf16.mxu0 0
    %1811 = vmatmul.mubr.bf16.gmra.mrb[0].mxu0 %v1776
    %v1812 = vpop.f32.mrb[0].mxu0
    %v1813 = vadd.f32 %v1748, %v1812
    %v1814 = vpop.f32.mrb[0].mxu0
    %v1815 = vpop.f32.mrb[0].mxu0
    %v1816 = vadd.f32 %v1748, %v1815
    %v1817 = vpop.f32.mrb[0].mxu0
    %1818 = vdwg.mxu0
    %v1819 = vadd.f32 %v1813, %v1646
    %v1820 = vadd.f32 %v1816, %v1647
    %v1821 = vld [vmem:[%s18] sm:$0x1]
    %v1822 = vld [vmem:[%s19] sm:$0x1]
    %v1823 = vsel %vm83, %v1819, 0.0
    %1824 = vadd.xlane.f32.xlu0 %v1823
    %v1825 = vpop.xlane.xlu0 %1824
    %v1826 = vsel %vm83, %v1820, 0.0
    %1827 = vadd.xlane.f32.xlu0 %v1826
    %v1828 = vpop.xlane.xlu0 %1827
    %v1829 = vmul.f32 %v1825, %v90
    %v1830 = vmul.f32 %v1828, %v90
    %v1831 = vsub.f32 %v1819, %v1829
    %v1832 = vsub.f32 %v1820, %v1830
    %v1833 = vmul.f32 %v1831, %v1831
    %v1834 = vmul.f32 %v1832, %v1832
    %v1835 = vsel %vm83, %v1833, 0.0
    %1836 = vadd.xlane.f32.xlu0 %v1835
    %v1837 = vpop.xlane.xlu0 %1836
    %v1838 = vsel %vm83, %v1834, 0.0
    %1839 = vadd.xlane.f32.xlu0 %v1838
    %v1840 = vpop.xlane.xlu0 %1839
    %v1841 = vmul.f32 %v1837, %v90
    %v1842 = vmul.f32 %v1840, %v90
    %v1843 = vadd.f32 %v1841, 1e-12
    %v1844 = vadd.f32 %v1842, 1e-12
    %v1845 = vrsqrt.pop %v1843
    %v1846 = vrsqrt.pop %v1844
    %v1847 = vmul.f32 %v1831, %v1845
    %v1848 = vmul.f32 %v1832, %v1846
    %v1850 = vlaneseq
    %v1851 = vshrl.u32 %v1850, 7
    %v1852 = vsub.s32 0, %v1851
    %v1853 = vrot.slane %v1821, %v1852
    %v1855 = vmul.f32 %v1847, %v1853
    %v1856 = vmul.f32 %v1848, %v1853
    %v1858 = vlaneseq
    %v1859 = vshrl.u32 %v1858, 7
    %v1860 = vsub.s32 0, %v1859
    %v1861 = vrot.slane %v1822, %v1860
    %v1863 = vadd.f32 %v1855, %v1861
    %v1864 = vadd.f32 %v1856, %v1861
    %s1865 = scalar_lea.vmem %s4, 64
    %v1866 = vld [vmem:[%s1865] sm:$0xf]
    %v1867 = vld [vmem:[%s1865 + $0x4] sm:$0xf]
    %v1868 = vld [vmem:[%s1865 + $0x8] sm:$0xf]
    %v1869 = vld [vmem:[%s1865 + $0xc] sm:$0xf]
    %v1870 = vpack.c.bf16 %v1864, %v1863
    %s1871 = scalar_lea.vmem %s5, 4
    %v1872 = vld [vmem:[%s1871] sm:$0x1]
    %v1874 = vlaneseq
    %v1875 = vshrl.u32 %v1874, 7
    %v1876 = vsub.s32 0, %v1875
    %v1877 = vrot.slane %v1872, %v1876
    %v1883 = vunpack.c.l.b16 %v1866
    %v1884 = vunpack.c.l.b16 %v1867
    %v1885 = vunpack.c.l.b16 %v1868
    %v1886 = vunpack.c.l.b16 %v1869
    %v1887 = vpack.c.b16 %v1884, %v1883
    %v1888 = vpack.c.b16 %v1886, %v1885
    %v1892 = vsel %vm83, %v1870, 0
    %1894 = vmatprep.subr.bf16.mxu0 0
    %1895 = vmatpush1.bf16.msra.mxu0 %v1887
    %1896 = vmatprep.subr.bf16.mxu0 0
    %1897 = vmatpush1.bf16.msra.mxu0 %v1888
    %1898 = vmatprep.subr.bf16.mxu0 0
    %1899 = vmatpush1.bf16.msra.mxu0 0
    %1900 = vmatprep.subr.bf16.mxu0 0
    %1901 = vmatpush1.bf16.msra.mxu0 0
    %1902 = vmatprep.subr.bf16.mxu0 0
    %1903 = vmatpush1.bf16.msra.mxu0 0
    %1904 = vmatprep.subr.bf16.mxu0 0
    %1905 = vmatpush1.bf16.msra.mxu0 0
    %1906 = vmatprep.subr.bf16.mxu0 0
    %1907 = vmatpush1.bf16.msra.mxu0 0
    %1908 = vmatprep.subr.bf16.mxu0 0
    %1909 = vmatpush1.bf16.msra.mxu0 0
    %1910 = vmatprep.subr.bf16.mxu0 0
    %1911 = vmatpush1.bf16.msra.mxu0 0
    %1912 = vmatprep.subr.bf16.mxu0 0
    %1913 = vmatpush1.bf16.msra.mxu0 0
    %1914 = vmatprep.subr.bf16.mxu0 0
    %1915 = vmatpush1.bf16.msra.mxu0 0
    %1916 = vmatprep.subr.bf16.mxu0 0
    %1917 = vmatpush1.bf16.msra.mxu0 0
    %1918 = vmatprep.subr.bf16.mxu0 0
    %1919 = vmatpush1.bf16.msra.mxu0 0
    %1920 = vmatprep.subr.bf16.mxu0 0
    %1921 = vmatpush1.bf16.msra.mxu0 0
    %1922 = vmatprep.subr.bf16.mxu0 0
    %1923 = vmatpush1.bf16.msra.mxu0 0
    %1924 = vmatprep.subr.bf16.mxu0 0
    %1925 = vmatpush1.bf16.msra.mxu0 0
    %1926 = vmatprep.mubr.bf16.mxu0 0
    %1927 = vmatmul.mubr.bf16.gmra.mrb[0].mxu0 %v1892
    %v1928 = vpop.f32.mrb[0].mxu0
    %v1929 = vadd.f32 %v1877, %v1928
    %v1930 = vpop.f32.mrb[0].mxu0
    %v1931 = vpop.f32.mrb[0].mxu0
    %v1932 = vadd.f32 %v1877, %v1931
    %v1933 = vpop.f32.mrb[0].mxu0
    %1934 = vdwg.mxu0
    %s1935 = scalar_lea.vmem %s6, 64
    %v1936 = vld [vmem:[%s1935] sm:$0xf]
    %v1937 = vld [vmem:[%s1935 + $0x4] sm:$0xf]
    %v1938 = vld [vmem:[%s1935 + $0x8] sm:$0xf]
    %v1939 = vld [vmem:[%s1935 + $0xc] sm:$0xf]
    %s1940 = scalar_lea.vmem %s7, 4
    %v1941 = vld [vmem:[%s1940] sm:$0x1]
    %v1943 = vlaneseq
    %v1944 = vshrl.u32 %v1943, 7
    %v1945 = vsub.s32 0, %v1944
    %v1946 = vrot.slane %v1941, %v1945
    %v1952 = vunpack.c.l.b16 %v1936
    %v1953 = vunpack.c.l.b16 %v1937
    %v1954 = vunpack.c.l.b16 %v1938
    %v1955 = vunpack.c.l.b16 %v1939
    %v1956 = vpack.c.b16 %v1953, %v1952
    %v1957 = vpack.c.b16 %v1955, %v1954
    %1960 = vmatprep.subr.bf16.mxu0 0
    %1961 = vmatpush1.bf16.msra.mxu0 %v1956
    %1962 = vmatprep.subr.bf16.mxu0 0
    %1963 = vmatpush1.bf16.msra.mxu0 %v1957
    %1964 = vmatprep.subr.bf16.mxu0 0
    %1965 = vmatpush1.bf16.msra.mxu0 0
    %1966 = vmatprep.subr.bf16.mxu0 0
    %1967 = vmatpush1.bf16.msra.mxu0 0
    %1968 = vmatprep.subr.bf16.mxu0 0
    %1969 = vmatpush1.bf16.msra.mxu0 0
    %1970 = vmatprep.subr.bf16.mxu0 0
    %1971 = vmatpush1.bf16.msra.mxu0 0
    %1972 = vmatprep.subr.bf16.mxu0 0
    %1973 = vmatpush1.bf16.msra.mxu0 0
    %1974 = vmatprep.subr.bf16.mxu0 0
    %1975 = vmatpush1.bf16.msra.mxu0 0
    %1976 = vmatprep.subr.bf16.mxu0 0
    %1977 = vmatpush1.bf16.msra.mxu0 0
    %1978 = vmatprep.subr.bf16.mxu0 0
    %1979 = vmatpush1.bf16.msra.mxu0 0
    %1980 = vmatprep.subr.bf16.mxu0 0
    %1981 = vmatpush1.bf16.msra.mxu0 0
    %1982 = vmatprep.subr.bf16.mxu0 0
    %1983 = vmatpush1.bf16.msra.mxu0 0
    %1984 = vmatprep.subr.bf16.mxu0 0
    %1985 = vmatpush1.bf16.msra.mxu0 0
    %1986 = vmatprep.subr.bf16.mxu0 0
    %1987 = vmatpush1.bf16.msra.mxu0 0
    %1988 = vmatprep.subr.bf16.mxu0 0
    %1989 = vmatpush1.bf16.msra.mxu0 0
    %1990 = vmatprep.subr.bf16.mxu0 0
    %1991 = vmatpush1.bf16.msra.mxu0 0
    %1992 = vmatprep.mubr.bf16.mxu0 0
    %1993 = vmatmul.mubr.bf16.gmra.mrb[0].mxu0 %v1892
    %v1994 = vpop.f32.mrb[0].mxu0
    %v1995 = vadd.f32 %v1946, %v1994
    %v1996 = vpop.f32.mrb[0].mxu0
    %v1997 = vpop.f32.mrb[0].mxu0
    %v1998 = vadd.f32 %v1946, %v1997
    %v1999 = vpop.f32.mrb[0].mxu0
    %2000 = vdwg.mxu0
    %s2001 = scalar_lea.vmem %s8, 64
    %v2002 = vld [vmem:[%s2001] sm:$0xf]
    %v2003 = vld [vmem:[%s2001 + $0x4] sm:$0xf]
    %v2004 = vld [vmem:[%s2001 + $0x8] sm:$0xf]
    %v2005 = vld [vmem:[%s2001 + $0xc] sm:$0xf]
    %s2006 = scalar_lea.vmem %s9, 4
    %v2007 = vld [vmem:[%s2006] sm:$0x1]
    %v2009 = vlaneseq
    %v2010 = vshrl.u32 %v2009, 7
    %v2011 = vsub.s32 0, %v2010
    %v2012 = vrot.slane %v2007, %v2011
    %v2018 = vunpack.c.l.b16 %v2002
    %v2019 = vunpack.c.l.b16 %v2003
    %v2020 = vunpack.c.l.b16 %v2004
    %v2021 = vunpack.c.l.b16 %v2005
    %v2022 = vpack.c.b16 %v2019, %v2018
    %v2023 = vpack.c.b16 %v2021, %v2020
    %2026 = vmatprep.subr.bf16.mxu0 0
    %2027 = vmatpush1.bf16.msra.mxu0 %v2022
    %2028 = vmatprep.subr.bf16.mxu0 0
    %2029 = vmatpush1.bf16.msra.mxu0 %v2023
    %2030 = vmatprep.subr.bf16.mxu0 0
    %2031 = vmatpush1.bf16.msra.mxu0 0
    %2032 = vmatprep.subr.bf16.mxu0 0
    %2033 = vmatpush1.bf16.msra.mxu0 0
    %2034 = vmatprep.subr.bf16.mxu0 0
    %2035 = vmatpush1.bf16.msra.mxu0 0
    %2036 = vmatprep.subr.bf16.mxu0 0
    %2037 = vmatpush1.bf16.msra.mxu0 0
    %2038 = vmatprep.subr.bf16.mxu0 0
    %2039 = vmatpush1.bf16.msra.mxu0 0
    %2040 = vmatprep.subr.bf16.mxu0 0
    %2041 = vmatpush1.bf16.msra.mxu0 0
    %2042 = vmatprep.subr.bf16.mxu0 0
    %2043 = vmatpush1.bf16.msra.mxu0 0
    %2044 = vmatprep.subr.bf16.mxu0 0
    %2045 = vmatpush1.bf16.msra.mxu0 0
    %2046 = vmatprep.subr.bf16.mxu0 0
    %2047 = vmatpush1.bf16.msra.mxu0 0
    %2048 = vmatprep.subr.bf16.mxu0 0
    %2049 = vmatpush1.bf16.msra.mxu0 0
    %2050 = vmatprep.subr.bf16.mxu0 0
    %2051 = vmatpush1.bf16.msra.mxu0 0
    %2052 = vmatprep.subr.bf16.mxu0 0
    %2053 = vmatpush1.bf16.msra.mxu0 0
    %2054 = vmatprep.subr.bf16.mxu0 0
    %2055 = vmatpush1.bf16.msra.mxu0 0
    %2056 = vmatprep.subr.bf16.mxu0 0
    %2057 = vmatpush1.bf16.msra.mxu0 0
    %2058 = vmatprep.mubr.bf16.mxu0 0
    %2059 = vmatmul.mubr.bf16.gmra.mrb[0].mxu0 %v1892
    %v2060 = vpop.f32.mrb[0].mxu0
    %v2061 = vadd.f32 %v2012, %v2060
    %v2062 = vpop.f32.mrb[0].mxu0
    %v2063 = vpop.f32.mrb[0].mxu0
    %v2064 = vadd.f32 %v2012, %v2063
    %v2065 = vpop.f32.mrb[0].mxu0
    %2066 = vdwg.mxu0
    %v2067 = vpack.c.bf16 %v1932, %v1929
    %v2068 = vpack.c.bf16 %v1998, %v1995
    %v2070 = vsel %vm327, %v2067, 0
    %v2073 = vsel %vm327, %v2068, 0
    %2075 = vmatprep.subr.bf16.mxu0 0
    %2076 = vmatpush1.bf16.xpose.msra.mxu0 %v2073
    %2077 = vmatprep.subr.bf16.mxu0 0
    %2078 = vmatpush1.bf16.xpose.msra.mxu0 0
    %2079 = vmatprep.subr.bf16.mxu0 0
    %2080 = vmatpush1.bf16.xpose.msra.mxu0 0
    %2081 = vmatprep.subr.bf16.mxu0 0
    %2082 = vmatpush1.bf16.xpose.msra.mxu0 0
    %2083 = vmatprep.subr.bf16.mxu0 0
    %2084 = vmatpush1.bf16.xpose.msra.mxu0 0
    %2085 = vmatprep.subr.bf16.mxu0 0
    %2086 = vmatpush1.bf16.xpose.msra.mxu0 0
    %2087 = vmatprep.subr.bf16.mxu0 0
    %2088 = vmatpush1.bf16.xpose.msra.mxu0 0
    %2089 = vmatprep.subr.bf16.mxu0 0
    %2090 = vmatpush1.bf16.xpose.msra.mxu0 0
    %2091 = vmatprep.subr.bf16.mxu0 0
    %2092 = vmatpush1.bf16.xpose.msra.mxu0 0
    %2093 = vmatprep.subr.bf16.mxu0 0
    %2094 = vmatpush1.bf16.xpose.msra.mxu0 0
    %2095 = vmatprep.subr.bf16.mxu0 0
    %2096 = vmatpush1.bf16.xpose.msra.mxu0 0
    %2097 = vmatprep.subr.bf16.mxu0 0
    %2098 = vmatpush1.bf16.xpose.msra.mxu0 0
    %2099 = vmatprep.subr.bf16.mxu0 0
    %2100 = vmatpush1.bf16.xpose.msra.mxu0 0
    %2101 = vmatprep.subr.bf16.mxu0 0
    %2102 = vmatpush1.bf16.xpose.msra.mxu0 0
    %2103 = vmatprep.subr.bf16.mxu0 0
    %2104 = vmatpush1.bf16.xpose.msra.mxu0 0
    %2105 = vmatprep.subr.bf16.mxu0 0
    %2106 = vmatpush1.bf16.xpose.msra.mxu0 0
    %2107 = vmatprep.mubr.bf16.mxu0 0
    %2108 = vmatmul.mubr.bf16.gmra.mrb[0].mxu0 %v2070
    %v2109 = vpop.f32.mrb[0].mxu0
    %v2110 = vadd.f32 %v127, %v2109
    %v2111 = vpop.f32.mrb[0].mxu0
    %v2112 = vpop.f32.mrb[0].mxu0
    %v2113 = vadd.f32 %v128, %v2112
    %v2114 = vpop.f32.mrb[0].mxu0
    %2115 = vdwg.mxu0
    %v2116 = vsel %vm375, %v2110, -inf
    %2117 = vmax.xlane.f32.xlu0 %v2116
    %v2118 = vpop.xlane.xlu0 %2117
    %v2119 = vsel %vm375, %v2113, -inf
    %2120 = vmax.xlane.f32.xlu0 %v2119
    %v2121 = vpop.xlane.xlu0 %2120
    %v2122 = vsub.f32 %v2110, %v2118
    %v2123 = vsub.f32 %v2113, %v2121
    %v2124 = vmul.f32 %v2122, 1.442695
    %v2125 = vpow.pop %v2124
    %v2126 = vmul.f32 %v2123, 1.442695
    %v2127 = vpow.pop %v2126
    %v2128 = vsel %vm375, %v2125, 0.0
    %2129 = vadd.xlane.f32.xlu0 %v2128
    %v2130 = vpop.xlane.xlu0 %2129
    %v2131 = vsel %vm375, %v2127, 0.0
    %2132 = vadd.xlane.f32.xlu0 %v2131
    %v2133 = vpop.xlane.xlu0 %2132
    %v2134 = vrcp.pop %v2130
    %v2135 = vrcp.pop %v2133
    %v2136 = vmul.f32 %v2125, %v2134
    %v2137 = vmul.f32 %v2127, %v2135
    %v2138 = vpack.c.bf16 %v2137, %v2136
    %v2139 = vpack.c.bf16 %v2064, %v2061
    %v2141 = vsel %vm375, %v2138, 0
    %2143 = vmatprep.subr.bf16.mxu0 0
    %2144 = vmatpush1.bf16.msra.mxu0 %v2139
    %2145 = vmatprep.subr.bf16.mxu0 0
    %2146 = vmatpush1.bf16.msra.mxu0 0
    %2147 = vmatprep.subr.bf16.mxu0 0
    %2148 = vmatpush1.bf16.msra.mxu0 0
    %2149 = vmatprep.subr.bf16.mxu0 0
    %2150 = vmatpush1.bf16.msra.mxu0 0
    %2151 = vmatprep.subr.bf16.mxu0 0
    %2152 = vmatpush1.bf16.msra.mxu0 0
    %2153 = vmatprep.subr.bf16.mxu0 0
    %2154 = vmatpush1.bf16.msra.mxu0 0
    %2155 = vmatprep.subr.bf16.mxu0 0
    %2156 = vmatpush1.bf16.msra.mxu0 0
    %2157 = vmatprep.subr.bf16.mxu0 0
    %2158 = vmatpush1.bf16.msra.mxu0 0
    %2159 = vmatprep.subr.bf16.mxu0 0
    %2160 = vmatpush1.bf16.msra.mxu0 0
    %2161 = vmatprep.subr.bf16.mxu0 0
    %2162 = vmatpush1.bf16.msra.mxu0 0
    %2163 = vmatprep.subr.bf16.mxu0 0
    %2164 = vmatpush1.bf16.msra.mxu0 0
    %2165 = vmatprep.subr.bf16.mxu0 0
    %2166 = vmatpush1.bf16.msra.mxu0 0
    %2167 = vmatprep.subr.bf16.mxu0 0
    %2168 = vmatpush1.bf16.msra.mxu0 0
    %2169 = vmatprep.subr.bf16.mxu0 0
    %2170 = vmatpush1.bf16.msra.mxu0 0
    %2171 = vmatprep.subr.bf16.mxu0 0
    %2172 = vmatpush1.bf16.msra.mxu0 0
    %2173 = vmatprep.subr.bf16.mxu0 0
    %2174 = vmatpush1.bf16.msra.mxu0 0
    %2175 = vmatprep.mubr.bf16.mxu0 0
    %2176 = vmatmul.mubr.bf16.gmra.mrb[0].mxu0 %v2141
    %v2177 = vpop.f32.mrb[0].mxu0
    %v2178 = vadd.f32 0.0, %v2177
    %v2179 = vpop.f32.mrb[0].mxu0
    %v2180 = vpop.f32.mrb[0].mxu0
    %v2181 = vadd.f32 0.0, %v2180
    %v2182 = vpop.f32.mrb[0].mxu0
    %2183 = vdwg.mxu0
    %s2184 = scalar_lea.vmem %s10, 16
    %v2185 = vld [vmem:[%s2184] sm:$0xf]
    %v2186 = vpack.c.bf16 %v2181, %v2178
    %s2187 = scalar_lea.vmem %s4, 80
    %v2188 = vld [vmem:[%s2187] sm:$0xf]
    %v2189 = vld [vmem:[%s2187 + $0x4] sm:$0xf]
    %v2190 = vld [vmem:[%s2187 + $0x8] sm:$0xf]
    %v2191 = vld [vmem:[%s2187 + $0xc] sm:$0xf]
    %s2192 = scalar_lea.vmem %s5, 5
    %v2193 = vld [vmem:[%s2192] sm:$0x1]
    %v2195 = vlaneseq
    %v2196 = vshrl.u32 %v2195, 7
    %v2197 = vsub.s32 0, %v2196
    %v2198 = vrot.slane %v2193, %v2197
    %v2204 = vunpack.c.l.b16 %v2188
    %v2205 = vunpack.c.l.b16 %v2189
    %v2206 = vunpack.c.l.b16 %v2190
    %v2207 = vunpack.c.l.b16 %v2191
    %v2208 = vpack.c.b16 %v2205, %v2204
    %v2209 = vpack.c.b16 %v2207, %v2206
    %2212 = vmatprep.subr.bf16.mxu0 0
    %2213 = vmatpush1.bf16.msra.mxu0 %v2208
    %2214 = vmatprep.subr.bf16.mxu0 0
    %2215 = vmatpush1.bf16.msra.mxu0 %v2209
    %2216 = vmatprep.subr.bf16.mxu0 0
    %2217 = vmatpush1.bf16.msra.mxu0 0
    %2218 = vmatprep.subr.bf16.mxu0 0
    %2219 = vmatpush1.bf16.msra.mxu0 0
    %2220 = vmatprep.subr.bf16.mxu0 0
    %2221 = vmatpush1.bf16.msra.mxu0 0
    %2222 = vmatprep.subr.bf16.mxu0 0
    %2223 = vmatpush1.bf16.msra.mxu0 0
    %2224 = vmatprep.subr.bf16.mxu0 0
    %2225 = vmatpush1.bf16.msra.mxu0 0
    %2226 = vmatprep.subr.bf16.mxu0 0
    %2227 = vmatpush1.bf16.msra.mxu0 0
    %2228 = vmatprep.subr.bf16.mxu0 0
    %2229 = vmatpush1.bf16.msra.mxu0 0
    %2230 = vmatprep.subr.bf16.mxu0 0
    %2231 = vmatpush1.bf16.msra.mxu0 0
    %2232 = vmatprep.subr.bf16.mxu0 0
    %2233 = vmatpush1.bf16.msra.mxu0 0
    %2234 = vmatprep.subr.bf16.mxu0 0
    %2235 = vmatpush1.bf16.msra.mxu0 0
    %2236 = vmatprep.subr.bf16.mxu0 0
    %2237 = vmatpush1.bf16.msra.mxu0 0
    %2238 = vmatprep.subr.bf16.mxu0 0
    %2239 = vmatpush1.bf16.msra.mxu0 0
    %2240 = vmatprep.subr.bf16.mxu0 0
    %2241 = vmatpush1.bf16.msra.mxu0 0
    %2242 = vmatprep.subr.bf16.mxu0 0
    %2243 = vmatpush1.bf16.msra.mxu0 0
    %2244 = vmatprep.mubr.bf16.mxu0 0
    %2245 = vmatmul.mubr.bf16.gmra.mrb[0].mxu0 %v1892
    %v2246 = vpop.f32.mrb[0].mxu0
    %v2247 = vadd.f32 %v2198, %v2246
    %v2248 = vpop.f32.mrb[0].mxu0
    %v2249 = vpop.f32.mrb[0].mxu0
    %v2250 = vadd.f32 %v2198, %v2249
    %v2251 = vpop.f32.mrb[0].mxu0
    %2252 = vdwg.mxu0
    %s2253 = scalar_lea.vmem %s6, 80
    %v2254 = vld [vmem:[%s2253] sm:$0xf]
    %v2255 = vld [vmem:[%s2253 + $0x4] sm:$0xf]
    %v2256 = vld [vmem:[%s2253 + $0x8] sm:$0xf]
    %v2257 = vld [vmem:[%s2253 + $0xc] sm:$0xf]
    %s2258 = scalar_lea.vmem %s7, 5
    %v2259 = vld [vmem:[%s2258] sm:$0x1]
    %v2261 = vlaneseq
    %v2262 = vshrl.u32 %v2261, 7
    %v2263 = vsub.s32 0, %v2262
    %v2264 = vrot.slane %v2259, %v2263
    %v2270 = vunpack.c.l.b16 %v2254
    %v2271 = vunpack.c.l.b16 %v2255
    %v2272 = vunpack.c.l.b16 %v2256
    %v2273 = vunpack.c.l.b16 %v2257
    %v2274 = vpack.c.b16 %v2271, %v2270
    %v2275 = vpack.c.b16 %v2273, %v2272
    %2278 = vmatprep.subr.bf16.mxu0 0
    %2279 = vmatpush1.bf16.msra.mxu0 %v2274
    %2280 = vmatprep.subr.bf16.mxu0 0
    %2281 = vmatpush1.bf16.msra.mxu0 %v2275
    %2282 = vmatprep.subr.bf16.mxu0 0
    %2283 = vmatpush1.bf16.msra.mxu0 0
    %2284 = vmatprep.subr.bf16.mxu0 0
    %2285 = vmatpush1.bf16.msra.mxu0 0
    %2286 = vmatprep.subr.bf16.mxu0 0
    %2287 = vmatpush1.bf16.msra.mxu0 0
    %2288 = vmatprep.subr.bf16.mxu0 0
    %2289 = vmatpush1.bf16.msra.mxu0 0
    %2290 = vmatprep.subr.bf16.mxu0 0
    %2291 = vmatpush1.bf16.msra.mxu0 0
    %2292 = vmatprep.subr.bf16.mxu0 0
    %2293 = vmatpush1.bf16.msra.mxu0 0
    %2294 = vmatprep.subr.bf16.mxu0 0
    %2295 = vmatpush1.bf16.msra.mxu0 0
    %2296 = vmatprep.subr.bf16.mxu0 0
    %2297 = vmatpush1.bf16.msra.mxu0 0
    %2298 = vmatprep.subr.bf16.mxu0 0
    %2299 = vmatpush1.bf16.msra.mxu0 0
    %2300 = vmatprep.subr.bf16.mxu0 0
    %2301 = vmatpush1.bf16.msra.mxu0 0
    %2302 = vmatprep.subr.bf16.mxu0 0
    %2303 = vmatpush1.bf16.msra.mxu0 0
    %2304 = vmatprep.subr.bf16.mxu0 0
    %2305 = vmatpush1.bf16.msra.mxu0 0
    %2306 = vmatprep.subr.bf16.mxu0 0
    %2307 = vmatpush1.bf16.msra.mxu0 0
    %2308 = vmatprep.subr.bf16.mxu0 0
    %2309 = vmatpush1.bf16.msra.mxu0 0
    %2310 = vmatprep.mubr.bf16.mxu0 0
    %2311 = vmatmul.mubr.bf16.gmra.mrb[0].mxu0 %v1892
    %v2312 = vpop.f32.mrb[0].mxu0
    %v2313 = vadd.f32 %v2264, %v2312
    %v2314 = vpop.f32.mrb[0].mxu0
    %v2315 = vpop.f32.mrb[0].mxu0
    %v2316 = vadd.f32 %v2264, %v2315
    %v2317 = vpop.f32.mrb[0].mxu0
    %2318 = vdwg.mxu0
    %s2319 = scalar_lea.vmem %s8, 80
    %v2320 = vld [vmem:[%s2319] sm:$0xf]
    %v2321 = vld [vmem:[%s2319 + $0x4] sm:$0xf]
    %v2322 = vld [vmem:[%s2319 + $0x8] sm:$0xf]
    %v2323 = vld [vmem:[%s2319 + $0xc] sm:$0xf]
    %s2324 = scalar_lea.vmem %s9, 5
    %v2325 = vld [vmem:[%s2324] sm:$0x1]
    %v2327 = vlaneseq
    %v2328 = vshrl.u32 %v2327, 7
    %v2329 = vsub.s32 0, %v2328
    %v2330 = vrot.slane %v2325, %v2329
    %v2336 = vunpack.c.l.b16 %v2320
    %v2337 = vunpack.c.l.b16 %v2321
    %v2338 = vunpack.c.l.b16 %v2322
    %v2339 = vunpack.c.l.b16 %v2323
    %v2340 = vpack.c.b16 %v2337, %v2336
    %v2341 = vpack.c.b16 %v2339, %v2338
    %2344 = vmatprep.subr.bf16.mxu0 0
    %2345 = vmatpush1.bf16.msra.mxu0 %v2340
    %2346 = vmatprep.subr.bf16.mxu0 0
    %2347 = vmatpush1.bf16.msra.mxu0 %v2341
    %2348 = vmatprep.subr.bf16.mxu0 0
    %2349 = vmatpush1.bf16.msra.mxu0 0
    %2350 = vmatprep.subr.bf16.mxu0 0
    %2351 = vmatpush1.bf16.msra.mxu0 0
    %2352 = vmatprep.subr.bf16.mxu0 0
    %2353 = vmatpush1.bf16.msra.mxu0 0
    %2354 = vmatprep.subr.bf16.mxu0 0
    %2355 = vmatpush1.bf16.msra.mxu0 0
    %2356 = vmatprep.subr.bf16.mxu0 0
    %2357 = vmatpush1.bf16.msra.mxu0 0
    %2358 = vmatprep.subr.bf16.mxu0 0
    %2359 = vmatpush1.bf16.msra.mxu0 0
    %2360 = vmatprep.subr.bf16.mxu0 0
    %2361 = vmatpush1.bf16.msra.mxu0 0
    %2362 = vmatprep.subr.bf16.mxu0 0
    %2363 = vmatpush1.bf16.msra.mxu0 0
    %2364 = vmatprep.subr.bf16.mxu0 0
    %2365 = vmatpush1.bf16.msra.mxu0 0
    %2366 = vmatprep.subr.bf16.mxu0 0
    %2367 = vmatpush1.bf16.msra.mxu0 0
    %2368 = vmatprep.subr.bf16.mxu0 0
    %2369 = vmatpush1.bf16.msra.mxu0 0
    %2370 = vmatprep.subr.bf16.mxu0 0
    %2371 = vmatpush1.bf16.msra.mxu0 0
    %2372 = vmatprep.subr.bf16.mxu0 0
    %2373 = vmatpush1.bf16.msra.mxu0 0
    %2374 = vmatprep.subr.bf16.mxu0 0
    %2375 = vmatpush1.bf16.msra.mxu0 0
    %2376 = vmatprep.mubr.bf16.mxu0 0
    %2377 = vmatmul.mubr.bf16.gmra.mrb[0].mxu0 %v1892
    %v2378 = vpop.f32.mrb[0].mxu0
    %v2379 = vadd.f32 %v2330, %v2378
    %v2380 = vpop.f32.mrb[0].mxu0
    %v2381 = vpop.f32.mrb[0].mxu0
    %v2382 = vadd.f32 %v2330, %v2381
    %v2383 = vpop.f32.mrb[0].mxu0
    %2384 = vdwg.mxu0
    %v2385 = vpack.c.bf16 %v2250, %v2247
    %v2386 = vpack.c.bf16 %v2316, %v2313
    %v2388 = vsel %vm327, %v2385, 0
    %v2391 = vsel %vm327, %v2386, 0
    %2393 = vmatprep.subr.bf16.mxu0 0
    %2394 = vmatpush1.bf16.xpose.msra.mxu0 %v2391
    %2395 = vmatprep.subr.bf16.mxu0 0
    %2396 = vmatpush1.bf16.xpose.msra.mxu0 0
    %2397 = vmatprep.subr.bf16.mxu0 0
    %2398 = vmatpush1.bf16.xpose.msra.mxu0 0
    %2399 = vmatprep.subr.bf16.mxu0 0
    %2400 = vmatpush1.bf16.xpose.msra.mxu0 0
    %2401 = vmatprep.subr.bf16.mxu0 0
    %2402 = vmatpush1.bf16.xpose.msra.mxu0 0
    %2403 = vmatprep.subr.bf16.mxu0 0
    %2404 = vmatpush1.bf16.xpose.msra.mxu0 0
    %2405 = vmatprep.subr.bf16.mxu0 0
    %2406 = vmatpush1.bf16.xpose.msra.mxu0 0
    %2407 = vmatprep.subr.bf16.mxu0 0
    %2408 = vmatpush1.bf16.xpose.msra.mxu0 0
    %2409 = vmatprep.subr.bf16.mxu0 0
    %2410 = vmatpush1.bf16.xpose.msra.mxu0 0
    %2411 = vmatprep.subr.bf16.mxu0 0
    %2412 = vmatpush1.bf16.xpose.msra.mxu0 0
    %2413 = vmatprep.subr.bf16.mxu0 0
    %2414 = vmatpush1.bf16.xpose.msra.mxu0 0
    %2415 = vmatprep.subr.bf16.mxu0 0
    %2416 = vmatpush1.bf16.xpose.msra.mxu0 0
    %2417 = vmatprep.subr.bf16.mxu0 0
    %2418 = vmatpush1.bf16.xpose.msra.mxu0 0
    %2419 = vmatprep.subr.bf16.mxu0 0
    %2420 = vmatpush1.bf16.xpose.msra.mxu0 0
    %2421 = vmatprep.subr.bf16.mxu0 0
    %2422 = vmatpush1.bf16.xpose.msra.mxu0 0
    %2423 = vmatprep.subr.bf16.mxu0 0
    %2424 = vmatpush1.bf16.xpose.msra.mxu0 0
    %2425 = vmatprep.mubr.bf16.mxu0 0
    %2426 = vmatmul.mubr.bf16.gmra.mrb[0].mxu0 %v2388
    %v2427 = vpop.f32.mrb[0].mxu0
    %v2428 = vadd.f32 %v127, %v2427
    %v2429 = vpop.f32.mrb[0].mxu0
    %v2430 = vpop.f32.mrb[0].mxu0
    %v2431 = vadd.f32 %v128, %v2430
    %v2432 = vpop.f32.mrb[0].mxu0
    %2433 = vdwg.mxu0
    %v2434 = vsel %vm375, %v2428, -inf
    %2435 = vmax.xlane.f32.xlu0 %v2434
    %v2436 = vpop.xlane.xlu0 %2435
    %v2437 = vsel %vm375, %v2431, -inf
    %2438 = vmax.xlane.f32.xlu0 %v2437
    %v2439 = vpop.xlane.xlu0 %2438
    %v2440 = vsub.f32 %v2428, %v2436
    %v2441 = vsub.f32 %v2431, %v2439
    %v2442 = vmul.f32 %v2440, 1.442695
    %v2443 = vpow.pop %v2442
    %v2444 = vmul.f32 %v2441, 1.442695
    %v2445 = vpow.pop %v2444
    %v2446 = vsel %vm375, %v2443, 0.0
    %2447 = vadd.xlane.f32.xlu0 %v2446
    %v2448 = vpop.xlane.xlu0 %2447
    %v2449 = vsel %vm375, %v2445, 0.0
    %2450 = vadd.xlane.f32.xlu0 %v2449
    %v2451 = vpop.xlane.xlu0 %2450
    %v2452 = vrcp.pop %v2448
    %v2453 = vrcp.pop %v2451
    %v2454 = vmul.f32 %v2443, %v2452
    %v2455 = vmul.f32 %v2445, %v2453
    %v2456 = vpack.c.bf16 %v2455, %v2454
    %v2457 = vpack.c.bf16 %v2382, %v2379
    %v2459 = vsel %vm375, %v2456, 0
    %2461 = vmatprep.subr.bf16.mxu0 0
    %2462 = vmatpush1.bf16.msra.mxu0 %v2457
    %2463 = vmatprep.subr.bf16.mxu0 0
    %2464 = vmatpush1.bf16.msra.mxu0 0
    %2465 = vmatprep.subr.bf16.mxu0 0
    %2466 = vmatpush1.bf16.msra.mxu0 0
    %2467 = vmatprep.subr.bf16.mxu0 0
    %2468 = vmatpush1.bf16.msra.mxu0 0
    %2469 = vmatprep.subr.bf16.mxu0 0
    %2470 = vmatpush1.bf16.msra.mxu0 0
    %2471 = vmatprep.subr.bf16.mxu0 0
    %2472 = vmatpush1.bf16.msra.mxu0 0
    %2473 = vmatprep.subr.bf16.mxu0 0
    %2474 = vmatpush1.bf16.msra.mxu0 0
    %2475 = vmatprep.subr.bf16.mxu0 0
    %2476 = vmatpush1.bf16.msra.mxu0 0
    %2477 = vmatprep.subr.bf16.mxu0 0
    %2478 = vmatpush1.bf16.msra.mxu0 0
    %2479 = vmatprep.subr.bf16.mxu0 0
    %2480 = vmatpush1.bf16.msra.mxu0 0
    %2481 = vmatprep.subr.bf16.mxu0 0
    %2482 = vmatpush1.bf16.msra.mxu0 0
    %2483 = vmatprep.subr.bf16.mxu0 0
    %2484 = vmatpush1.bf16.msra.mxu0 0
    %2485 = vmatprep.subr.bf16.mxu0 0
    %2486 = vmatpush1.bf16.msra.mxu0 0
    %2487 = vmatprep.subr.bf16.mxu0 0
    %2488 = vmatpush1.bf16.msra.mxu0 0
    %2489 = vmatprep.subr.bf16.mxu0 0
    %2490 = vmatpush1.bf16.msra.mxu0 0
    %2491 = vmatprep.subr.bf16.mxu0 0
    %2492 = vmatpush1.bf16.msra.mxu0 0
    %2493 = vmatprep.mubr.bf16.mxu0 0
    %2494 = vmatmul.mubr.bf16.gmra.mrb[0].mxu0 %v2459
    %v2495 = vpop.f32.mrb[0].mxu0
    %v2496 = vadd.f32 0.0, %v2495
    %v2497 = vpop.f32.mrb[0].mxu0
    %v2498 = vpop.f32.mrb[0].mxu0
    %v2499 = vadd.f32 0.0, %v2498
    %v2500 = vpop.f32.mrb[0].mxu0
    %2501 = vdwg.mxu0
    %s2502 = scalar_lea.vmem %s10, 20
    %v2503 = vld [vmem:[%s2502] sm:$0xf]
    %v2504 = vpack.c.bf16 %v2499, %v2496
    %v2506 = vsel %vm327, %v2504, 0
    %v2509 = vsel %vm767, %v2503, 0
    %2511 = vmatprep.subr.bf16.mxu0 0
    %2512 = vmatpush1.bf16.msra.mxu0 %v2509
    %2513 = vmatprep.subr.bf16.mxu0 0
    %2514 = vmatpush1.bf16.msra.mxu0 0
    %2515 = vmatprep.subr.bf16.mxu0 0
    %2516 = vmatpush1.bf16.msra.mxu0 0
    %2517 = vmatprep.subr.bf16.mxu0 0
    %2518 = vmatpush1.bf16.msra.mxu0 0
    %2519 = vmatprep.subr.bf16.mxu0 0
    %2520 = vmatpush1.bf16.msra.mxu0 0
    %2521 = vmatprep.subr.bf16.mxu0 0
    %2522 = vmatpush1.bf16.msra.mxu0 0
    %2523 = vmatprep.subr.bf16.mxu0 0
    %2524 = vmatpush1.bf16.msra.mxu0 0
    %2525 = vmatprep.subr.bf16.mxu0 0
    %2526 = vmatpush1.bf16.msra.mxu0 0
    %2527 = vmatprep.subr.bf16.mxu0 0
    %2528 = vmatpush1.bf16.msra.mxu0 0
    %2529 = vmatprep.subr.bf16.mxu0 0
    %2530 = vmatpush1.bf16.msra.mxu0 0
    %2531 = vmatprep.subr.bf16.mxu0 0
    %2532 = vmatpush1.bf16.msra.mxu0 0
    %2533 = vmatprep.subr.bf16.mxu0 0
    %2534 = vmatpush1.bf16.msra.mxu0 0
    %2535 = vmatprep.subr.bf16.mxu0 0
    %2536 = vmatpush1.bf16.msra.mxu0 0
    %2537 = vmatprep.subr.bf16.mxu0 0
    %2538 = vmatpush1.bf16.msra.mxu0 0
    %2539 = vmatprep.subr.bf16.mxu0 0
    %2540 = vmatpush1.bf16.msra.mxu0 0
    %2541 = vmatprep.subr.bf16.mxu0 0
    %2542 = vmatpush1.bf16.msra.mxu0 0
    %2543 = vmatprep.mubr.bf16.mxu0 0
    %2544 = vmatmul.mubr.bf16.gmra.mrb[0].mxu0 %v2506
    %v2545 = vpop.f32.mrb[0].mxu0
    %v2546 = vadd.f32 0.0, %v2545
    %v2547 = vpop.f32.mrb[0].mxu0
    %v2548 = vpop.f32.mrb[0].mxu0
    %v2549 = vadd.f32 0.0, %v2548
    %v2550 = vpop.f32.mrb[0].mxu0
    %2551 = vdwg.mxu0
    %v2553 = vsel %vm327, %v2186, 0
    %v2556 = vsel %vm767, %v2185, 0
    %2558 = vmatprep.subr.bf16.mxu0 0
    %2559 = vmatpush1.bf16.msra.mxu0 %v2556
    %2560 = vmatprep.subr.bf16.mxu0 0
    %2561 = vmatpush1.bf16.msra.mxu0 0
    %2562 = vmatprep.subr.bf16.mxu0 0
    %2563 = vmatpush1.bf16.msra.mxu0 0
    %2564 = vmatprep.subr.bf16.mxu0 0
    %2565 = vmatpush1.bf16.msra.mxu0 0
    %2566 = vmatprep.subr.bf16.mxu0 0
    %2567 = vmatpush1.bf16.msra.mxu0 0
    %2568 = vmatprep.subr.bf16.mxu0 0
    %2569 = vmatpush1.bf16.msra.mxu0 0
    %2570 = vmatprep.subr.bf16.mxu0 0
    %2571 = vmatpush1.bf16.msra.mxu0 0
    %2572 = vmatprep.subr.bf16.mxu0 0
    %2573 = vmatpush1.bf16.msra.mxu0 0
    %2574 = vmatprep.subr.bf16.mxu0 0
    %2575 = vmatpush1.bf16.msra.mxu0 0
    %2576 = vmatprep.subr.bf16.mxu0 0
    %2577 = vmatpush1.bf16.msra.mxu0 0
    %2578 = vmatprep.subr.bf16.mxu0 0
    %2579 = vmatpush1.bf16.msra.mxu0 0
    %2580 = vmatprep.subr.bf16.mxu0 0
    %2581 = vmatpush1.bf16.msra.mxu0 0
    %2582 = vmatprep.subr.bf16.mxu0 0
    %2583 = vmatpush1.bf16.msra.mxu0 0
    %2584 = vmatprep.subr.bf16.mxu0 0
    %2585 = vmatpush1.bf16.msra.mxu0 0
    %2586 = vmatprep.subr.bf16.mxu0 0
    %2587 = vmatpush1.bf16.msra.mxu0 0
    %2588 = vmatprep.subr.bf16.mxu0 0
    %2589 = vmatpush1.bf16.msra.mxu0 0
    %2590 = vmatprep.mubr.bf16.mxu0 0
    %2591 = vmatmul.mubr.bf16.gmra.mrb[0].mxu0 %v2553
    %v2592 = vpop.f32.mrb[0].mxu0
    %v2593 = vadd.f32 %v2546, %v2592
    %v2594 = vpop.f32.mrb[0].mxu0
    %v2595 = vpop.f32.mrb[0].mxu0
    %v2596 = vadd.f32 %v2549, %v2595
    %v2597 = vpop.f32.mrb[0].mxu0
    %2598 = vdwg.mxu0
    %s2599 = scalar_lea.vmem %s4, 96
    %v2600 = vld [vmem:[%s2599] sm:$0xf]
    %v2601 = vld [vmem:[%s2599 + $0x4] sm:$0xf]
    %v2602 = vld [vmem:[%s2599 + $0x8] sm:$0xf]
    %v2603 = vld [vmem:[%s2599 + $0xc] sm:$0xf]
    %s2604 = scalar_lea.vmem %s5, 6
    %v2605 = vld [vmem:[%s2604] sm:$0x1]
    %v2607 = vlaneseq
    %v2608 = vshrl.u32 %v2607, 7
    %v2609 = vsub.s32 0, %v2608
    %v2610 = vrot.slane %v2605, %v2609
    %v2616 = vunpack.c.l.b16 %v2600
    %v2617 = vunpack.c.l.b16 %v2601
    %v2618 = vunpack.c.l.b16 %v2602
    %v2619 = vunpack.c.l.b16 %v2603
    %v2620 = vpack.c.b16 %v2617, %v2616
    %v2621 = vpack.c.b16 %v2619, %v2618
    %2624 = vmatprep.subr.bf16.mxu0 0
    %2625 = vmatpush1.bf16.msra.mxu0 %v2620
    %2626 = vmatprep.subr.bf16.mxu0 0
    %2627 = vmatpush1.bf16.msra.mxu0 %v2621
    %2628 = vmatprep.subr.bf16.mxu0 0
    %2629 = vmatpush1.bf16.msra.mxu0 0
    %2630 = vmatprep.subr.bf16.mxu0 0
    %2631 = vmatpush1.bf16.msra.mxu0 0
    %2632 = vmatprep.subr.bf16.mxu0 0
    %2633 = vmatpush1.bf16.msra.mxu0 0
    %2634 = vmatprep.subr.bf16.mxu0 0
    %2635 = vmatpush1.bf16.msra.mxu0 0
    %2636 = vmatprep.subr.bf16.mxu0 0
    %2637 = vmatpush1.bf16.msra.mxu0 0
    %2638 = vmatprep.subr.bf16.mxu0 0
    %2639 = vmatpush1.bf16.msra.mxu0 0
    %2640 = vmatprep.subr.bf16.mxu0 0
    %2641 = vmatpush1.bf16.msra.mxu0 0
    %2642 = vmatprep.subr.bf16.mxu0 0
    %2643 = vmatpush1.bf16.msra.mxu0 0
    %2644 = vmatprep.subr.bf16.mxu0 0
    %2645 = vmatpush1.bf16.msra.mxu0 0
    %2646 = vmatprep.subr.bf16.mxu0 0
    %2647 = vmatpush1.bf16.msra.mxu0 0
    %2648 = vmatprep.subr.bf16.mxu0 0
    %2649 = vmatpush1.bf16.msra.mxu0 0
    %2650 = vmatprep.subr.bf16.mxu0 0
    %2651 = vmatpush1.bf16.msra.mxu0 0
    %2652 = vmatprep.subr.bf16.mxu0 0
    %2653 = vmatpush1.bf16.msra.mxu0 0
    %2654 = vmatprep.subr.bf16.mxu0 0
    %2655 = vmatpush1.bf16.msra.mxu0 0
    %2656 = vmatprep.mubr.bf16.mxu0 0
    %2657 = vmatmul.mubr.bf16.gmra.mrb[0].mxu0 %v1892
    %v2658 = vpop.f32.mrb[0].mxu0
    %v2659 = vadd.f32 %v2610, %v2658
    %v2660 = vpop.f32.mrb[0].mxu0
    %v2661 = vpop.f32.mrb[0].mxu0
    %v2662 = vadd.f32 %v2610, %v2661
    %v2663 = vpop.f32.mrb[0].mxu0
    %2664 = vdwg.mxu0
    %s2665 = scalar_lea.vmem %s6, 96
    %v2666 = vld [vmem:[%s2665] sm:$0xf]
    %v2667 = vld [vmem:[%s2665 + $0x4] sm:$0xf]
    %v2668 = vld [vmem:[%s2665 + $0x8] sm:$0xf]
    %v2669 = vld [vmem:[%s2665 + $0xc] sm:$0xf]
    %s2670 = scalar_lea.vmem %s7, 6
    %v2671 = vld [vmem:[%s2670] sm:$0x1]
    %v2673 = vlaneseq
    %v2674 = vshrl.u32 %v2673, 7
    %v2675 = vsub.s32 0, %v2674
    %v2676 = vrot.slane %v2671, %v2675
    %v2682 = vunpack.c.l.b16 %v2666
    %v2683 = vunpack.c.l.b16 %v2667
    %v2684 = vunpack.c.l.b16 %v2668
    %v2685 = vunpack.c.l.b16 %v2669
    %v2686 = vpack.c.b16 %v2683, %v2682
    %v2687 = vpack.c.b16 %v2685, %v2684
    %2690 = vmatprep.subr.bf16.mxu0 0
    %2691 = vmatpush1.bf16.msra.mxu0 %v2686
    %2692 = vmatprep.subr.bf16.mxu0 0
    %2693 = vmatpush1.bf16.msra.mxu0 %v2687
    %2694 = vmatprep.subr.bf16.mxu0 0
    %2695 = vmatpush1.bf16.msra.mxu0 0
    %2696 = vmatprep.subr.bf16.mxu0 0
    %2697 = vmatpush1.bf16.msra.mxu0 0
    %2698 = vmatprep.subr.bf16.mxu0 0
    %2699 = vmatpush1.bf16.msra.mxu0 0
    %2700 = vmatprep.subr.bf16.mxu0 0
    %2701 = vmatpush1.bf16.msra.mxu0 0
    %2702 = vmatprep.subr.bf16.mxu0 0
    %2703 = vmatpush1.bf16.msra.mxu0 0
    %2704 = vmatprep.subr.bf16.mxu0 0
    %2705 = vmatpush1.bf16.msra.mxu0 0
    %2706 = vmatprep.subr.bf16.mxu0 0
    %2707 = vmatpush1.bf16.msra.mxu0 0
    %2708 = vmatprep.subr.bf16.mxu0 0
    %2709 = vmatpush1.bf16.msra.mxu0 0
    %2710 = vmatprep.subr.bf16.mxu0 0
    %2711 = vmatpush1.bf16.msra.mxu0 0
    %2712 = vmatprep.subr.bf16.mxu0 0
    %2713 = vmatpush1.bf16.msra.mxu0 0
    %2714 = vmatprep.subr.bf16.mxu0 0
    %2715 = vmatpush1.bf16.msra.mxu0 0
    %2716 = vmatprep.subr.bf16.mxu0 0
    %2717 = vmatpush1.bf16.msra.mxu0 0
    %2718 = vmatprep.subr.bf16.mxu0 0
    %2719 = vmatpush1.bf16.msra.mxu0 0
    %2720 = vmatprep.subr.bf16.mxu0 0
    %2721 = vmatpush1.bf16.msra.mxu0 0
    %2722 = vmatprep.mubr.bf16.mxu0 0
    %2723 = vmatmul.mubr.bf16.gmra.mrb[0].mxu0 %v1892
    %v2724 = vpop.f32.mrb[0].mxu0
    %v2725 = vadd.f32 %v2676, %v2724
    %v2726 = vpop.f32.mrb[0].mxu0
    %v2727 = vpop.f32.mrb[0].mxu0
    %v2728 = vadd.f32 %v2676, %v2727
    %v2729 = vpop.f32.mrb[0].mxu0
    %2730 = vdwg.mxu0
    %s2731 = scalar_lea.vmem %s8, 96
    %v2732 = vld [vmem:[%s2731] sm:$0xf]
    %v2733 = vld [vmem:[%s2731 + $0x4] sm:$0xf]
    %v2734 = vld [vmem:[%s2731 + $0x8] sm:$0xf]
    %v2735 = vld [vmem:[%s2731 + $0xc] sm:$0xf]
    %s2736 = scalar_lea.vmem %s9, 6
    %v2737 = vld [vmem:[%s2736] sm:$0x1]
    %v2739 = vlaneseq
    %v2740 = vshrl.u32 %v2739, 7
    %v2741 = vsub.s32 0, %v2740
    %v2742 = vrot.slane %v2737, %v2741
    %v2748 = vunpack.c.l.b16 %v2732
    %v2749 = vunpack.c.l.b16 %v2733
    %v2750 = vunpack.c.l.b16 %v2734
    %v2751 = vunpack.c.l.b16 %v2735
    %v2752 = vpack.c.b16 %v2749, %v2748
    %v2753 = vpack.c.b16 %v2751, %v2750
    %2756 = vmatprep.subr.bf16.mxu0 0
    %2757 = vmatpush1.bf16.msra.mxu0 %v2752
    %2758 = vmatprep.subr.bf16.mxu0 0
    %2759 = vmatpush1.bf16.msra.mxu0 %v2753
    %2760 = vmatprep.subr.bf16.mxu0 0
    %2761 = vmatpush1.bf16.msra.mxu0 0
    %2762 = vmatprep.subr.bf16.mxu0 0
    %2763 = vmatpush1.bf16.msra.mxu0 0
    %2764 = vmatprep.subr.bf16.mxu0 0
    %2765 = vmatpush1.bf16.msra.mxu0 0
    %2766 = vmatprep.subr.bf16.mxu0 0
    %2767 = vmatpush1.bf16.msra.mxu0 0
    %2768 = vmatprep.subr.bf16.mxu0 0
    %2769 = vmatpush1.bf16.msra.mxu0 0
    %2770 = vmatprep.subr.bf16.mxu0 0
    %2771 = vmatpush1.bf16.msra.mxu0 0
    %2772 = vmatprep.subr.bf16.mxu0 0
    %2773 = vmatpush1.bf16.msra.mxu0 0
    %2774 = vmatprep.subr.bf16.mxu0 0
    %2775 = vmatpush1.bf16.msra.mxu0 0
    %2776 = vmatprep.subr.bf16.mxu0 0
    %2777 = vmatpush1.bf16.msra.mxu0 0
    %2778 = vmatprep.subr.bf16.mxu0 0
    %2779 = vmatpush1.bf16.msra.mxu0 0
    %2780 = vmatprep.subr.bf16.mxu0 0
    %2781 = vmatpush1.bf16.msra.mxu0 0
    %2782 = vmatprep.subr.bf16.mxu0 0
    %2783 = vmatpush1.bf16.msra.mxu0 0
    %2784 = vmatprep.subr.bf16.mxu0 0
    %2785 = vmatpush1.bf16.msra.mxu0 0
    %2786 = vmatprep.subr.bf16.mxu0 0
    %2787 = vmatpush1.bf16.msra.mxu0 0
    %2788 = vmatprep.mubr.bf16.mxu0 0
    %2789 = vmatmul.mubr.bf16.gmra.mrb[0].mxu0 %v1892
    %v2790 = vpop.f32.mrb[0].mxu0
    %v2791 = vadd.f32 %v2742, %v2790
    %v2792 = vpop.f32.mrb[0].mxu0
    %v2793 = vpop.f32.mrb[0].mxu0
    %v2794 = vadd.f32 %v2742, %v2793
    %v2795 = vpop.f32.mrb[0].mxu0
    %2796 = vdwg.mxu0
    %v2797 = vpack.c.bf16 %v2662, %v2659
    %v2798 = vpack.c.bf16 %v2728, %v2725
    %v2800 = vsel %vm327, %v2797, 0
    %v2803 = vsel %vm327, %v2798, 0
    %2805 = vmatprep.subr.bf16.mxu0 0
    %2806 = vmatpush1.bf16.xpose.msra.mxu0 %v2803
    %2807 = vmatprep.subr.bf16.mxu0 0
    %2808 = vmatpush1.bf16.xpose.msra.mxu0 0
    %2809 = vmatprep.subr.bf16.mxu0 0
    %2810 = vmatpush1.bf16.xpose.msra.mxu0 0
    %2811 = vmatprep.subr.bf16.mxu0 0
    %2812 = vmatpush1.bf16.xpose.msra.mxu0 0
    %2813 = vmatprep.subr.bf16.mxu0 0
    %2814 = vmatpush1.bf16.xpose.msra.mxu0 0
    %2815 = vmatprep.subr.bf16.mxu0 0
    %2816 = vmatpush1.bf16.xpose.msra.mxu0 0
    %2817 = vmatprep.subr.bf16.mxu0 0
    %2818 = vmatpush1.bf16.xpose.msra.mxu0 0
    %2819 = vmatprep.subr.bf16.mxu0 0
    %2820 = vmatpush1.bf16.xpose.msra.mxu0 0
    %2821 = vmatprep.subr.bf16.mxu0 0
    %2822 = vmatpush1.bf16.xpose.msra.mxu0 0
    %2823 = vmatprep.subr.bf16.mxu0 0
    %2824 = vmatpush1.bf16.xpose.msra.mxu0 0
    %2825 = vmatprep.subr.bf16.mxu0 0
    %2826 = vmatpush1.bf16.xpose.msra.mxu0 0
    %2827 = vmatprep.subr.bf16.mxu0 0
    %2828 = vmatpush1.bf16.xpose.msra.mxu0 0
    %2829 = vmatprep.subr.bf16.mxu0 0
    %2830 = vmatpush1.bf16.xpose.msra.mxu0 0
    %2831 = vmatprep.subr.bf16.mxu0 0
    %2832 = vmatpush1.bf16.xpose.msra.mxu0 0
    %2833 = vmatprep.subr.bf16.mxu0 0
    %2834 = vmatpush1.bf16.xpose.msra.mxu0 0
    %2835 = vmatprep.subr.bf16.mxu0 0
    %2836 = vmatpush1.bf16.xpose.msra.mxu0 0
    %2837 = vmatprep.mubr.bf16.mxu0 0
    %2838 = vmatmul.mubr.bf16.gmra.mrb[0].mxu0 %v2800
    %v2839 = vpop.f32.mrb[0].mxu0
    %v2840 = vadd.f32 %v127, %v2839
    %v2841 = vpop.f32.mrb[0].mxu0
    %v2842 = vpop.f32.mrb[0].mxu0
    %v2843 = vadd.f32 %v128, %v2842
    %v2844 = vpop.f32.mrb[0].mxu0
    %2845 = vdwg.mxu0
    %v2846 = vsel %vm375, %v2840, -inf
    %2847 = vmax.xlane.f32.xlu0 %v2846
    %v2848 = vpop.xlane.xlu0 %2847
    %v2849 = vsel %vm375, %v2843, -inf
    %2850 = vmax.xlane.f32.xlu0 %v2849
    %v2851 = vpop.xlane.xlu0 %2850
    %v2852 = vsub.f32 %v2840, %v2848
    %v2853 = vsub.f32 %v2843, %v2851
    %v2854 = vmul.f32 %v2852, 1.442695
    %v2855 = vpow.pop %v2854
    %v2856 = vmul.f32 %v2853, 1.442695
    %v2857 = vpow.pop %v2856
    %v2858 = vsel %vm375, %v2855, 0.0
    %2859 = vadd.xlane.f32.xlu0 %v2858
    %v2860 = vpop.xlane.xlu0 %2859
    %v2861 = vsel %vm375, %v2857, 0.0
    %2862 = vadd.xlane.f32.xlu0 %v2861
    %v2863 = vpop.xlane.xlu0 %2862
    %v2864 = vrcp.pop %v2860
    %v2865 = vrcp.pop %v2863
    %v2866 = vmul.f32 %v2855, %v2864
    %v2867 = vmul.f32 %v2857, %v2865
    %v2868 = vpack.c.bf16 %v2867, %v2866
    %v2869 = vpack.c.bf16 %v2794, %v2791
    %v2871 = vsel %vm375, %v2868, 0
    %2873 = vmatprep.subr.bf16.mxu0 0
    %2874 = vmatpush1.bf16.msra.mxu0 %v2869
    %2875 = vmatprep.subr.bf16.mxu0 0
    %2876 = vmatpush1.bf16.msra.mxu0 0
    %2877 = vmatprep.subr.bf16.mxu0 0
    %2878 = vmatpush1.bf16.msra.mxu0 0
    %2879 = vmatprep.subr.bf16.mxu0 0
    %2880 = vmatpush1.bf16.msra.mxu0 0
    %2881 = vmatprep.subr.bf16.mxu0 0
    %2882 = vmatpush1.bf16.msra.mxu0 0
    %2883 = vmatprep.subr.bf16.mxu0 0
    %2884 = vmatpush1.bf16.msra.mxu0 0
    %2885 = vmatprep.subr.bf16.mxu0 0
    %2886 = vmatpush1.bf16.msra.mxu0 0
    %2887 = vmatprep.subr.bf16.mxu0 0
    %2888 = vmatpush1.bf16.msra.mxu0 0
    %2889 = vmatprep.subr.bf16.mxu0 0
    %2890 = vmatpush1.bf16.msra.mxu0 0
    %2891 = vmatprep.subr.bf16.mxu0 0
    %2892 = vmatpush1.bf16.msra.mxu0 0
    %2893 = vmatprep.subr.bf16.mxu0 0
    %2894 = vmatpush1.bf16.msra.mxu0 0
    %2895 = vmatprep.subr.bf16.mxu0 0
    %2896 = vmatpush1.bf16.msra.mxu0 0
    %2897 = vmatprep.subr.bf16.mxu0 0
    %2898 = vmatpush1.bf16.msra.mxu0 0
    %2899 = vmatprep.subr.bf16.mxu0 0
    %2900 = vmatpush1.bf16.msra.mxu0 0
    %2901 = vmatprep.subr.bf16.mxu0 0
    %2902 = vmatpush1.bf16.msra.mxu0 0
    %2903 = vmatprep.subr.bf16.mxu0 0
    %2904 = vmatpush1.bf16.msra.mxu0 0
    %2905 = vmatprep.mubr.bf16.mxu0 0
    %2906 = vmatmul.mubr.bf16.gmra.mrb[0].mxu0 %v2871
    %v2907 = vpop.f32.mrb[0].mxu0
    %v2908 = vadd.f32 0.0, %v2907
    %v2909 = vpop.f32.mrb[0].mxu0
    %v2910 = vpop.f32.mrb[0].mxu0
    %v2911 = vadd.f32 0.0, %v2910
    %v2912 = vpop.f32.mrb[0].mxu0
    %2913 = vdwg.mxu0
    %s2914 = scalar_lea.vmem %s10, 24
    %v2915 = vld [vmem:[%s2914] sm:$0xf]
    %v2916 = vpack.c.bf16 %v2911, %v2908
    %v2918 = vsel %vm327, %v2916, 0
    %v2921 = vsel %vm767, %v2915, 0
    %2923 = vmatprep.subr.bf16.mxu0 0
    %2924 = vmatpush1.bf16.msra.mxu0 %v2921
    %2925 = vmatprep.subr.bf16.mxu0 0
    %2926 = vmatpush1.bf16.msra.mxu0 0
    %2927 = vmatprep.subr.bf16.mxu0 0
    %2928 = vmatpush1.bf16.msra.mxu0 0
    %2929 = vmatprep.subr.bf16.mxu0 0
    %2930 = vmatpush1.bf16.msra.mxu0 0
    %2931 = vmatprep.subr.bf16.mxu0 0
    %2932 = vmatpush1.bf16.msra.mxu0 0
    %2933 = vmatprep.subr.bf16.mxu0 0
    %2934 = vmatpush1.bf16.msra.mxu0 0
    %2935 = vmatprep.subr.bf16.mxu0 0
    %2936 = vmatpush1.bf16.msra.mxu0 0
    %2937 = vmatprep.subr.bf16.mxu0 0
    %2938 = vmatpush1.bf16.msra.mxu0 0
    %2939 = vmatprep.subr.bf16.mxu0 0
    %2940 = vmatpush1.bf16.msra.mxu0 0
    %2941 = vmatprep.subr.bf16.mxu0 0
    %2942 = vmatpush1.bf16.msra.mxu0 0
    %2943 = vmatprep.subr.bf16.mxu0 0
    %2944 = vmatpush1.bf16.msra.mxu0 0
    %2945 = vmatprep.subr.bf16.mxu0 0
    %2946 = vmatpush1.bf16.msra.mxu0 0
    %2947 = vmatprep.subr.bf16.mxu0 0
    %2948 = vmatpush1.bf16.msra.mxu0 0
    %2949 = vmatprep.subr.bf16.mxu0 0
    %2950 = vmatpush1.bf16.msra.mxu0 0
    %2951 = vmatprep.subr.bf16.mxu0 0
    %2952 = vmatpush1.bf16.msra.mxu0 0
    %2953 = vmatprep.subr.bf16.mxu0 0
    %2954 = vmatpush1.bf16.msra.mxu0 0
    %2955 = vmatprep.mubr.bf16.mxu0 0
    %2956 = vmatmul.mubr.bf16.gmra.mrb[0].mxu0 %v2918
    %v2957 = vpop.f32.mrb[0].mxu0
    %v2958 = vadd.f32 0.0, %v2957
    %v2959 = vpop.f32.mrb[0].mxu0
    %v2960 = vpop.f32.mrb[0].mxu0
    %v2961 = vadd.f32 0.0, %v2960
    %v2962 = vpop.f32.mrb[0].mxu0
    %2963 = vdwg.mxu0
    %v2964 = vadd.f32 %v2593, %v2958
    %v2965 = vadd.f32 %v2596, %v2961
    %s2966 = scalar_lea.vmem %s4, 112
    %v2967 = vld [vmem:[%s2966] sm:$0xf]
    %v2968 = vld [vmem:[%s2966 + $0x4] sm:$0xf]
    %v2969 = vld [vmem:[%s2966 + $0x8] sm:$0xf]
    %v2970 = vld [vmem:[%s2966 + $0xc] sm:$0xf]
    %s2971 = scalar_lea.vmem %s5, 7
    %v2972 = vld [vmem:[%s2971] sm:$0x1]
    %v2974 = vlaneseq
    %v2975 = vshrl.u32 %v2974, 7
    %v2976 = vsub.s32 0, %v2975
    %v2977 = vrot.slane %v2972, %v2976
    %v2983 = vunpack.c.l.b16 %v2967
    %v2984 = vunpack.c.l.b16 %v2968
    %v2985 = vunpack.c.l.b16 %v2969
    %v2986 = vunpack.c.l.b16 %v2970
    %v2987 = vpack.c.b16 %v2984, %v2983
    %v2988 = vpack.c.b16 %v2986, %v2985
    %2991 = vmatprep.subr.bf16.mxu0 0
    %2992 = vmatpush1.bf16.msra.mxu0 %v2987
    %2993 = vmatprep.subr.bf16.mxu0 0
    %2994 = vmatpush1.bf16.msra.mxu0 %v2988
    %2995 = vmatprep.subr.bf16.mxu0 0
    %2996 = vmatpush1.bf16.msra.mxu0 0
    %2997 = vmatprep.subr.bf16.mxu0 0
    %2998 = vmatpush1.bf16.msra.mxu0 0
    %2999 = vmatprep.subr.bf16.mxu0 0
    %3000 = vmatpush1.bf16.msra.mxu0 0
    %3001 = vmatprep.subr.bf16.mxu0 0
    %3002 = vmatpush1.bf16.msra.mxu0 0
    %3003 = vmatprep.subr.bf16.mxu0 0
    %3004 = vmatpush1.bf16.msra.mxu0 0
    %3005 = vmatprep.subr.bf16.mxu0 0
    %3006 = vmatpush1.bf16.msra.mxu0 0
    %3007 = vmatprep.subr.bf16.mxu0 0
    %3008 = vmatpush1.bf16.msra.mxu0 0
    %3009 = vmatprep.subr.bf16.mxu0 0
    %3010 = vmatpush1.bf16.msra.mxu0 0
    %3011 = vmatprep.subr.bf16.mxu0 0
    %3012 = vmatpush1.bf16.msra.mxu0 0
    %3013 = vmatprep.subr.bf16.mxu0 0
    %3014 = vmatpush1.bf16.msra.mxu0 0
    %3015 = vmatprep.subr.bf16.mxu0 0
    %3016 = vmatpush1.bf16.msra.mxu0 0
    %3017 = vmatprep.subr.bf16.mxu0 0
    %3018 = vmatpush1.bf16.msra.mxu0 0
    %3019 = vmatprep.subr.bf16.mxu0 0
    %3020 = vmatpush1.bf16.msra.mxu0 0
    %3021 = vmatprep.subr.bf16.mxu0 0
    %3022 = vmatpush1.bf16.msra.mxu0 0
    %3023 = vmatprep.mubr.bf16.mxu0 0
    %3024 = vmatmul.mubr.bf16.gmra.mrb[0].mxu0 %v1892
    %v3025 = vpop.f32.mrb[0].mxu0
    %v3026 = vadd.f32 %v2977, %v3025
    %v3027 = vpop.f32.mrb[0].mxu0
    %v3028 = vpop.f32.mrb[0].mxu0
    %v3029 = vadd.f32 %v2977, %v3028
    %v3030 = vpop.f32.mrb[0].mxu0
    %3031 = vdwg.mxu0
    %s3032 = scalar_lea.vmem %s6, 112
    %v3033 = vld [vmem:[%s3032] sm:$0xf]
    %v3034 = vld [vmem:[%s3032 + $0x4] sm:$0xf]
    %v3035 = vld [vmem:[%s3032 + $0x8] sm:$0xf]
    %v3036 = vld [vmem:[%s3032 + $0xc] sm:$0xf]
    %s3037 = scalar_lea.vmem %s7, 7
    %v3038 = vld [vmem:[%s3037] sm:$0x1]
    %v3040 = vlaneseq
    %v3041 = vshrl.u32 %v3040, 7
    %v3042 = vsub.s32 0, %v3041
    %v3043 = vrot.slane %v3038, %v3042
    %v3049 = vunpack.c.l.b16 %v3033
    %v3050 = vunpack.c.l.b16 %v3034
    %v3051 = vunpack.c.l.b16 %v3035
    %v3052 = vunpack.c.l.b16 %v3036
    %v3053 = vpack.c.b16 %v3050, %v3049
    %v3054 = vpack.c.b16 %v3052, %v3051
    %3057 = vmatprep.subr.bf16.mxu0 0
    %3058 = vmatpush1.bf16.msra.mxu0 %v3053
    %3059 = vmatprep.subr.bf16.mxu0 0
    %3060 = vmatpush1.bf16.msra.mxu0 %v3054
    %3061 = vmatprep.subr.bf16.mxu0 0
    %3062 = vmatpush1.bf16.msra.mxu0 0
    %3063 = vmatprep.subr.bf16.mxu0 0
    %3064 = vmatpush1.bf16.msra.mxu0 0
    %3065 = vmatprep.subr.bf16.mxu0 0
    %3066 = vmatpush1.bf16.msra.mxu0 0
    %3067 = vmatprep.subr.bf16.mxu0 0
    %3068 = vmatpush1.bf16.msra.mxu0 0
    %3069 = vmatprep.subr.bf16.mxu0 0
    %3070 = vmatpush1.bf16.msra.mxu0 0
    %3071 = vmatprep.subr.bf16.mxu0 0
    %3072 = vmatpush1.bf16.msra.mxu0 0
    %3073 = vmatprep.subr.bf16.mxu0 0
    %3074 = vmatpush1.bf16.msra.mxu0 0
    %3075 = vmatprep.subr.bf16.mxu0 0
    %3076 = vmatpush1.bf16.msra.mxu0 0
    %3077 = vmatprep.subr.bf16.mxu0 0
    %3078 = vmatpush1.bf16.msra.mxu0 0
    %3079 = vmatprep.subr.bf16.mxu0 0
    %3080 = vmatpush1.bf16.msra.mxu0 0
    %3081 = vmatprep.subr.bf16.mxu0 0
    %3082 = vmatpush1.bf16.msra.mxu0 0
    %3083 = vmatprep.subr.bf16.mxu0 0
    %3084 = vmatpush1.bf16.msra.mxu0 0
    %3085 = vmatprep.subr.bf16.mxu0 0
    %3086 = vmatpush1.bf16.msra.mxu0 0
    %3087 = vmatprep.subr.bf16.mxu0 0
    %3088 = vmatpush1.bf16.msra.mxu0 0
    %3089 = vmatprep.mubr.bf16.mxu0 0
    %3090 = vmatmul.mubr.bf16.gmra.mrb[0].mxu0 %v1892
    %v3091 = vpop.f32.mrb[0].mxu0
    %v3092 = vadd.f32 %v3043, %v3091
    %v3093 = vpop.f32.mrb[0].mxu0
    %v3094 = vpop.f32.mrb[0].mxu0
    %v3095 = vadd.f32 %v3043, %v3094
    %v3096 = vpop.f32.mrb[0].mxu0
    %3097 = vdwg.mxu0
    %s3098 = scalar_lea.vmem %s8, 112
    %v3099 = vld [vmem:[%s3098] sm:$0xf]
    %v3100 = vld [vmem:[%s3098 + $0x4] sm:$0xf]
    %v3101 = vld [vmem:[%s3098 + $0x8] sm:$0xf]
    %v3102 = vld [vmem:[%s3098 + $0xc] sm:$0xf]
    %s3103 = scalar_lea.vmem %s9, 7
    %v3104 = vld [vmem:[%s3103] sm:$0x1]
    %v3106 = vlaneseq
    %v3107 = vshrl.u32 %v3106, 7
    %v3108 = vsub.s32 0, %v3107
    %v3109 = vrot.slane %v3104, %v3108
    %v3115 = vunpack.c.l.b16 %v3099
    %v3116 = vunpack.c.l.b16 %v3100
    %v3117 = vunpack.c.l.b16 %v3101
    %v3118 = vunpack.c.l.b16 %v3102
    %v3119 = vpack.c.b16 %v3116, %v3115
    %v3120 = vpack.c.b16 %v3118, %v3117
    %3123 = vmatprep.subr.bf16.mxu0 0
    %3124 = vmatpush1.bf16.msra.mxu0 %v3119
    %3125 = vmatprep.subr.bf16.mxu0 0
    %3126 = vmatpush1.bf16.msra.mxu0 %v3120
    %3127 = vmatprep.subr.bf16.mxu0 0
    %3128 = vmatpush1.bf16.msra.mxu0 0
    %3129 = vmatprep.subr.bf16.mxu0 0
    %3130 = vmatpush1.bf16.msra.mxu0 0
    %3131 = vmatprep.subr.bf16.mxu0 0
    %3132 = vmatpush1.bf16.msra.mxu0 0
    %3133 = vmatprep.subr.bf16.mxu0 0
    %3134 = vmatpush1.bf16.msra.mxu0 0
    %3135 = vmatprep.subr.bf16.mxu0 0
    %3136 = vmatpush1.bf16.msra.mxu0 0
    %3137 = vmatprep.subr.bf16.mxu0 0
    %3138 = vmatpush1.bf16.msra.mxu0 0
    %3139 = vmatprep.subr.bf16.mxu0 0
    %3140 = vmatpush1.bf16.msra.mxu0 0
    %3141 = vmatprep.subr.bf16.mxu0 0
    %3142 = vmatpush1.bf16.msra.mxu0 0
    %3143 = vmatprep.subr.bf16.mxu0 0
    %3144 = vmatpush1.bf16.msra.mxu0 0
    %3145 = vmatprep.subr.bf16.mxu0 0
    %3146 = vmatpush1.bf16.msra.mxu0 0
    %3147 = vmatprep.subr.bf16.mxu0 0
    %3148 = vmatpush1.bf16.msra.mxu0 0
    %3149 = vmatprep.subr.bf16.mxu0 0
    %3150 = vmatpush1.bf16.msra.mxu0 0
    %3151 = vmatprep.subr.bf16.mxu0 0
    %3152 = vmatpush1.bf16.msra.mxu0 0
    %3153 = vmatprep.subr.bf16.mxu0 0
    %3154 = vmatpush1.bf16.msra.mxu0 0
    %3155 = vmatprep.mubr.bf16.mxu0 0
    %3156 = vmatmul.mubr.bf16.gmra.mrb[0].mxu0 %v1892
    %v3157 = vpop.f32.mrb[0].mxu0
    %v3158 = vadd.f32 %v3109, %v3157
    %v3159 = vpop.f32.mrb[0].mxu0
    %v3160 = vpop.f32.mrb[0].mxu0
    %v3161 = vadd.f32 %v3109, %v3160
    %v3162 = vpop.f32.mrb[0].mxu0
    %3163 = vdwg.mxu0
    %v3164 = vpack.c.bf16 %v3029, %v3026
    %v3165 = vpack.c.bf16 %v3095, %v3092
    %v3167 = vsel %vm327, %v3164, 0
    %v3170 = vsel %vm327, %v3165, 0
    %3172 = vmatprep.subr.bf16.mxu0 0
    %3173 = vmatpush1.bf16.xpose.msra.mxu0 %v3170
    %3174 = vmatprep.subr.bf16.mxu0 0
    %3175 = vmatpush1.bf16.xpose.msra.mxu0 0
    %3176 = vmatprep.subr.bf16.mxu0 0
    %3177 = vmatpush1.bf16.xpose.msra.mxu0 0
    %3178 = vmatprep.subr.bf16.mxu0 0
    %3179 = vmatpush1.bf16.xpose.msra.mxu0 0
    %3180 = vmatprep.subr.bf16.mxu0 0
    %3181 = vmatpush1.bf16.xpose.msra.mxu0 0
    %3182 = vmatprep.subr.bf16.mxu0 0
    %3183 = vmatpush1.bf16.xpose.msra.mxu0 0
    %3184 = vmatprep.subr.bf16.mxu0 0
    %3185 = vmatpush1.bf16.xpose.msra.mxu0 0
    %3186 = vmatprep.subr.bf16.mxu0 0
    %3187 = vmatpush1.bf16.xpose.msra.mxu0 0
    %3188 = vmatprep.subr.bf16.mxu0 0
    %3189 = vmatpush1.bf16.xpose.msra.mxu0 0
    %3190 = vmatprep.subr.bf16.mxu0 0
    %3191 = vmatpush1.bf16.xpose.msra.mxu0 0
    %3192 = vmatprep.subr.bf16.mxu0 0
    %3193 = vmatpush1.bf16.xpose.msra.mxu0 0
    %3194 = vmatprep.subr.bf16.mxu0 0
    %3195 = vmatpush1.bf16.xpose.msra.mxu0 0
    %3196 = vmatprep.subr.bf16.mxu0 0
    %3197 = vmatpush1.bf16.xpose.msra.mxu0 0
    %3198 = vmatprep.subr.bf16.mxu0 0
    %3199 = vmatpush1.bf16.xpose.msra.mxu0 0
    %3200 = vmatprep.subr.bf16.mxu0 0
    %3201 = vmatpush1.bf16.xpose.msra.mxu0 0
    %3202 = vmatprep.subr.bf16.mxu0 0
    %3203 = vmatpush1.bf16.xpose.msra.mxu0 0
    %3204 = vmatprep.mubr.bf16.mxu0 0
    %3205 = vmatmul.mubr.bf16.gmra.mrb[0].mxu0 %v3167
    %v3206 = vpop.f32.mrb[0].mxu0
    %v3207 = vadd.f32 %v127, %v3206
    %v3208 = vpop.f32.mrb[0].mxu0
    %v3209 = vpop.f32.mrb[0].mxu0
    %v3210 = vadd.f32 %v128, %v3209
    %v3211 = vpop.f32.mrb[0].mxu0
    %3212 = vdwg.mxu0
    %v3213 = vsel %vm375, %v3207, -inf
    %3214 = vmax.xlane.f32.xlu0 %v3213
    %v3215 = vpop.xlane.xlu0 %3214
    %v3216 = vsel %vm375, %v3210, -inf
    %3217 = vmax.xlane.f32.xlu0 %v3216
    %v3218 = vpop.xlane.xlu0 %3217
    %v3219 = vsub.f32 %v3207, %v3215
    %v3220 = vsub.f32 %v3210, %v3218
    %v3221 = vmul.f32 %v3219, 1.442695
    %v3222 = vpow.pop %v3221
    %v3223 = vmul.f32 %v3220, 1.442695
    %v3224 = vpow.pop %v3223
    %v3225 = vsel %vm375, %v3222, 0.0
    %3226 = vadd.xlane.f32.xlu0 %v3225
    %v3227 = vpop.xlane.xlu0 %3226
    %v3228 = vsel %vm375, %v3224, 0.0
    %3229 = vadd.xlane.f32.xlu0 %v3228
    %v3230 = vpop.xlane.xlu0 %3229
    %v3231 = vrcp.pop %v3227
    %v3232 = vrcp.pop %v3230
    %v3233 = vmul.f32 %v3222, %v3231
    %v3234 = vmul.f32 %v3224, %v3232
    %v3235 = vpack.c.bf16 %v3234, %v3233
    %v3236 = vpack.c.bf16 %v3161, %v3158
    %v3238 = vsel %vm375, %v3235, 0
    %3240 = vmatprep.subr.bf16.mxu0 0
    %3241 = vmatpush1.bf16.msra.mxu0 %v3236
    %3242 = vmatprep.subr.bf16.mxu0 0
    %3243 = vmatpush1.bf16.msra.mxu0 0
    %3244 = vmatprep.subr.bf16.mxu0 0
    %3245 = vmatpush1.bf16.msra.mxu0 0
    %3246 = vmatprep.subr.bf16.mxu0 0
    %3247 = vmatpush1.bf16.msra.mxu0 0
    %3248 = vmatprep.subr.bf16.mxu0 0
    %3249 = vmatpush1.bf16.msra.mxu0 0
    %3250 = vmatprep.subr.bf16.mxu0 0
    %3251 = vmatpush1.bf16.msra.mxu0 0
    %3252 = vmatprep.subr.bf16.mxu0 0
    %3253 = vmatpush1.bf16.msra.mxu0 0
    %3254 = vmatprep.subr.bf16.mxu0 0
    %3255 = vmatpush1.bf16.msra.mxu0 0
    %3256 = vmatprep.subr.bf16.mxu0 0
    %3257 = vmatpush1.bf16.msra.mxu0 0
    %3258 = vmatprep.subr.bf16.mxu0 0
    %3259 = vmatpush1.bf16.msra.mxu0 0
    %3260 = vmatprep.subr.bf16.mxu0 0
    %3261 = vmatpush1.bf16.msra.mxu0 0
    %3262 = vmatprep.subr.bf16.mxu0 0
    %3263 = vmatpush1.bf16.msra.mxu0 0
    %3264 = vmatprep.subr.bf16.mxu0 0
    %3265 = vmatpush1.bf16.msra.mxu0 0
    %3266 = vmatprep.subr.bf16.mxu0 0
    %3267 = vmatpush1.bf16.msra.mxu0 0
    %3268 = vmatprep.subr.bf16.mxu0 0
    %3269 = vmatpush1.bf16.msra.mxu0 0
    %3270 = vmatprep.subr.bf16.mxu0 0
    %3271 = vmatpush1.bf16.msra.mxu0 0
    %3272 = vmatprep.mubr.bf16.mxu0 0
    %3273 = vmatmul.mubr.bf16.gmra.mrb[0].mxu0 %v3238
    %v3274 = vpop.f32.mrb[0].mxu0
    %v3275 = vadd.f32 0.0, %v3274
    %v3276 = vpop.f32.mrb[0].mxu0
    %v3277 = vpop.f32.mrb[0].mxu0
    %v3278 = vadd.f32 0.0, %v3277
    %v3279 = vpop.f32.mrb[0].mxu0
    %3280 = vdwg.mxu0
    %s3281 = scalar_lea.vmem %s10, 28
    %v3282 = vld [vmem:[%s3281] sm:$0xf]
    %v3283 = vpack.c.bf16 %v3278, %v3275
    %v3285 = vsel %vm327, %v3283, 0
    %v3288 = vsel %vm767, %v3282, 0
    %3290 = vmatprep.subr.bf16.mxu0 0
    %3291 = vmatpush1.bf16.msra.mxu0 %v3288
    %3292 = vmatprep.subr.bf16.mxu0 0
    %3293 = vmatpush1.bf16.msra.mxu0 0
    %3294 = vmatprep.subr.bf16.mxu0 0
    %3295 = vmatpush1.bf16.msra.mxu0 0
    %3296 = vmatprep.subr.bf16.mxu0 0
    %3297 = vmatpush1.bf16.msra.mxu0 0
    %3298 = vmatprep.subr.bf16.mxu0 0
    %3299 = vmatpush1.bf16.msra.mxu0 0
    %3300 = vmatprep.subr.bf16.mxu0 0
    %3301 = vmatpush1.bf16.msra.mxu0 0
    %3302 = vmatprep.subr.bf16.mxu0 0
    %3303 = vmatpush1.bf16.msra.mxu0 0
    %3304 = vmatprep.subr.bf16.mxu0 0
    %3305 = vmatpush1.bf16.msra.mxu0 0
    %3306 = vmatprep.subr.bf16.mxu0 0
    %3307 = vmatpush1.bf16.msra.mxu0 0
    %3308 = vmatprep.subr.bf16.mxu0 0
    %3309 = vmatpush1.bf16.msra.mxu0 0
    %3310 = vmatprep.subr.bf16.mxu0 0
    %3311 = vmatpush1.bf16.msra.mxu0 0
    %3312 = vmatprep.subr.bf16.mxu0 0
    %3313 = vmatpush1.bf16.msra.mxu0 0
    %3314 = vmatprep.subr.bf16.mxu0 0
    %3315 = vmatpush1.bf16.msra.mxu0 0
    %3316 = vmatprep.subr.bf16.mxu0 0
    %3317 = vmatpush1.bf16.msra.mxu0 0
    %3318 = vmatprep.subr.bf16.mxu0 0
    %3319 = vmatpush1.bf16.msra.mxu0 0
    %3320 = vmatprep.subr.bf16.mxu0 0
    %3321 = vmatpush1.bf16.msra.mxu0 0
    %3322 = vmatprep.mubr.bf16.mxu0 0
    %3323 = vmatmul.mubr.bf16.gmra.mrb[0].mxu0 %v3285
    %v3324 = vpop.f32.mrb[0].mxu0
    %v3325 = vadd.f32 0.0, %v3324
    %v3326 = vpop.f32.mrb[0].mxu0
    %v3327 = vpop.f32.mrb[0].mxu0
    %v3328 = vadd.f32 0.0, %v3327
    %v3329 = vpop.f32.mrb[0].mxu0
    %3330 = vdwg.mxu0
    %v3331 = vadd.f32 %v2964, %v3325
    %v3332 = vadd.f32 %v2965, %v3328
    %s3333 = scalar_lea.vmem %s11, 1
    %v3334 = vld [vmem:[%s3333] sm:$0x1]
    %v3336 = vlaneseq
    %v3337 = vshrl.u32 %v3336, 7
    %v3338 = vsub.s32 0, %v3337
    %v3339 = vrot.slane %v3334, %v3338
    %v3341 = vadd.f32 %v3331, %v3339
    %v3342 = vadd.f32 %v3332, %v3339
    %v3343 = vadd.f32 %v3341, %v1863
    %v3344 = vadd.f32 %v3342, %v1864
    %s3345 = scalar_lea.vmem %s12, 1
    %v3346 = vld [vmem:[%s3345] sm:$0x1]
    %s3347 = scalar_lea.vmem %s13, 1
    %v3348 = vld [vmem:[%s3347] sm:$0x1]
    %v3349 = vsel %vm83, %v3343, 0.0
    %3350 = vadd.xlane.f32.xlu0 %v3349
    %v3351 = vpop.xlane.xlu0 %3350
    %v3352 = vsel %vm83, %v3344, 0.0
    %3353 = vadd.xlane.f32.xlu0 %v3352
    %v3354 = vpop.xlane.xlu0 %3353
    %v3355 = vmul.f32 %v3351, %v90
    %v3356 = vmul.f32 %v3354, %v90
    %v3357 = vsub.f32 %v3343, %v3355
    %v3358 = vsub.f32 %v3344, %v3356
    %v3359 = vmul.f32 %v3357, %v3357
    %v3360 = vmul.f32 %v3358, %v3358
    %v3361 = vsel %vm83, %v3359, 0.0
    %3362 = vadd.xlane.f32.xlu0 %v3361
    %v3363 = vpop.xlane.xlu0 %3362
    %v3364 = vsel %vm83, %v3360, 0.0
    %3365 = vadd.xlane.f32.xlu0 %v3364
    %v3366 = vpop.xlane.xlu0 %3365
    %v3367 = vmul.f32 %v3363, %v90
    %v3368 = vmul.f32 %v3366, %v90
    %v3369 = vadd.f32 %v3367, 1e-12
    %v3370 = vadd.f32 %v3368, 1e-12
    %v3371 = vrsqrt.pop %v3369
    %v3372 = vrsqrt.pop %v3370
    %v3373 = vmul.f32 %v3357, %v3371
    %v3374 = vmul.f32 %v3358, %v3372
    %v3376 = vlaneseq
    %v3377 = vshrl.u32 %v3376, 7
    %v3378 = vsub.s32 0, %v3377
    %v3379 = vrot.slane %v3346, %v3378
    %v3381 = vmul.f32 %v3373, %v3379
    %v3382 = vmul.f32 %v3374, %v3379
    %v3384 = vlaneseq
    %v3385 = vshrl.u32 %v3384, 7
    %v3386 = vsub.s32 0, %v3385
    %v3387 = vrot.slane %v3348, %v3386
    %v3389 = vadd.f32 %v3381, %v3387
    %v3390 = vadd.f32 %v3382, %v3387
    %s3391 = scalar_lea.vmem %s14, 16
    %v3392 = vld [vmem:[%s3391] sm:$0xf]
    %v3393 = vld [vmem:[%s3391 + $0x4] sm:$0xf]
    %v3394 = vld [vmem:[%s3391 + $0x8] sm:$0xf]
    %v3395 = vld [vmem:[%s3391 + $0xc] sm:$0xf]
    %v3396 = vpack.c.bf16 %v3390, %v3389
    %s3397 = scalar_lea.vmem %s15, 1
    %v3398 = vld [vmem:[%s3397] sm:$0x1]
    %v3400 = vlaneseq
    %v3401 = vshrl.u32 %v3400, 7
    %v3402 = vsub.s32 0, %v3401
    %v3403 = vrot.slane %v3398, %v3402
    %v3409 = vunpack.c.l.b16 %v3392
    %v3410 = vunpack.c.l.b16 %v3393
    %v3411 = vunpack.c.l.b16 %v3394
    %v3412 = vunpack.c.l.b16 %v3395
    %v3413 = vpack.c.b16 %v3410, %v3409
    %v3414 = vpack.c.b16 %v3412, %v3411
    %v3418 = vsel %vm83, %v3396, 0
    %3420 = vmatprep.subr.bf16.mxu0 0
    %3421 = vmatpush1.bf16.msra.mxu0 %v3413
    %3422 = vmatprep.subr.bf16.mxu0 0
    %3423 = vmatpush1.bf16.msra.mxu0 %v3414
    %3424 = vmatprep.subr.bf16.mxu0 0
    %3425 = vmatpush1.bf16.msra.mxu0 0
    %3426 = vmatprep.subr.bf16.mxu0 0
    %3427 = vmatpush1.bf16.msra.mxu0 0
    %3428 = vmatprep.subr.bf16.mxu0 0
    %3429 = vmatpush1.bf16.msra.mxu0 0
    %3430 = vmatprep.subr.bf16.mxu0 0
    %3431 = vmatpush1.bf16.msra.mxu0 0
    %3432 = vmatprep.subr.bf16.mxu0 0
    %3433 = vmatpush1.bf16.msra.mxu0 0
    %3434 = vmatprep.subr.bf16.mxu0 0
    %3435 = vmatpush1.bf16.msra.mxu0 0
    %3436 = vmatprep.subr.bf16.mxu0 0
    %3437 = vmatpush1.bf16.msra.mxu0 0
    %3438 = vmatprep.subr.bf16.mxu0 0
    %3439 = vmatpush1.bf16.msra.mxu0 0
    %3440 = vmatprep.subr.bf16.mxu0 0
    %3441 = vmatpush1.bf16.msra.mxu0 0
    %3442 = vmatprep.subr.bf16.mxu0 0
    %3443 = vmatpush1.bf16.msra.mxu0 0
    %3444 = vmatprep.subr.bf16.mxu0 0
    %3445 = vmatpush1.bf16.msra.mxu0 0
    %3446 = vmatprep.subr.bf16.mxu0 0
    %3447 = vmatpush1.bf16.msra.mxu0 0
    %3448 = vmatprep.subr.bf16.mxu0 0
    %3449 = vmatpush1.bf16.msra.mxu0 0
    %3450 = vmatprep.subr.bf16.mxu0 0
    %3451 = vmatpush1.bf16.msra.mxu0 0
    %3452 = vmatprep.mubr.bf16.mxu0 0
    %3453 = vmatmul.mubr.bf16.gmra.mrb[0].mxu0 %v3418
    %v3454 = vpop.f32.mrb[0].mxu0
    %v3455 = vadd.f32 %v3403, %v3454
    %v3456 = vpop.f32.mrb[0].mxu0
    %v3457 = vpop.f32.mrb[0].mxu0
    %v3458 = vadd.f32 %v3403, %v3457
    %v3459 = vpop.f32.mrb[0].mxu0
    %3460 = vdwg.mxu0
    %v3461 = vmul.f32 %v3455, 0.5
    %v3462 = vmul.f32 %v3458, 0.5
    %v3463 = vmul.f32 %v3455, 0.044715
    %v3464 = vmul.f32 %v3458, 0.044715
    %v3465 = vmul.f32 %v3463, %v3455
    %v3466 = vmul.f32 %v3464, %v3458
    %v3467 = vmul.f32 %v3465, %v3455
    %v3468 = vmul.f32 %v3466, %v3458
    %v3469 = vadd.f32 %v3455, %v3467
    %v3470 = vadd.f32 %v3458, %v3468
    %v3471 = vmul.f32 %v3469, 0.7978846
    %v3472 = vmul.f32 %v3470, 0.7978846
    %v3473 = vtanh.pop %v3471
    %v3474 = vtanh.pop %v3472
    %v3475 = vadd.f32 %v3473, 1.0
    %v3476 = vadd.f32 %v3474, 1.0
    %v3477 = vmul.f32 %v3461, %v3475
    %v3478 = vmul.f32 %v3462, %v3476
    %s3479 = scalar_lea.vmem %s16, 32
    %v3480 = vld [vmem:[%s3479] sm:$0xf]
    %v3481 = vld [vmem:[%s3479 + $0x4] sm:$0xf]
    %v3482 = vld [vmem:[%s3479 + $0x8] sm:$0xf]
    %v3483 = vld [vmem:[%s3479 + $0xc] sm:$0xf]
    %v3484 = vld [vmem:[%s3479 + $0x10] sm:$0xf]
    %v3485 = vld [vmem:[%s3479 + $0x14] sm:$0xf]
    %v3486 = vld [vmem:[%s3479 + $0x18] sm:$0xf]
    %v3487 = vld [vmem:[%s3479 + $0x1c] sm:$0xf]
    %v3488 = vpack.c.bf16 %v3478, %v3477
    %s3489 = scalar_lea.vmem %s17, 1
    %v3490 = vld [vmem:[%s3489] sm:$0x1]
    %v3492 = vlaneseq
    %v3493 = vshrl.u32 %v3492, 7
    %v3494 = vsub.s32 0, %v3493
    %v3495 = vrot.slane %v3490, %v3494
    %v3505 = vunpack.c.l.b16 %v3480
    %v3506 = vunpack.c.l.b16 %v3481
    %v3507 = vunpack.c.l.b16 %v3482
    %v3508 = vunpack.c.l.b16 %v3483
    %v3509 = vunpack.c.l.b16 %v3484
    %v3510 = vunpack.c.l.b16 %v3485
    %v3511 = vunpack.c.l.b16 %v3486
    %v3512 = vunpack.c.l.b16 %v3487
    %v3513 = vpack.c.b16 %v3506, %v3505
    %v3514 = vpack.c.b16 %v3508, %v3507
    %v3515 = vpack.c.b16 %v3510, %v3509
    %v3516 = vpack.c.b16 %v3512, %v3511
    %v3522 = vsel %vm1774, %v3488, 0
    %3524 = vmatprep.subr.bf16.mxu0 0
    %3525 = vmatpush1.bf16.msra.mxu0 %v3513
    %3526 = vmatprep.subr.bf16.mxu0 0
    %3527 = vmatpush1.bf16.msra.mxu0 %v3514
    %3528 = vmatprep.subr.bf16.mxu0 0
    %3529 = vmatpush1.bf16.msra.mxu0 %v3515
    %3530 = vmatprep.subr.bf16.mxu0 0
    %3531 = vmatpush1.bf16.msra.mxu0 %v3516
    %3532 = vmatprep.subr.bf16.mxu0 0
    %3533 = vmatpush1.bf16.msra.mxu0 0
    %3534 = vmatprep.subr.bf16.mxu0 0
    %3535 = vmatpush1.bf16.msra.mxu0 0
    %3536 = vmatprep.subr.bf16.mxu0 0
    %3537 = vmatpush1.bf16.msra.mxu0 0
    %3538 = vmatprep.subr.bf16.mxu0 0
    %3539 = vmatpush1.bf16.msra.mxu0 0
    %3540 = vmatprep.subr.bf16.mxu0 0
    %3541 = vmatpush1.bf16.msra.mxu0 0
    %3542 = vmatprep.subr.bf16.mxu0 0
    %3543 = vmatpush1.bf16.msra.mxu0 0
    %3544 = vmatprep.subr.bf16.mxu0 0
    %3545 = vmatpush1.bf16.msra.mxu0 0
    %3546 = vmatprep.subr.bf16.mxu0 0
    %3547 = vmatpush1.bf16.msra.mxu0 0
    %3548 = vmatprep.subr.bf16.mxu0 0
    %3549 = vmatpush1.bf16.msra.mxu0 0
    %3550 = vmatprep.subr.bf16.mxu0 0
    %3551 = vmatpush1.bf16.msra.mxu0 0
    %3552 = vmatprep.subr.bf16.mxu0 0
    %3553 = vmatpush1.bf16.msra.mxu0 0
    %3554 = vmatprep.subr.bf16.mxu0 0
    %3555 = vmatpush1.bf16.msra.mxu0 0
    %3556 = vmatprep.mubr.bf16.mxu0 0
    %3557 = vmatmul.mubr.bf16.gmra.mrb[0].mxu0 %v3522
    %v3558 = vpop.f32.mrb[0].mxu0
    %v3559 = vadd.f32 %v3495, %v3558
    %v3560 = vpop.f32.mrb[0].mxu0
    %v3561 = vpop.f32.mrb[0].mxu0
    %v3562 = vadd.f32 %v3495, %v3561
    %v3563 = vpop.f32.mrb[0].mxu0
    %3564 = vdwg.mxu0
    %v3565 = vadd.f32 %v3559, %v3389
    %v3566 = vadd.f32 %v3562, %v3390
    %s3567 = scalar_lea.vmem %s18, 1
    %v3568 = vld [vmem:[%s3567] sm:$0x1]
    %s3569 = scalar_lea.vmem %s19, 1
    %v3570 = vld [vmem:[%s3569] sm:$0x1]
    %v3571 = vsel %vm83, %v3565, 0.0
    %3572 = vadd.xlane.f32.xlu0 %v3571
    %v3573 = vpop.xlane.xlu0 %3572
    %v3574 = vsel %vm83, %v3566, 0.0
    %3575 = vadd.xlane.f32.xlu0 %v3574
    %v3576 = vpop.xlane.xlu0 %3575
    %v3577 = vmul.f32 %v3573, %v90
    %v3578 = vmul.f32 %v3576, %v90
    %v3579 = vsub.f32 %v3565, %v3577
    %v3580 = vsub.f32 %v3566, %v3578
    %v3581 = vmul.f32 %v3579, %v3579
    %v3582 = vmul.f32 %v3580, %v3580
    %v3583 = vsel %vm83, %v3581, 0.0
    %3584 = vadd.xlane.f32.xlu0 %v3583
    %v3585 = vpop.xlane.xlu0 %3584
    %v3586 = vsel %vm83, %v3582, 0.0
    %3587 = vadd.xlane.f32.xlu0 %v3586
    %v3588 = vpop.xlane.xlu0 %3587
    %v3589 = vmul.f32 %v3585, %v90
    %v3590 = vmul.f32 %v3588, %v90
    %v3591 = vadd.f32 %v3589, 1e-12
    %v3592 = vadd.f32 %v3590, 1e-12
    %v3593 = vrsqrt.pop %v3591
    %v3594 = vrsqrt.pop %v3592
    %v3595 = vmul.f32 %v3579, %v3593
    %v3596 = vmul.f32 %v3580, %v3594
    %v3598 = vlaneseq
    %v3599 = vshrl.u32 %v3598, 7
    %v3600 = vsub.s32 0, %v3599
    %v3601 = vrot.slane %v3568, %v3600
    %v3603 = vmul.f32 %v3595, %v3601
    %v3604 = vmul.f32 %v3596, %v3601
    %v3606 = vlaneseq
    %v3607 = vshrl.u32 %v3606, 7
    %v3608 = vsub.s32 0, %v3607
    %v3609 = vrot.slane %v3570, %v3608
    %v3611 = vadd.f32 %v3603, %v3609
    %v3612 = vadd.f32 %v3604, %v3609
    %v3613 = vlaneseq
    %v3614 = vshrl.u32 %v3613, 7
    %v3615 = vlaneseq
    %v3616 = vand.u32 %v3615, 127
    %v3617 = vmul.u32 %v3614, 8
    %vm3618 = vcmp.eq.s32.totalorder %v3616, %v3617
    %v3619 = vsel %vm3618, 1, 0
    %v3620 = vcvt.s32.f32 %v3619
    %v3622 = vsel %vm375, %v3620, 0
    %3624 = vmatprep.subr.mxu0 0.0
    %3625 = vmatpush1.msra.mxu0 %v3611
    %3626 = vmatprep.subr.mxu0 0.0
    %3627 = vmatpush1.msra.mxu0 %v3612
    %3628 = vmatprep.subr.mxu0 0.0
    %3629 = vmatpush1.msra.mxu0 0.0
    %3630 = vmatprep.subr.mxu0 0.0
    %3631 = vmatpush1.msra.mxu0 0.0
    %3632 = vmatprep.subr.mxu0 0.0
    %3633 = vmatpush1.msra.mxu0 0.0
    %3634 = vmatprep.subr.mxu0 0.0
    %3635 = vmatpush1.msra.mxu0 0.0
    %3636 = vmatprep.subr.mxu0 0.0
    %3637 = vmatpush1.msra.mxu0 0.0
    %3638 = vmatprep.subr.mxu0 0.0
    %3639 = vmatpush1.msra.mxu0 0.0
    %3640 = vmatprep.subr.mxu0 0.0
    %3641 = vmatpush1.msra.mxu0 0.0
    %3642 = vmatprep.subr.mxu0 0.0
    %3643 = vmatpush1.msra.mxu0 0.0
    %3644 = vmatprep.subr.mxu0 0.0
    %3645 = vmatpush1.msra.mxu0 0.0
    %3646 = vmatprep.subr.mxu0 0.0
    %3647 = vmatpush1.msra.mxu0 0.0
    %3648 = vmatprep.subr.mxu0 0.0
    %3649 = vmatpush1.msra.mxu0 0.0
    %3650 = vmatprep.subr.mxu0 0.0
    %3651 = vmatpush1.msra.mxu0 0.0
    %3652 = vmatprep.subr.mxu0 0.0
    %3653 = vmatpush1.msra.mxu0 0.0
    %3654 = vmatprep.subr.mxu0 0.0
    %3655 = vmatpush1.msra.mxu0 0.0
    %3656 = vmatprep.subr.mxu0 0.0
    %3657 = vmatpush1.msra.mxu0 0.0
    %3658 = vmatprep.subr.mxu0 0.0
    %3659 = vmatpush1.msra.mxu0 0.0
    %3660 = vmatprep.subr.mxu0 0.0
    %3661 = vmatpush1.msra.mxu0 0.0
    %3662 = vmatprep.subr.mxu0 0.0
    %3663 = vmatpush1.msra.mxu0 0.0
    %3664 = vmatprep.subr.mxu0 0.0
    %3665 = vmatpush1.msra.mxu0 0.0
    %3666 = vmatprep.subr.mxu0 0.0
    %3667 = vmatpush1.msra.mxu0 0.0
    %3668 = vmatprep.subr.mxu0 0.0
    %3669 = vmatpush1.msra.mxu0 0.0
    %3670 = vmatprep.subr.mxu0 0.0
    %3671 = vmatpush1.msra.mxu0 0.0
    %3672 = vmatprep.subr.mxu0 0.0
    %3673 = vmatpush1.msra.mxu0 0.0
    %3674 = vmatprep.subr.mxu0 0.0
    %3675 = vmatpush1.msra.mxu0 0.0
    %3676 = vmatprep.subr.mxu0 0.0
    %3677 = vmatpush1.msra.mxu0 0.0
    %3678 = vmatprep.subr.mxu0 0.0
    %3679 = vmatpush1.msra.mxu0 0.0
    %3680 = vmatprep.subr.mxu0 0.0
    %3681 = vmatpush1.msra.mxu0 0.0
    %3682 = vmatprep.subr.mxu0 0.0
    %3683 = vmatpush1.msra.mxu0 0.0
    %3684 = vmatprep.subr.mxu0 0.0
    %3685 = vmatpush1.msra.mxu0 0.0
    %3686 = vmatprep.subr.mxu0 0.0
    %3687 = vmatpush1.msra.mxu0 0.0
    %3688 = vmatprep.mubr.f32.mxu0 0.0
    %3689 = vmatmul.mubr.f32.gmra.mrb[0].mxu0 %v3622
    %v3690 = vpop.f32.mrb[0].mxu0
    %v3691 = vadd.f32 0.0, %v3690
    %v3692 = vpop.f32.mrb[0].mxu0
    %3693 = vdwg.mxu0
    %v3694 = vld [vmem:[%s20] sm:$0xf]
    %v3695 = vld [vmem:[%s20 + $0x4] sm:$0xf]
    %v3696 = vld [vmem:[%s20 + $0x8] sm:$0xf]
    %v3697 = vld [vmem:[%s20 + $0xc] sm:$0xf]
    %v3698 = vpack.c.bf16 %v3691, %v3691
    %v3699 = vld [vmem:[%s21] sm:$0x1]
    %v3701 = vlaneseq
    %v3702 = vshrl.u32 %v3701, 7
    %v3703 = vsub.s32 0, %v3702
    %v3704 = vrot.slane %v3699, %v3703
    %v3710 = vunpack.c.l.b16 %v3694
    %v3711 = vunpack.c.l.b16 %v3695
    %v3712 = vunpack.c.l.b16 %v3696
    %v3713 = vunpack.c.l.b16 %v3697
    %v3714 = vpack.c.b16 %v3711, %v3710
    %v3715 = vpack.c.b16 %v3713, %v3712
    %v3719 = vsel %vm83, %v3698, 0
    %3721 = vmatprep.subr.bf16.mxu0 0
    %3722 = vmatpush1.bf16.msra.mxu0 %v3714
    %3723 = vmatprep.subr.bf16.mxu0 0
    %3724 = vmatpush1.bf16.msra.mxu0 %v3715
    %3725 = vmatprep.subr.bf16.mxu0 0
    %3726 = vmatpush1.bf16.msra.mxu0 0
    %3727 = vmatprep.subr.bf16.mxu0 0
    %3728 = vmatpush1.bf16.msra.mxu0 0
    %3729 = vmatprep.subr.bf16.mxu0 0
    %3730 = vmatpush1.bf16.msra.mxu0 0
    %3731 = vmatprep.subr.bf16.mxu0 0
    %3732 = vmatpush1.bf16.msra.mxu0 0
    %3733 = vmatprep.subr.bf16.mxu0 0
    %3734 = vmatpush1.bf16.msra.mxu0 0
    %3735 = vmatprep.subr.bf16.mxu0 0
    %3736 = vmatpush1.bf16.msra.mxu0 0
    %3737 = vmatprep.subr.bf16.mxu0 0
    %3738 = vmatpush1.bf16.msra.mxu0 0
    %3739 = vmatprep.subr.bf16.mxu0 0
    %3740 = vmatpush1.bf16.msra.mxu0 0
    %3741 = vmatprep.subr.bf16.mxu0 0
    %3742 = vmatpush1.bf16.msra.mxu0 0
    %3743 = vmatprep.subr.bf16.mxu0 0
    %3744 = vmatpush1.bf16.msra.mxu0 0
    %3745 = vmatprep.subr.bf16.mxu0 0
    %3746 = vmatpush1.bf16.msra.mxu0 0
    %3747 = vmatprep.subr.bf16.mxu0 0
    %3748 = vmatpush1.bf16.msra.mxu0 0
    %3749 = vmatprep.subr.bf16.mxu0 0
    %3750 = vmatpush1.bf16.msra.mxu0 0
    %3751 = vmatprep.subr.bf16.mxu0 0
    %3752 = vmatpush1.bf16.msra.mxu0 0
    %3753 = vmatprep.mubr.bf16.mxu0 0
    %3754 = vmatmul.mubr.bf16.gmra.mrb[0].mxu0 %v3719
    %v3755 = vpop.f32.mrb[0].mxu0
    %v3756 = vadd.f32 %v3704, %v3755
    %v3757 = vpop.f32.mrb[0].mxu0
    %v3758 = vpop.f32.mrb[0].mxu0
    %v3759 = vpop.f32.mrb[0].mxu0
    %3760 = vdwg.mxu0
    %v3761 = vtanh.pop %v3756
    %v3762 = vld [vmem:[%s22] sm:$0xf]
    %v3763 = vld [vmem:[%s22 + $0x4] sm:$0xf]
    %v3764 = vld [vmem:[%s22 + $0x8] sm:$0xf]
    %v3765 = vld [vmem:[%s22 + $0xc] sm:$0xf]
    %v3766 = vpack.c.bf16 %v3761, %v3761
    %v3767 = vld [vmem:[%s23] sm:$0x1]
    %v3769 = vlaneseq
    %v3770 = vshrl.u32 %v3769, 7
    %v3771 = vsub.s32 0, %v3770
    %v3772 = vrot.slane %v3767, %v3771
    %v3778 = vunpack.c.l.b16 %v3762
    %v3779 = vunpack.c.l.b16 %v3763
    %v3780 = vunpack.c.l.b16 %v3764
    %v3781 = vunpack.c.l.b16 %v3765
    %v3782 = vpack.c.b16 %v3779, %v3778
    %v3783 = vpack.c.b16 %v3781, %v3780
    %v3787 = vsel %vm83, %v3766, 0
    %3789 = vmatprep.subr.bf16.mxu0 0
    %3790 = vmatpush1.bf16.msra.mxu0 %v3782
    %3791 = vmatprep.subr.bf16.mxu0 0
    %3792 = vmatpush1.bf16.msra.mxu0 %v3783
    %3793 = vmatprep.subr.bf16.mxu0 0
    %3794 = vmatpush1.bf16.msra.mxu0 0
    %3795 = vmatprep.subr.bf16.mxu0 0
    %3796 = vmatpush1.bf16.msra.mxu0 0
    %3797 = vmatprep.subr.bf16.mxu0 0
    %3798 = vmatpush1.bf16.msra.mxu0 0
    %3799 = vmatprep.subr.bf16.mxu0 0
    %3800 = vmatpush1.bf16.msra.mxu0 0
    %3801 = vmatprep.subr.bf16.mxu0 0
    %3802 = vmatpush1.bf16.msra.mxu0 0
    %3803 = vmatprep.subr.bf16.mxu0 0
    %3804 = vmatpush1.bf16.msra.mxu0 0
    %3805 = vmatprep.subr.bf16.mxu0 0
    %3806 = vmatpush1.bf16.msra.mxu0 0
    %3807 = vmatprep.subr.bf16.mxu0 0
    %3808 = vmatpush1.bf16.msra.mxu0 0
    %3809 = vmatprep.subr.bf16.mxu0 0
    %3810 = vmatpush1.bf16.msra.mxu0 0
    %3811 = vmatprep.subr.bf16.mxu0 0
    %3812 = vmatpush1.bf16.msra.mxu0 0
    %3813 = vmatprep.subr.bf16.mxu0 0
    %3814 = vmatpush1.bf16.msra.mxu0 0
    %3815 = vmatprep.subr.bf16.mxu0 0
    %3816 = vmatpush1.bf16.msra.mxu0 0
    %3817 = vmatprep.subr.bf16.mxu0 0
    %3818 = vmatpush1.bf16.msra.mxu0 0
    %3819 = vmatprep.subr.bf16.mxu0 0
    %3820 = vmatpush1.bf16.msra.mxu0 0
    %3821 = vmatprep.mubr.bf16.mxu0 0
    %3822 = vmatmul.mubr.bf16.gmra.mrb[0].mxu0 %v3787
    %v3823 = vpop.f32.mrb[0].mxu0
    %v3824 = vadd.f32 %v3772, %v3823
    %v3825 = vpop.f32.mrb[0].mxu0
    %v3826 = vpop.f32.mrb[0].mxu0
    %v3827 = vpop.f32.mrb[0].mxu0
    %3828 = vdwg.mxu0
    %3829 = vst [vmem:[#allocation2] sm:$0x3] %v3824
    // Predicated region
    $region98: #{emotion_classifier_forward.1} parent=1 // pred_check
      _
    $region99: #{emotion_classifier_forward.1} parent=1 // pred_check_branch
      %3831 = sbr.rel (0) target = $region101
    $region100: #{emotion_classifier_forward.1} parent=1 // pred_region
      %s3833 = ssub.s32 32, 32
      %3834 = vsyncadd [#allocation3], %s3833
      %s3836 = sshll.u32 [#allocation2], 4
      %s3837 = int_to_ptr.vmem [resolvable:$true] %s3836
      %3839 = dma.vmem_to_hbm [thread:$0]  %s3837, 32, %s24, [#allocation3]
    $region101: #{emotion_classifier_forward.1} parent=1 // pred_fallthru
      _
    // Predicated region
    $region102: #{emotion_classifier_forward.1} parent=1 // pred_check
      _
    $region103: #{emotion_classifier_forward.1} parent=1 // pred_check_branch
      %3841 = sbr.rel (0) target = $region105
    $region104: #{emotion_classifier_forward.1} parent=1 // pred_region
      %3842 = dma.done [#allocation3], 32
    $region105: #{emotion_classifier_forward.1} parent=1 // pred_fallthru
      _
    %3843 = vsyncpa [#allocation3], 1

</llo_original>
